<compile_context>
chip_gen: v7x
topology: tpu7x:2x2x1
jax: 0.10.0
libtpu: 0.0.40
codegen_flags: <defaults>
</compile_context>

<pallas_src>
import functools

import jax
import jax.numpy as jnp
import numpy as np
from jax.experimental import pallas as pl
from jax.experimental.pallas import tpu as pltpu


def _sigmoid(z):
    # explicit form (exp + add + div) — guaranteed Mosaic lowering
    return 1.0 / (1.0 + jnp.exp(-z))


def hicbam_kernel(w1_ref, b1_ref, wsa_ref, x_ref, out_ref, *, C, H, W, K):
    """One batch element per grid step.

    w1_ref : VMEM (C, C)     PA 1x1 conv weight (out, in)
    b1_ref : VMEM (C, 1)     PA 1x1 conv bias
    wsa_ref: SMEM (2*K*K,)   SA KxK conv weight, flat [c2*K*K + kh*K + kw]
    x_ref  : VMEM (C, H*W)   input block (lane-dense)
    out_ref: VMEM (C, H*W)   output block
    """
    HW = H * W
    p = K // 2
    x = x_ref[...]                                           # (C, HW) f32

    # ---- PA: 1x1 conv over channels == (C,C) @ (C,HW) on the MXU -----------
    y = jnp.dot(w1_ref[...], x,
                preferred_element_type=jnp.float32,
                precision=jax.lax.Precision.HIGHEST)
    y = y + b1_ref[...]                                      # (C,1) lane-broadcast bias
    pa = x * _sigmoid(y)                                     # (C, HW)

    # ---- SA: channel mean & max (sublane reductions) ------------------------
    avg = jnp.sum(pa, axis=0, keepdims=True) * (1.0 / C)     # (1, HW)
    mx = jnp.max(pa, axis=0, keepdims=True)                  # (1, HW)
    maps = jnp.concatenate([avg, mx], axis=0)                # (2, HW)

    # Flat-index (h, w) coordinates for the 'same'-padding boundary masks.
    # h = n // W is computed via float mul + truncating cast (the VPU has no
    # vector integer divide); exact for these sizes.
    col = jax.lax.broadcasted_iota(jnp.int32, (2, HW), 1)
    h_id = ((col.astype(jnp.float32) + 0.5) * (1.0 / W)).astype(jnp.int32)
    w_id = col - h_id * W

    # KxK 'same' conv, 2 in-channels -> 1 out-channel, no bias.  Each tap is a
    # static cyclic lane shift of `maps`, masked at the image boundary.
    m = jnp.zeros((1, HW), jnp.float32)
    for kh in range(K):
        dh = kh - p
        hmask = jnp.logical_and(h_id + dh >= 0, h_id + dh < H)
        for kw in range(K):
            dw = kw - p
            wmask = jnp.logical_and(w_id + dw >= 0, w_id + dw < W)
            valid = jnp.logical_and(hmask, wmask)            # (2, HW) bool
            d = (dh * W + dw) % HW
            if d == 0:
                shifted = maps
            else:
                # shifted[:, n] = maps[:, (n + d) % HW]
                shifted = jnp.concatenate([maps[:, d:], maps[:, :d]], axis=1)
            tap = jnp.where(valid, shifted, 0.0)             # (2, HW)
            m = (m
                 + wsa_ref[kh * K + kw] * tap[0:1, :]        # avg channel
                 + wsa_ref[K * K + kh * K + kw] * tap[1:2, :])  # max channel

    sm = _sigmoid(m)                                         # (1, HW)
    out_ref[...] = (pa * sm).astype(out_ref.dtype)           # single dense store


def hicbam(x, w1, b1, wsa):
    """x: (B, C, H, W) f32; w1: (C, C); b1: (C,); wsa: (1, 2, K, K)."""
    B, C, H, W = x.shape
    K = wsa.shape[-1]
    HW = H * W
    kernel = functools.partial(hicbam_kernel, C=C, H=H, W=W, K=K)
    out = pl.pallas_call(
        kernel,
        out_shape=jax.ShapeDtypeStruct((B, C, HW), x.dtype),
        grid=(B,),
        in_specs=[
            pl.BlockSpec((C, C), lambda b: (0, 0)),               # w1 -> VMEM
            pl.BlockSpec((C, 1), lambda b: (0, 0)),               # b1 -> VMEM
            pl.BlockSpec(memory_space=pltpu.MemorySpace.SMEM),    # wsa flat scalars
            pl.BlockSpec((None, C, HW), lambda b: (b, 0, 0)),     # x, lane-dense
        ],
        out_specs=pl.BlockSpec((None, C, HW), lambda b: (b, 0, 0)),
        compiler_params=pltpu.CompilerParams(
            dimension_semantics=("parallel",)),
    )(w1, b1.reshape(C, 1), wsa.reshape(-1), x.reshape(B, C, HW))
    return out.reshape(B, C, H, W)


def ref_forward(x, w1, b1, wsa):
    """Pure-JAX reference with identical semantics (PA -> SA)."""
    B, C, H, W = x.shape
    K = wsa.shape[-1]
    p = K // 2
    y = jnp.einsum("bihw,oi->bohw", x, w1,
                   precision=jax.lax.Precision.HIGHEST) + b1[None, :, None, None]
    pa = x * (1.0 / (1.0 + jnp.exp(-y)))
    avg = jnp.mean(pa, axis=1)
    mx = jnp.max(pa, axis=1)
    m2 = jnp.stack([avg, mx], axis=1)                        # (B, 2, H, W)
    mp = jnp.pad(m2, ((0, 0), (0, 0), (p, p), (p, p)))
    m = jnp.zeros((B, H, W), jnp.float32)
    for c2 in range(2):
        for kh in range(K):
            for kw in range(K):
                m = m + wsa[0, c2, kh, kw] * mp[:, c2, kh:kh + H, kw:kw + W]
    sm = 1.0 / (1.0 + jnp.exp(-m))
    return pa * sm[:, None]


if __name__ == "__main__":
    # channels=8 so the channel (sublane) dim is native 8-aligned; H*W=256 lanes.
    B, C, H, W, K = 2, 8, 16, 16, 7

    key = jax.random.PRNGKey(0)
    k1, k2, k3, k4 = jax.random.split(key, 4)
    x = jax.random.normal(k1, (B, C, H, W), jnp.float32)
    # PA: nn.Conv2d(C, C, 1)  -> weight (C, C, 1, 1) + bias (C,)
    w1 = jax.random.normal(k2, (C, C), jnp.float32) * 0.2
    b1 = jax.random.normal(k3, (C,), jnp.float32) * 0.1
    # SA: nn.Conv2d(2, 1, 7, padding='same', bias=False) -> weight (1, 2, 7, 7)
    wsa = jax.random.normal(k4, (1, 2, K, K), jnp.float32) * 0.05

    out = jax.block_until_ready(hicbam(x, w1, b1, wsa))

    ref = ref_forward(x, w1, b1, wsa)
    np.testing.assert_allclose(np.asarray(out), np.asarray(ref),
                               rtol=1e-4, atol=1e-4)
    print("KERNEL_OK")
</pallas_src>

<mosaic_0001>
module attributes {stable_mosaic.version = 11 : i64} {
  func.func @hicbam_kernel(%arg0: i32, %arg1: memref<8x8xf32, #tpu.memory_space<vmem>>, %arg2: memref<8x1xf32, #tpu.memory_space<vmem>>, %arg3: memref<98xf32, #tpu.memory_space<smem>>, %arg4: memref<1x8x256xf32, #tpu.memory_space<vmem>>, %arg5: memref<1x8x256xf32, #tpu.memory_space<vmem>>) attributes {dimension_semantics = [#tpu.dimension_semantics<parallel>], iteration_bounds = array<i64: 2>, scalar_prefetch = 0 : i64, scratch_operands = 0 : i64, tpu.core_type = #tpu.core_type<tc>, window_params = [{pipeline_mode = #tpu.pipeline_mode<synchronous>, transform_indices = @transform_0, window_bounds = array<i64: 8, 8>}, {pipeline_mode = #tpu.pipeline_mode<synchronous>, transform_indices = @transform_1, window_bounds = array<i64: 8, 1>}, {transform_indices = @transform_2, window_bounds = array<i64: 98>}, {transform_indices = @transform_3, window_bounds = array<i64: 1, 8, 256>}, {transform_indices = @transform_4, window_bounds = array<i64: 1, 8, 256>}]} {
    %c0 = arith.constant 0 : index
    %c0_0 = arith.constant 0 : index
    %c0_1 = arith.constant 0 : index
    %0 = vector.load %arg4[%c0, %c0_0, %c0_1] : memref<1x8x256xf32, #tpu.memory_space<vmem>>, vector<1x8x256xf32>
    %1 = vector.shape_cast %0 : vector<1x8x256xf32> to vector<8x256xf32>
    %c0_2 = arith.constant 0 : index
    %c0_3 = arith.constant 0 : index
    %2 = vector.load %arg1[%c0_2, %c0_3] : memref<8x8xf32, #tpu.memory_space<vmem>>, vector<8x8xf32>
    %cst = arith.constant dense<0.000000e+00> : vector<8x256xf32>
    %3 = tpu.matmul %2, %1, %cst {dimension_numbers = #tpu.dot_dimension_numbers<[1], [0], [0], [1], [0, 0, 1, 1], [], []>, precision = #tpu.contract_precision<fp32>} : vector<8x8xf32>, vector<8x256xf32>, vector<8x256xf32> -> vector<8x256xf32>
    %c0_4 = arith.constant 0 : index
    %c0_5 = arith.constant 0 : index
    %4 = vector.load %arg2[%c0_4, %c0_5] : memref<8x1xf32, #tpu.memory_space<vmem>>, vector<8x1xf32>
    %5 = vector.broadcast %4 : vector<8x1xf32> to vector<8x256xf32>
    %6 = arith.addf %3, %5 : vector<8x256xf32>
    %cst_6 = arith.constant 0.000000e+00 : f32
    %7 = vector.broadcast %cst_6 : f32 to vector<8x256xf32>
    %8 = arith.subf %7, %6 : vector<8x256xf32>
    %9 = math.exp %8 : vector<8x256xf32>
    %cst_7 = arith.constant 1.000000e+00 : f32
    %10 = vector.broadcast %cst_7 : f32 to vector<8x256xf32>
    %11 = arith.addf %10, %9 : vector<8x256xf32>
    %cst_8 = arith.constant 1.000000e+00 : f32
    %12 = vector.broadcast %cst_8 : f32 to vector<8x256xf32>
    %13 = arith.divf %12, %11 : vector<8x256xf32>
    %14 = arith.mulf %1, %13 : vector<8x256xf32>
    %cst_9 = arith.constant dense<0.000000e+00> : vector<256xf32>
    %15 = vector.multi_reduction <add>, %14, %cst_9 [0] : vector<8x256xf32> to vector<256xf32>
    %16 = vector.shape_cast %15 : vector<256xf32> to vector<1x256xf32>
    %cst_10 = arith.constant 1.250000e-01 : f32
    %17 = vector.broadcast %cst_10 : f32 to vector<1x256xf32>
    %18 = arith.mulf %16, %17 : vector<1x256xf32>
    %cst_11 = arith.constant dense<0xFF800000> : vector<256xf32>
    %19 = vector.multi_reduction <maximumf>, %14, %cst_11 [0] : vector<8x256xf32> to vector<256xf32>
    %20 = vector.shape_cast %19 : vector<256xf32> to vector<1x256xf32>
    %21 = tpu.concatenate %18, %20 in 0 : vector<1x256xf32>, vector<1x256xf32> -> vector<2x256xf32>
    %22 = tpu.iota {dimensions = array<i32: 1>} : vector<2x256xi32>
    %23 = arith.sitofp %22 : vector<2x256xi32> to vector<2x256xf32>
    %cst_12 = arith.constant 5.000000e-01 : f32
    %24 = vector.broadcast %cst_12 : f32 to vector<2x256xf32>
    %25 = arith.addf %23, %24 : vector<2x256xf32>
    %cst_13 = arith.constant 6.250000e-02 : f32
    %26 = vector.broadcast %cst_13 : f32 to vector<2x256xf32>
    %27 = arith.mulf %25, %26 : vector<2x256xf32>
    %28 = arith.fptosi %27 : vector<2x256xf32> to vector<2x256xi32>
    %c16_i32 = arith.constant 16 : i32
    %29 = vector.broadcast %c16_i32 : i32 to vector<2x256xi32>
    %30 = arith.muli %28, %29 : vector<2x256xi32>
    %31 = arith.subi %22, %30 : vector<2x256xi32>
    %cst_14 = arith.constant 0.000000e+00 : f32
    %32 = vector.broadcast %cst_14 : f32 to vector<1x256xf32>
    %c-3_i32 = arith.constant -3 : i32
    %33 = vector.broadcast %c-3_i32 : i32 to vector<2x256xi32>
    %34 = arith.addi %28, %33 : vector<2x256xi32>
    %c0_i32 = arith.constant 0 : i32
    %35 = vector.broadcast %c0_i32 : i32 to vector<2x256xi32>
    %36 = arith.cmpi sge, %34, %35 : vector<2x256xi32>
    %c-3_i32_15 = arith.constant -3 : i32
    %37 = vector.broadcast %c-3_i32_15 : i32 to vector<2x256xi32>
    %38 = arith.addi %28, %37 : vector<2x256xi32>
    %c16_i32_16 = arith.constant 16 : i32
    %39 = vector.broadcast %c16_i32_16 : i32 to vector<2x256xi32>
    %40 = arith.cmpi slt, %38, %39 : vector<2x256xi32>
    %41 = arith.andi %36, %40 : vector<2x256xi1>
    %c-3_i32_17 = arith.constant -3 : i32
    %42 = vector.broadcast %c-3_i32_17 : i32 to vector<2x256xi32>
    %43 = arith.addi %31, %42 : vector<2x256xi32>
    %c0_i32_18 = arith.constant 0 : i32
    %44 = vector.broadcast %c0_i32_18 : i32 to vector<2x256xi32>
    %45 = arith.cmpi sge, %43, %44 : vector<2x256xi32>
    %c-3_i32_19 = arith.constant -3 : i32
    %46 = vector.broadcast %c-3_i32_19 : i32 to vector<2x256xi32>
    %47 = arith.addi %31, %46 : vector<2x256xi32>
    %c16_i32_20 = arith.constant 16 : i32
    %48 = vector.broadcast %c16_i32_20 : i32 to vector<2x256xi32>
    %49 = arith.cmpi slt, %47, %48 : vector<2x256xi32>
    %50 = arith.andi %45, %49 : vector<2x256xi1>
    %51 = arith.andi %41, %50 : vector<2x256xi1>
    %52 = vector.extract_strided_slice %21 {offsets = [0, 205], sizes = [2, 51], strides = [1, 1]} : vector<2x256xf32> to vector<2x51xf32>
    %53 = vector.extract_strided_slice %21 {offsets = [0, 0], sizes = [2, 205], strides = [1, 1]} : vector<2x256xf32> to vector<2x205xf32>
    %54 = tpu.concatenate %52, %53 in 1 : vector<2x51xf32>, vector<2x205xf32> -> vector<2x256xf32>
    %cst_21 = arith.constant 0.000000e+00 : f32
    %55 = vector.broadcast %cst_21 : f32 to vector<2x256xf32>
    %56 = arith.select %51, %54, %55 : vector<2x256xi1>, vector<2x256xf32>
    %c0_22 = arith.constant 0 : index
    %57 = memref.load %arg3[%c0_22] : memref<98xf32, #tpu.memory_space<smem>>
    %58 = vector.extract_strided_slice %56 {offsets = [0, 0], sizes = [1, 256], strides = [1, 1]} : vector<2x256xf32> to vector<1x256xf32>
    %59 = vector.broadcast %57 : f32 to vector<1x256xf32>
    %60 = arith.mulf %59, %58 : vector<1x256xf32>
    %61 = arith.addf %32, %60 : vector<1x256xf32>
    %c49 = arith.constant 49 : index
    %62 = memref.load %arg3[%c49] : memref<98xf32, #tpu.memory_space<smem>>
    %63 = vector.extract_strided_slice %56 {offsets = [1, 0], sizes = [1, 256], strides = [1, 1]} : vector<2x256xf32> to vector<1x256xf32>
    %64 = vector.broadcast %62 : f32 to vector<1x256xf32>
    %65 = arith.mulf %64, %63 : vector<1x256xf32>
    %66 = arith.addf %61, %65 : vector<1x256xf32>
    %c-2_i32 = arith.constant -2 : i32
    %67 = vector.broadcast %c-2_i32 : i32 to vector<2x256xi32>
    %68 = arith.addi %31, %67 : vector<2x256xi32>
    %c0_i32_23 = arith.constant 0 : i32
    %69 = vector.broadcast %c0_i32_23 : i32 to vector<2x256xi32>
    %70 = arith.cmpi sge, %68, %69 : vector<2x256xi32>
    %c-2_i32_24 = arith.constant -2 : i32
    %71 = vector.broadcast %c-2_i32_24 : i32 to vector<2x256xi32>
    %72 = arith.addi %31, %71 : vector<2x256xi32>
    %c16_i32_25 = arith.constant 16 : i32
    %73 = vector.broadcast %c16_i32_25 : i32 to vector<2x256xi32>
    %74 = arith.cmpi slt, %72, %73 : vector<2x256xi32>
    %75 = arith.andi %70, %74 : vector<2x256xi1>
    %76 = arith.andi %41, %75 : vector<2x256xi1>
    %77 = vector.extract_strided_slice %21 {offsets = [0, 206], sizes = [2, 50], strides = [1, 1]} : vector<2x256xf32> to vector<2x50xf32>
    %78 = vector.extract_strided_slice %21 {offsets = [0, 0], sizes = [2, 206], strides = [1, 1]} : vector<2x256xf32> to vector<2x206xf32>
    %79 = tpu.concatenate %77, %78 in 1 : vector<2x50xf32>, vector<2x206xf32> -> vector<2x256xf32>
    %cst_26 = arith.constant 0.000000e+00 : f32
    %80 = vector.broadcast %cst_26 : f32 to vector<2x256xf32>
    %81 = arith.select %76, %79, %80 : vector<2x256xi1>, vector<2x256xf32>
    %c1 = arith.constant 1 : index
    %82 = memref.load %arg3[%c1] : memref<98xf32, #tpu.memory_space<smem>>
    %83 = vector.extract_strided_slice %81 {offsets = [0, 0], sizes = [1, 256], strides = [1, 1]} : vector<2x256xf32> to vector<1x256xf32>
    %84 = vector.broadcast %82 : f32 to vector<1x256xf32>
    %85 = arith.mulf %84, %83 : vector<1x256xf32>
    %86 = arith.addf %66, %85 : vector<1x256xf32>
    %c50 = arith.constant 50 : index
    %87 = memref.load %arg3[%c50] : memref<98xf32, #tpu.memory_space<smem>>
    %88 = vector.extract_strided_slice %81 {offsets = [1, 0], sizes = [1, 256], strides = [1, 1]} : vector<2x256xf32> to vector<1x256xf32>
    %89 = vector.broadcast %87 : f32 to vector<1x256xf32>
    %90 = arith.mulf %89, %88 : vector<1x256xf32>
    %91 = arith.addf %86, %90 : vector<1x256xf32>
    %c-1_i32 = arith.constant -1 : i32
    %92 = vector.broadcast %c-1_i32 : i32 to vector<2x256xi32>
    %93 = arith.addi %31, %92 : vector<2x256xi32>
    %c0_i32_27 = arith.constant 0 : i32
    %94 = vector.broadcast %c0_i32_27 : i32 to vector<2x256xi32>
    %95 = arith.cmpi sge, %93, %94 : vector<2x256xi32>
    %c-1_i32_28 = arith.constant -1 : i32
    %96 = vector.broadcast %c-1_i32_28 : i32 to vector<2x256xi32>
    %97 = arith.addi %31, %96 : vector<2x256xi32>
    %c16_i32_29 = arith.constant 16 : i32
    %98 = vector.broadcast %c16_i32_29 : i32 to vector<2x256xi32>
    %99 = arith.cmpi slt, %97, %98 : vector<2x256xi32>
    %100 = arith.andi %95, %99 : vector<2x256xi1>
    %101 = arith.andi %41, %100 : vector<2x256xi1>
    %102 = vector.extract_strided_slice %21 {offsets = [0, 207], sizes = [2, 49], strides = [1, 1]} : vector<2x256xf32> to vector<2x49xf32>
    %103 = vector.extract_strided_slice %21 {offsets = [0, 0], sizes = [2, 207], strides = [1, 1]} : vector<2x256xf32> to vector<2x207xf32>
    %104 = tpu.concatenate %102, %103 in 1 : vector<2x49xf32>, vector<2x207xf32> -> vector<2x256xf32>
    %cst_30 = arith.constant 0.000000e+00 : f32
    %105 = vector.broadcast %cst_30 : f32 to vector<2x256xf32>
    %106 = arith.select %101, %104, %105 : vector<2x256xi1>, vector<2x256xf32>
    %c2 = arith.constant 2 : index
    %107 = memref.load %arg3[%c2] : memref<98xf32, #tpu.memory_space<smem>>
    %108 = vector.extract_strided_slice %106 {offsets = [0, 0], sizes = [1, 256], strides = [1, 1]} : vector<2x256xf32> to vector<1x256xf32>
    %109 = vector.broadcast %107 : f32 to vector<1x256xf32>
    %110 = arith.mulf %109, %108 : vector<1x256xf32>
    %111 = arith.addf %91, %110 : vector<1x256xf32>
    %c51 = arith.constant 51 : index
    %112 = memref.load %arg3[%c51] : memref<98xf32, #tpu.memory_space<smem>>
    %113 = vector.extract_strided_slice %106 {offsets = [1, 0], sizes = [1, 256], strides = [1, 1]} : vector<2x256xf32> to vector<1x256xf32>
    %114 = vector.broadcast %112 : f32 to vector<1x256xf32>
    %115 = arith.mulf %114, %113 : vector<1x256xf32>
    %116 = arith.addf %111, %115 : vector<1x256xf32>
    %c0_i32_31 = arith.constant 0 : i32
    %117 = vector.broadcast %c0_i32_31 : i32 to vector<2x256xi32>
    %118 = arith.addi %31, %117 : vector<2x256xi32>
    %c0_i32_32 = arith.constant 0 : i32
    %119 = vector.broadcast %c0_i32_32 : i32 to vector<2x256xi32>
    %120 = arith.cmpi sge, %118, %119 : vector<2x256xi32>
    %c0_i32_33 = arith.constant 0 : i32
    %121 = vector.broadcast %c0_i32_33 : i32 to vector<2x256xi32>
    %122 = arith.addi %31, %121 : vector<2x256xi32>
    %c16_i32_34 = arith.constant 16 : i32
    %123 = vector.broadcast %c16_i32_34 : i32 to vector<2x256xi32>
    %124 = arith.cmpi slt, %122, %123 : vector<2x256xi32>
    %125 = arith.andi %120, %124 : vector<2x256xi1>
    %126 = arith.andi %41, %125 : vector<2x256xi1>
    %127 = vector.extract_strided_slice %21 {offsets = [0, 208], sizes = [2, 48], strides = [1, 1]} : vector<2x256xf32> to vector<2x48xf32>
    %128 = vector.extract_strided_slice %21 {offsets = [0, 0], sizes = [2, 208], strides = [1, 1]} : vector<2x256xf32> to vector<2x208xf32>
    %129 = tpu.concatenate %127, %128 in 1 : vector<2x48xf32>, vector<2x208xf32> -> vector<2x256xf32>
    %cst_35 = arith.constant 0.000000e+00 : f32
    %130 = vector.broadcast %cst_35 : f32 to vector<2x256xf32>
    %131 = arith.select %126, %129, %130 : vector<2x256xi1>, vector<2x256xf32>
    %c3 = arith.constant 3 : index
    %132 = memref.load %arg3[%c3] : memref<98xf32, #tpu.memory_space<smem>>
    %133 = vector.extract_strided_slice %131 {offsets = [0, 0], sizes = [1, 256], strides = [1, 1]} : vector<2x256xf32> to vector<1x256xf32>
    %134 = vector.broadcast %132 : f32 to vector<1x256xf32>
    %135 = arith.mulf %134, %133 : vector<1x256xf32>
    %136 = arith.addf %116, %135 : vector<1x256xf32>
    %c52 = arith.constant 52 : index
    %137 = memref.load %arg3[%c52] : memref<98xf32, #tpu.memory_space<smem>>
    %138 = vector.extract_strided_slice %131 {offsets = [1, 0], sizes = [1, 256], strides = [1, 1]} : vector<2x256xf32> to vector<1x256xf32>
    %139 = vector.broadcast %137 : f32 to vector<1x256xf32>
    %140 = arith.mulf %139, %138 : vector<1x256xf32>
    %141 = arith.addf %136, %140 : vector<1x256xf32>
    %c1_i32 = arith.constant 1 : i32
    %142 = vector.broadcast %c1_i32 : i32 to vector<2x256xi32>
    %143 = arith.addi %31, %142 : vector<2x256xi32>
    %c0_i32_36 = arith.constant 0 : i32
    %144 = vector.broadcast %c0_i32_36 : i32 to vector<2x256xi32>
    %145 = arith.cmpi sge, %143, %144 : vector<2x256xi32>
    %c1_i32_37 = arith.constant 1 : i32
    %146 = vector.broadcast %c1_i32_37 : i32 to vector<2x256xi32>
    %147 = arith.addi %31, %146 : vector<2x256xi32>
    %c16_i32_38 = arith.constant 16 : i32
    %148 = vector.broadcast %c16_i32_38 : i32 to vector<2x256xi32>
    %149 = arith.cmpi slt, %147, %148 : vector<2x256xi32>
    %150 = arith.andi %145, %149 : vector<2x256xi1>
    %151 = arith.andi %41, %150 : vector<2x256xi1>
    %152 = vector.extract_strided_slice %21 {offsets = [0, 209], sizes = [2, 47], strides = [1, 1]} : vector<2x256xf32> to vector<2x47xf32>
    %153 = vector.extract_strided_slice %21 {offsets = [0, 0], sizes = [2, 209], strides = [1, 1]} : vector<2x256xf32> to vector<2x209xf32>
    %154 = tpu.concatenate %152, %153 in 1 : vector<2x47xf32>, vector<2x209xf32> -> vector<2x256xf32>
    %cst_39 = arith.constant 0.000000e+00 : f32
    %155 = vector.broadcast %cst_39 : f32 to vector<2x256xf32>
    %156 = arith.select %151, %154, %155 : vector<2x256xi1>, vector<2x256xf32>
    %c4 = arith.constant 4 : index
    %157 = memref.load %arg3[%c4] : memref<98xf32, #tpu.memory_space<smem>>
    %158 = vector.extract_strided_slice %156 {offsets = [0, 0], sizes = [1, 256], strides = [1, 1]} : vector<2x256xf32> to vector<1x256xf32>
    %159 = vector.broadcast %157 : f32 to vector<1x256xf32>
    %160 = arith.mulf %159, %158 : vector<1x256xf32>
    %161 = arith.addf %141, %160 : vector<1x256xf32>
    %c53 = arith.constant 53 : index
    %162 = memref.load %arg3[%c53] : memref<98xf32, #tpu.memory_space<smem>>
    %163 = vector.extract_strided_slice %156 {offsets = [1, 0], sizes = [1, 256], strides = [1, 1]} : vector<2x256xf32> to vector<1x256xf32>
    %164 = vector.broadcast %162 : f32 to vector<1x256xf32>
    %165 = arith.mulf %164, %163 : vector<1x256xf32>
    %166 = arith.addf %161, %165 : vector<1x256xf32>
    %c2_i32 = arith.constant 2 : i32
    %167 = vector.broadcast %c2_i32 : i32 to vector<2x256xi32>
    %168 = arith.addi %31, %167 : vector<2x256xi32>
    %c0_i32_40 = arith.constant 0 : i32
    %169 = vector.broadcast %c0_i32_40 : i32 to vector<2x256xi32>
    %170 = arith.cmpi sge, %168, %169 : vector<2x256xi32>
    %c2_i32_41 = arith.constant 2 : i32
    %171 = vector.broadcast %c2_i32_41 : i32 to vector<2x256xi32>
    %172 = arith.addi %31, %171 : vector<2x256xi32>
    %c16_i32_42 = arith.constant 16 : i32
    %173 = vector.broadcast %c16_i32_42 : i32 to vector<2x256xi32>
    %174 = arith.cmpi slt, %172, %173 : vector<2x256xi32>
    %175 = arith.andi %170, %174 : vector<2x256xi1>
    %176 = arith.andi %41, %175 : vector<2x256xi1>
    %177 = vector.extract_strided_slice %21 {offsets = [0, 210], sizes = [2, 46], strides = [1, 1]} : vector<2x256xf32> to vector<2x46xf32>
    %178 = vector.extract_strided_slice %21 {offsets = [0, 0], sizes = [2, 210], strides = [1, 1]} : vector<2x256xf32> to vector<2x210xf32>
    %179 = tpu.concatenate %177, %178 in 1 : vector<2x46xf32>, vector<2x210xf32> -> vector<2x256xf32>
    %cst_43 = arith.constant 0.000000e+00 : f32
    %180 = vector.broadcast %cst_43 : f32 to vector<2x256xf32>
    %181 = arith.select %176, %179, %180 : vector<2x256xi1>, vector<2x256xf32>
    %c5 = arith.constant 5 : index
    %182 = memref.load %arg3[%c5] : memref<98xf32, #tpu.memory_space<smem>>
    %183 = vector.extract_strided_slice %181 {offsets = [0, 0], sizes = [1, 256], strides = [1, 1]} : vector<2x256xf32> to vector<1x256xf32>
    %184 = vector.broadcast %182 : f32 to vector<1x256xf32>
    %185 = arith.mulf %184, %183 : vector<1x256xf32>
    %186 = arith.addf %166, %185 : vector<1x256xf32>
    %c54 = arith.constant 54 : index
    %187 = memref.load %arg3[%c54] : memref<98xf32, #tpu.memory_space<smem>>
    %188 = vector.extract_strided_slice %181 {offsets = [1, 0], sizes = [1, 256], strides = [1, 1]} : vector<2x256xf32> to vector<1x256xf32>
    %189 = vector.broadcast %187 : f32 to vector<1x256xf32>
    %190 = arith.mulf %189, %188 : vector<1x256xf32>
    %191 = arith.addf %186, %190 : vector<1x256xf32>
    %c3_i32 = arith.constant 3 : i32
    %192 = vector.broadcast %c3_i32 : i32 to vector<2x256xi32>
    %193 = arith.addi %31, %192 : vector<2x256xi32>
    %c0_i32_44 = arith.constant 0 : i32
    %194 = vector.broadcast %c0_i32_44 : i32 to vector<2x256xi32>
    %195 = arith.cmpi sge, %193, %194 : vector<2x256xi32>
    %c3_i32_45 = arith.constant 3 : i32
    %196 = vector.broadcast %c3_i32_45 : i32 to vector<2x256xi32>
    %197 = arith.addi %31, %196 : vector<2x256xi32>
    %c16_i32_46 = arith.constant 16 : i32
    %198 = vector.broadcast %c16_i32_46 : i32 to vector<2x256xi32>
    %199 = arith.cmpi slt, %197, %198 : vector<2x256xi32>
    %200 = arith.andi %195, %199 : vector<2x256xi1>
    %201 = arith.andi %41, %200 : vector<2x256xi1>
    %202 = vector.extract_strided_slice %21 {offsets = [0, 211], sizes = [2, 45], strides = [1, 1]} : vector<2x256xf32> to vector<2x45xf32>
    %203 = vector.extract_strided_slice %21 {offsets = [0, 0], sizes = [2, 211], strides = [1, 1]} : vector<2x256xf32> to vector<2x211xf32>
    %204 = tpu.concatenate %202, %203 in 1 : vector<2x45xf32>, vector<2x211xf32> -> vector<2x256xf32>
    %cst_47 = arith.constant 0.000000e+00 : f32
    %205 = vector.broadcast %cst_47 : f32 to vector<2x256xf32>
    %206 = arith.select %201, %204, %205 : vector<2x256xi1>, vector<2x256xf32>
    %c6 = arith.constant 6 : index
    %207 = memref.load %arg3[%c6] : memref<98xf32, #tpu.memory_space<smem>>
    %208 = vector.extract_strided_slice %206 {offsets = [0, 0], sizes = [1, 256], strides = [1, 1]} : vector<2x256xf32> to vector<1x256xf32>
    %209 = vector.broadcast %207 : f32 to vector<1x256xf32>
    %210 = arith.mulf %209, %208 : vector<1x256xf32>
    %211 = arith.addf %191, %210 : vector<1x256xf32>
    %c55 = arith.constant 55 : index
    %212 = memref.load %arg3[%c55] : memref<98xf32, #tpu.memory_space<smem>>
    %213 = vector.extract_strided_slice %206 {offsets = [1, 0], sizes = [1, 256], strides = [1, 1]} : vector<2x256xf32> to vector<1x256xf32>
    %214 = vector.broadcast %212 : f32 to vector<1x256xf32>
    %215 = arith.mulf %214, %213 : vector<1x256xf32>
    %216 = arith.addf %211, %215 : vector<1x256xf32>
    %c-2_i32_48 = arith.constant -2 : i32
    %217 = vector.broadcast %c-2_i32_48 : i32 to vector<2x256xi32>
    %218 = arith.addi %28, %217 : vector<2x256xi32>
    %c0_i32_49 = arith.constant 0 : i32
    %219 = vector.broadcast %c0_i32_49 : i32 to vector<2x256xi32>
    %220 = arith.cmpi sge, %218, %219 : vector<2x256xi32>
    %c-2_i32_50 = arith.constant -2 : i32
    %221 = vector.broadcast %c-2_i32_50 : i32 to vector<2x256xi32>
    %222 = arith.addi %28, %221 : vector<2x256xi32>
    %c16_i32_51 = arith.constant 16 : i32
    %223 = vector.broadcast %c16_i32_51 : i32 to vector<2x256xi32>
    %224 = arith.cmpi slt, %222, %223 : vector<2x256xi32>
    %225 = arith.andi %220, %224 : vector<2x256xi1>
    %c-3_i32_52 = arith.constant -3 : i32
    %226 = vector.broadcast %c-3_i32_52 : i32 to vector<2x256xi32>
    %227 = arith.addi %31, %226 : vector<2x256xi32>
    %c0_i32_53 = arith.constant 0 : i32
    %228 = vector.broadcast %c0_i32_53 : i32 to vector<2x256xi32>
    %229 = arith.cmpi sge, %227, %228 : vector<2x256xi32>
    %c-3_i32_54 = arith.constant -3 : i32
    %230 = vector.broadcast %c-3_i32_54 : i32 to vector<2x256xi32>
    %231 = arith.addi %31, %230 : vector<2x256xi32>
    %c16_i32_55 = arith.constant 16 : i32
    %232 = vector.broadcast %c16_i32_55 : i32 to vector<2x256xi32>
    %233 = arith.cmpi slt, %231, %232 : vector<2x256xi32>
    %234 = arith.andi %229, %233 : vector<2x256xi1>
    %235 = arith.andi %225, %234 : vector<2x256xi1>
    %236 = vector.extract_strided_slice %21 {offsets = [0, 221], sizes = [2, 35], strides = [1, 1]} : vector<2x256xf32> to vector<2x35xf32>
    %237 = vector.extract_strided_slice %21 {offsets = [0, 0], sizes = [2, 221], strides = [1, 1]} : vector<2x256xf32> to vector<2x221xf32>
    %238 = tpu.concatenate %236, %237 in 1 : vector<2x35xf32>, vector<2x221xf32> -> vector<2x256xf32>
    %cst_56 = arith.constant 0.000000e+00 : f32
    %239 = vector.broadcast %cst_56 : f32 to vector<2x256xf32>
    %240 = arith.select %235, %238, %239 : vector<2x256xi1>, vector<2x256xf32>
    %c7 = arith.constant 7 : index
    %241 = memref.load %arg3[%c7] : memref<98xf32, #tpu.memory_space<smem>>
    %242 = vector.extract_strided_slice %240 {offsets = [0, 0], sizes = [1, 256], strides = [1, 1]} : vector<2x256xf32> to vector<1x256xf32>
    %243 = vector.broadcast %241 : f32 to vector<1x256xf32>
    %244 = arith.mulf %243, %242 : vector<1x256xf32>
    %245 = arith.addf %216, %244 : vector<1x256xf32>
    %c56 = arith.constant 56 : index
    %246 = memref.load %arg3[%c56] : memref<98xf32, #tpu.memory_space<smem>>
    %247 = vector.extract_strided_slice %240 {offsets = [1, 0], sizes = [1, 256], strides = [1, 1]} : vector<2x256xf32> to vector<1x256xf32>
    %248 = vector.broadcast %246 : f32 to vector<1x256xf32>
    %249 = arith.mulf %248, %247 : vector<1x256xf32>
    %250 = arith.addf %245, %249 : vector<1x256xf32>
    %c-2_i32_57 = arith.constant -2 : i32
    %251 = vector.broadcast %c-2_i32_57 : i32 to vector<2x256xi32>
    %252 = arith.addi %31, %251 : vector<2x256xi32>
    %c0_i32_58 = arith.constant 0 : i32
    %253 = vector.broadcast %c0_i32_58 : i32 to vector<2x256xi32>
    %254 = arith.cmpi sge, %252, %253 : vector<2x256xi32>
    %c-2_i32_59 = arith.constant -2 : i32
    %255 = vector.broadcast %c-2_i32_59 : i32 to vector<2x256xi32>
    %256 = arith.addi %31, %255 : vector<2x256xi32>
    %c16_i32_60 = arith.constant 16 : i32
    %257 = vector.broadcast %c16_i32_60 : i32 to vector<2x256xi32>
    %258 = arith.cmpi slt, %256, %257 : vector<2x256xi32>
    %259 = arith.andi %254, %258 : vector<2x256xi1>
    %260 = arith.andi %225, %259 : vector<2x256xi1>
    %261 = vector.extract_strided_slice %21 {offsets = [0, 222], sizes = [2, 34], strides = [1, 1]} : vector<2x256xf32> to vector<2x34xf32>
    %262 = vector.extract_strided_slice %21 {offsets = [0, 0], sizes = [2, 222], strides = [1, 1]} : vector<2x256xf32> to vector<2x222xf32>
    %263 = tpu.concatenate %261, %262 in 1 : vector<2x34xf32>, vector<2x222xf32> -> vector<2x256xf32>
    %cst_61 = arith.constant 0.000000e+00 : f32
    %264 = vector.broadcast %cst_61 : f32 to vector<2x256xf32>
    %265 = arith.select %260, %263, %264 : vector<2x256xi1>, vector<2x256xf32>
    %c8 = arith.constant 8 : index
    %266 = memref.load %arg3[%c8] : memref<98xf32, #tpu.memory_space<smem>>
    %267 = vector.extract_strided_slice %265 {offsets = [0, 0], sizes = [1, 256], strides = [1, 1]} : vector<2x256xf32> to vector<1x256xf32>
    %268 = vector.broadcast %266 : f32 to vector<1x256xf32>
    %269 = arith.mulf %268, %267 : vector<1x256xf32>
    %270 = arith.addf %250, %269 : vector<1x256xf32>
    %c57 = arith.constant 57 : index
    %271 = memref.load %arg3[%c57] : memref<98xf32, #tpu.memory_space<smem>>
    %272 = vector.extract_strided_slice %265 {offsets = [1, 0], sizes = [1, 256], strides = [1, 1]} : vector<2x256xf32> to vector<1x256xf32>
    %273 = vector.broadcast %271 : f32 to vector<1x256xf32>
    %274 = arith.mulf %273, %272 : vector<1x256xf32>
    %275 = arith.addf %270, %274 : vector<1x256xf32>
    %c-1_i32_62 = arith.constant -1 : i32
    %276 = vector.broadcast %c-1_i32_62 : i32 to vector<2x256xi32>
    %277 = arith.addi %31, %276 : vector<2x256xi32>
    %c0_i32_63 = arith.constant 0 : i32
    %278 = vector.broadcast %c0_i32_63 : i32 to vector<2x256xi32>
    %279 = arith.cmpi sge, %277, %278 : vector<2x256xi32>
    %c-1_i32_64 = arith.constant -1 : i32
    %280 = vector.broadcast %c-1_i32_64 : i32 to vector<2x256xi32>
    %281 = arith.addi %31, %280 : vector<2x256xi32>
    %c16_i32_65 = arith.constant 16 : i32
    %282 = vector.broadcast %c16_i32_65 : i32 to vector<2x256xi32>
    %283 = arith.cmpi slt, %281, %282 : vector<2x256xi32>
    %284 = arith.andi %279, %283 : vector<2x256xi1>
    %285 = arith.andi %225, %284 : vector<2x256xi1>
    %286 = vector.extract_strided_slice %21 {offsets = [0, 223], sizes = [2, 33], strides = [1, 1]} : vector<2x256xf32> to vector<2x33xf32>
    %287 = vector.extract_strided_slice %21 {offsets = [0, 0], sizes = [2, 223], strides = [1, 1]} : vector<2x256xf32> to vector<2x223xf32>
    %288 = tpu.concatenate %286, %287 in 1 : vector<2x33xf32>, vector<2x223xf32> -> vector<2x256xf32>
    %cst_66 = arith.constant 0.000000e+00 : f32
    %289 = vector.broadcast %cst_66 : f32 to vector<2x256xf32>
    %290 = arith.select %285, %288, %289 : vector<2x256xi1>, vector<2x256xf32>
    %c9 = arith.constant 9 : index
    %291 = memref.load %arg3[%c9] : memref<98xf32, #tpu.memory_space<smem>>
    %292 = vector.extract_strided_slice %290 {offsets = [0, 0], sizes = [1, 256], strides = [1, 1]} : vector<2x256xf32> to vector<1x256xf32>
    %293 = vector.broadcast %291 : f32 to vector<1x256xf32>
    %294 = arith.mulf %293, %292 : vector<1x256xf32>
    %295 = arith.addf %275, %294 : vector<1x256xf32>
    %c58 = arith.constant 58 : index
    %296 = memref.load %arg3[%c58] : memref<98xf32, #tpu.memory_space<smem>>
    %297 = vector.extract_strided_slice %290 {offsets = [1, 0], sizes = [1, 256], strides = [1, 1]} : vector<2x256xf32> to vector<1x256xf32>
    %298 = vector.broadcast %296 : f32 to vector<1x256xf32>
    %299 = arith.mulf %298, %297 : vector<1x256xf32>
    %300 = arith.addf %295, %299 : vector<1x256xf32>
    %c0_i32_67 = arith.constant 0 : i32
    %301 = vector.broadcast %c0_i32_67 : i32 to vector<2x256xi32>
    %302 = arith.addi %31, %301 : vector<2x256xi32>
    %c0_i32_68 = arith.constant 0 : i32
    %303 = vector.broadcast %c0_i32_68 : i32 to vector<2x256xi32>
    %304 = arith.cmpi sge, %302, %303 : vector<2x256xi32>
    %c0_i32_69 = arith.constant 0 : i32
    %305 = vector.broadcast %c0_i32_69 : i32 to vector<2x256xi32>
    %306 = arith.addi %31, %305 : vector<2x256xi32>
    %c16_i32_70 = arith.constant 16 : i32
    %307 = vector.broadcast %c16_i32_70 : i32 to vector<2x256xi32>
    %308 = arith.cmpi slt, %306, %307 : vector<2x256xi32>
    %309 = arith.andi %304, %308 : vector<2x256xi1>
    %310 = arith.andi %225, %309 : vector<2x256xi1>
    %311 = vector.extract_strided_slice %21 {offsets = [0, 224], sizes = [2, 32], strides = [1, 1]} : vector<2x256xf32> to vector<2x32xf32>
    %312 = vector.extract_strided_slice %21 {offsets = [0, 0], sizes = [2, 224], strides = [1, 1]} : vector<2x256xf32> to vector<2x224xf32>
    %313 = tpu.concatenate %311, %312 in 1 : vector<2x32xf32>, vector<2x224xf32> -> vector<2x256xf32>
    %cst_71 = arith.constant 0.000000e+00 : f32
    %314 = vector.broadcast %cst_71 : f32 to vector<2x256xf32>
    %315 = arith.select %310, %313, %314 : vector<2x256xi1>, vector<2x256xf32>
    %c10 = arith.constant 10 : index
    %316 = memref.load %arg3[%c10] : memref<98xf32, #tpu.memory_space<smem>>
    %317 = vector.extract_strided_slice %315 {offsets = [0, 0], sizes = [1, 256], strides = [1, 1]} : vector<2x256xf32> to vector<1x256xf32>
    %318 = vector.broadcast %316 : f32 to vector<1x256xf32>
    %319 = arith.mulf %318, %317 : vector<1x256xf32>
    %320 = arith.addf %300, %319 : vector<1x256xf32>
    %c59 = arith.constant 59 : index
    %321 = memref.load %arg3[%c59] : memref<98xf32, #tpu.memory_space<smem>>
    %322 = vector.extract_strided_slice %315 {offsets = [1, 0], sizes = [1, 256], strides = [1, 1]} : vector<2x256xf32> to vector<1x256xf32>
    %323 = vector.broadcast %321 : f32 to vector<1x256xf32>
    %324 = arith.mulf %323, %322 : vector<1x256xf32>
    %325 = arith.addf %320, %324 : vector<1x256xf32>
    %c1_i32_72 = arith.constant 1 : i32
    %326 = vector.broadcast %c1_i32_72 : i32 to vector<2x256xi32>
    %327 = arith.addi %31, %326 : vector<2x256xi32>
    %c0_i32_73 = arith.constant 0 : i32
    %328 = vector.broadcast %c0_i32_73 : i32 to vector<2x256xi32>
    %329 = arith.cmpi sge, %327, %328 : vector<2x256xi32>
    %c1_i32_74 = arith.constant 1 : i32
    %330 = vector.broadcast %c1_i32_74 : i32 to vector<2x256xi32>
    %331 = arith.addi %31, %330 : vector<2x256xi32>
    %c16_i32_75 = arith.constant 16 : i32
    %332 = vector.broadcast %c16_i32_75 : i32 to vector<2x256xi32>
    %333 = arith.cmpi slt, %331, %332 : vector<2x256xi32>
    %334 = arith.andi %329, %333 : vector<2x256xi1>
    %335 = arith.andi %225, %334 : vector<2x256xi1>
    %336 = vector.extract_strided_slice %21 {offsets = [0, 225], sizes = [2, 31], strides = [1, 1]} : vector<2x256xf32> to vector<2x31xf32>
    %337 = vector.extract_strided_slice %21 {offsets = [0, 0], sizes = [2, 225], strides = [1, 1]} : vector<2x256xf32> to vector<2x225xf32>
    %338 = tpu.concatenate %336, %337 in 1 : vector<2x31xf32>, vector<2x225xf32> -> vector<2x256xf32>
    %cst_76 = arith.constant 0.000000e+00 : f32
    %339 = vector.broadcast %cst_76 : f32 to vector<2x256xf32>
    %340 = arith.select %335, %338, %339 : vector<2x256xi1>, vector<2x256xf32>
    %c11 = arith.constant 11 : index
    %341 = memref.load %arg3[%c11] : memref<98xf32, #tpu.memory_space<smem>>
    %342 = vector.extract_strided_slice %340 {offsets = [0, 0], sizes = [1, 256], strides = [1, 1]} : vector<2x256xf32> to vector<1x256xf32>
    %343 = vector.broadcast %341 : f32 to vector<1x256xf32>
    %344 = arith.mulf %343, %342 : vector<1x256xf32>
    %345 = arith.addf %325, %344 : vector<1x256xf32>
    %c60 = arith.constant 60 : index
    %346 = memref.load %arg3[%c60] : memref<98xf32, #tpu.memory_space<smem>>
    %347 = vector.extract_strided_slice %340 {offsets = [1, 0], sizes = [1, 256], strides = [1, 1]} : vector<2x256xf32> to vector<1x256xf32>
    %348 = vector.broadcast %346 : f32 to vector<1x256xf32>
    %349 = arith.mulf %348, %347 : vector<1x256xf32>
    %350 = arith.addf %345, %349 : vector<1x256xf32>
    %c2_i32_77 = arith.constant 2 : i32
    %351 = vector.broadcast %c2_i32_77 : i32 to vector<2x256xi32>
    %352 = arith.addi %31, %351 : vector<2x256xi32>
    %c0_i32_78 = arith.constant 0 : i32
    %353 = vector.broadcast %c0_i32_78 : i32 to vector<2x256xi32>
    %354 = arith.cmpi sge, %352, %353 : vector<2x256xi32>
    %c2_i32_79 = arith.constant 2 : i32
    %355 = vector.broadcast %c2_i32_79 : i32 to vector<2x256xi32>
    %356 = arith.addi %31, %355 : vector<2x256xi32>
    %c16_i32_80 = arith.constant 16 : i32
    %357 = vector.broadcast %c16_i32_80 : i32 to vector<2x256xi32>
    %358 = arith.cmpi slt, %356, %357 : vector<2x256xi32>
    %359 = arith.andi %354, %358 : vector<2x256xi1>
    %360 = arith.andi %225, %359 : vector<2x256xi1>
    %361 = vector.extract_strided_slice %21 {offsets = [0, 226], sizes = [2, 30], strides = [1, 1]} : vector<2x256xf32> to vector<2x30xf32>
    %362 = vector.extract_strided_slice %21 {offsets = [0, 0], sizes = [2, 226], strides = [1, 1]} : vector<2x256xf32> to vector<2x226xf32>
    %363 = tpu.concatenate %361, %362 in 1 : vector<2x30xf32>, vector<2x226xf32> -> vector<2x256xf32>
    %cst_81 = arith.constant 0.000000e+00 : f32
    %364 = vector.broadcast %cst_81 : f32 to vector<2x256xf32>
    %365 = arith.select %360, %363, %364 : vector<2x256xi1>, vector<2x256xf32>
    %c12 = arith.constant 12 : index
    %366 = memref.load %arg3[%c12] : memref<98xf32, #tpu.memory_space<smem>>
    %367 = vector.extract_strided_slice %365 {offsets = [0, 0], sizes = [1, 256], strides = [1, 1]} : vector<2x256xf32> to vector<1x256xf32>
    %368 = vector.broadcast %366 : f32 to vector<1x256xf32>
    %369 = arith.mulf %368, %367 : vector<1x256xf32>
    %370 = arith.addf %350, %369 : vector<1x256xf32>
    %c61 = arith.constant 61 : index
    %371 = memref.load %arg3[%c61] : memref<98xf32, #tpu.memory_space<smem>>
    %372 = vector.extract_strided_slice %365 {offsets = [1, 0], sizes = [1, 256], strides = [1, 1]} : vector<2x256xf32> to vector<1x256xf32>
    %373 = vector.broadcast %371 : f32 to vector<1x256xf32>
    %374 = arith.mulf %373, %372 : vector<1x256xf32>
    %375 = arith.addf %370, %374 : vector<1x256xf32>
    %c3_i32_82 = arith.constant 3 : i32
    %376 = vector.broadcast %c3_i32_82 : i32 to vector<2x256xi32>
    %377 = arith.addi %31, %376 : vector<2x256xi32>
    %c0_i32_83 = arith.constant 0 : i32
    %378 = vector.broadcast %c0_i32_83 : i32 to vector<2x256xi32>
    %379 = arith.cmpi sge, %377, %378 : vector<2x256xi32>
    %c3_i32_84 = arith.constant 3 : i32
    %380 = vector.broadcast %c3_i32_84 : i32 to vector<2x256xi32>
    %381 = arith.addi %31, %380 : vector<2x256xi32>
    %c16_i32_85 = arith.constant 16 : i32
    %382 = vector.broadcast %c16_i32_85 : i32 to vector<2x256xi32>
    %383 = arith.cmpi slt, %381, %382 : vector<2x256xi32>
    %384 = arith.andi %379, %383 : vector<2x256xi1>
    %385 = arith.andi %225, %384 : vector<2x256xi1>
    %386 = vector.extract_strided_slice %21 {offsets = [0, 227], sizes = [2, 29], strides = [1, 1]} : vector<2x256xf32> to vector<2x29xf32>
    %387 = vector.extract_strided_slice %21 {offsets = [0, 0], sizes = [2, 227], strides = [1, 1]} : vector<2x256xf32> to vector<2x227xf32>
    %388 = tpu.concatenate %386, %387 in 1 : vector<2x29xf32>, vector<2x227xf32> -> vector<2x256xf32>
    %cst_86 = arith.constant 0.000000e+00 : f32
    %389 = vector.broadcast %cst_86 : f32 to vector<2x256xf32>
    %390 = arith.select %385, %388, %389 : vector<2x256xi1>, vector<2x256xf32>
    %c13 = arith.constant 13 : index
    %391 = memref.load %arg3[%c13] : memref<98xf32, #tpu.memory_space<smem>>
    %392 = vector.extract_strided_slice %390 {offsets = [0, 0], sizes = [1, 256], strides = [1, 1]} : vector<2x256xf32> to vector<1x256xf32>
    %393 = vector.broadcast %391 : f32 to vector<1x256xf32>
    %394 = arith.mulf %393, %392 : vector<1x256xf32>
    %395 = arith.addf %375, %394 : vector<1x256xf32>
    %c62 = arith.constant 62 : index
    %396 = memref.load %arg3[%c62] : memref<98xf32, #tpu.memory_space<smem>>
    %397 = vector.extract_strided_slice %390 {offsets = [1, 0], sizes = [1, 256], strides = [1, 1]} : vector<2x256xf32> to vector<1x256xf32>
    %398 = vector.broadcast %396 : f32 to vector<1x256xf32>
    %399 = arith.mulf %398, %397 : vector<1x256xf32>
    %400 = arith.addf %395, %399 : vector<1x256xf32>
    %c-1_i32_87 = arith.constant -1 : i32
    %401 = vector.broadcast %c-1_i32_87 : i32 to vector<2x256xi32>
    %402 = arith.addi %28, %401 : vector<2x256xi32>
    %c0_i32_88 = arith.constant 0 : i32
    %403 = vector.broadcast %c0_i32_88 : i32 to vector<2x256xi32>
    %404 = arith.cmpi sge, %402, %403 : vector<2x256xi32>
    %c-1_i32_89 = arith.constant -1 : i32
    %405 = vector.broadcast %c-1_i32_89 : i32 to vector<2x256xi32>
    %406 = arith.addi %28, %405 : vector<2x256xi32>
    %c16_i32_90 = arith.constant 16 : i32
    %407 = vector.broadcast %c16_i32_90 : i32 to vector<2x256xi32>
    %408 = arith.cmpi slt, %406, %407 : vector<2x256xi32>
    %409 = arith.andi %404, %408 : vector<2x256xi1>
    %c-3_i32_91 = arith.constant -3 : i32
    %410 = vector.broadcast %c-3_i32_91 : i32 to vector<2x256xi32>
    %411 = arith.addi %31, %410 : vector<2x256xi32>
    %c0_i32_92 = arith.constant 0 : i32
    %412 = vector.broadcast %c0_i32_92 : i32 to vector<2x256xi32>
    %413 = arith.cmpi sge, %411, %412 : vector<2x256xi32>
    %c-3_i32_93 = arith.constant -3 : i32
    %414 = vector.broadcast %c-3_i32_93 : i32 to vector<2x256xi32>
    %415 = arith.addi %31, %414 : vector<2x256xi32>
    %c16_i32_94 = arith.constant 16 : i32
    %416 = vector.broadcast %c16_i32_94 : i32 to vector<2x256xi32>
    %417 = arith.cmpi slt, %415, %416 : vector<2x256xi32>
    %418 = arith.andi %413, %417 : vector<2x256xi1>
    %419 = arith.andi %409, %418 : vector<2x256xi1>
    %420 = vector.extract_strided_slice %21 {offsets = [0, 237], sizes = [2, 19], strides = [1, 1]} : vector<2x256xf32> to vector<2x19xf32>
    %421 = vector.extract_strided_slice %21 {offsets = [0, 0], sizes = [2, 237], strides = [1, 1]} : vector<2x256xf32> to vector<2x237xf32>
    %422 = tpu.concatenate %420, %421 in 1 : vector<2x19xf32>, vector<2x237xf32> -> vector<2x256xf32>
    %cst_95 = arith.constant 0.000000e+00 : f32
    %423 = vector.broadcast %cst_95 : f32 to vector<2x256xf32>
    %424 = arith.select %419, %422, %423 : vector<2x256xi1>, vector<2x256xf32>
    %c14 = arith.constant 14 : index
    %425 = memref.load %arg3[%c14] : memref<98xf32, #tpu.memory_space<smem>>
    %426 = vector.extract_strided_slice %424 {offsets = [0, 0], sizes = [1, 256], strides = [1, 1]} : vector<2x256xf32> to vector<1x256xf32>
    %427 = vector.broadcast %425 : f32 to vector<1x256xf32>
    %428 = arith.mulf %427, %426 : vector<1x256xf32>
    %429 = arith.addf %400, %428 : vector<1x256xf32>
    %c63 = arith.constant 63 : index
    %430 = memref.load %arg3[%c63] : memref<98xf32, #tpu.memory_space<smem>>
    %431 = vector.extract_strided_slice %424 {offsets = [1, 0], sizes = [1, 256], strides = [1, 1]} : vector<2x256xf32> to vector<1x256xf32>
    %432 = vector.broadcast %430 : f32 to vector<1x256xf32>
    %433 = arith.mulf %432, %431 : vector<1x256xf32>
    %434 = arith.addf %429, %433 : vector<1x256xf32>
    %c-2_i32_96 = arith.constant -2 : i32
    %435 = vector.broadcast %c-2_i32_96 : i32 to vector<2x256xi32>
    %436 = arith.addi %31, %435 : vector<2x256xi32>
    %c0_i32_97 = arith.constant 0 : i32
    %437 = vector.broadcast %c0_i32_97 : i32 to vector<2x256xi32>
    %438 = arith.cmpi sge, %436, %437 : vector<2x256xi32>
    %c-2_i32_98 = arith.constant -2 : i32
    %439 = vector.broadcast %c-2_i32_98 : i32 to vector<2x256xi32>
    %440 = arith.addi %31, %439 : vector<2x256xi32>
    %c16_i32_99 = arith.constant 16 : i32
    %441 = vector.broadcast %c16_i32_99 : i32 to vector<2x256xi32>
    %442 = arith.cmpi slt, %440, %441 : vector<2x256xi32>
    %443 = arith.andi %438, %442 : vector<2x256xi1>
    %444 = arith.andi %409, %443 : vector<2x256xi1>
    %445 = vector.extract_strided_slice %21 {offsets = [0, 238], sizes = [2, 18], strides = [1, 1]} : vector<2x256xf32> to vector<2x18xf32>
    %446 = vector.extract_strided_slice %21 {offsets = [0, 0], sizes = [2, 238], strides = [1, 1]} : vector<2x256xf32> to vector<2x238xf32>
    %447 = tpu.concatenate %445, %446 in 1 : vector<2x18xf32>, vector<2x238xf32> -> vector<2x256xf32>
    %cst_100 = arith.constant 0.000000e+00 : f32
    %448 = vector.broadcast %cst_100 : f32 to vector<2x256xf32>
    %449 = arith.select %444, %447, %448 : vector<2x256xi1>, vector<2x256xf32>
    %c15 = arith.constant 15 : index
    %450 = memref.load %arg3[%c15] : memref<98xf32, #tpu.memory_space<smem>>
    %451 = vector.extract_strided_slice %449 {offsets = [0, 0], sizes = [1, 256], strides = [1, 1]} : vector<2x256xf32> to vector<1x256xf32>
    %452 = vector.broadcast %450 : f32 to vector<1x256xf32>
    %453 = arith.mulf %452, %451 : vector<1x256xf32>
    %454 = arith.addf %434, %453 : vector<1x256xf32>
    %c64 = arith.constant 64 : index
    %455 = memref.load %arg3[%c64] : memref<98xf32, #tpu.memory_space<smem>>
    %456 = vector.extract_strided_slice %449 {offsets = [1, 0], sizes = [1, 256], strides = [1, 1]} : vector<2x256xf32> to vector<1x256xf32>
    %457 = vector.broadcast %455 : f32 to vector<1x256xf32>
    %458 = arith.mulf %457, %456 : vector<1x256xf32>
    %459 = arith.addf %454, %458 : vector<1x256xf32>
    %c-1_i32_101 = arith.constant -1 : i32
    %460 = vector.broadcast %c-1_i32_101 : i32 to vector<2x256xi32>
    %461 = arith.addi %31, %460 : vector<2x256xi32>
    %c0_i32_102 = arith.constant 0 : i32
    %462 = vector.broadcast %c0_i32_102 : i32 to vector<2x256xi32>
    %463 = arith.cmpi sge, %461, %462 : vector<2x256xi32>
    %c-1_i32_103 = arith.constant -1 : i32
    %464 = vector.broadcast %c-1_i32_103 : i32 to vector<2x256xi32>
    %465 = arith.addi %31, %464 : vector<2x256xi32>
    %c16_i32_104 = arith.constant 16 : i32
    %466 = vector.broadcast %c16_i32_104 : i32 to vector<2x256xi32>
    %467 = arith.cmpi slt, %465, %466 : vector<2x256xi32>
    %468 = arith.andi %463, %467 : vector<2x256xi1>
    %469 = arith.andi %409, %468 : vector<2x256xi1>
    %470 = vector.extract_strided_slice %21 {offsets = [0, 239], sizes = [2, 17], strides = [1, 1]} : vector<2x256xf32> to vector<2x17xf32>
    %471 = vector.extract_strided_slice %21 {offsets = [0, 0], sizes = [2, 239], strides = [1, 1]} : vector<2x256xf32> to vector<2x239xf32>
    %472 = tpu.concatenate %470, %471 in 1 : vector<2x17xf32>, vector<2x239xf32> -> vector<2x256xf32>
    %cst_105 = arith.constant 0.000000e+00 : f32
    %473 = vector.broadcast %cst_105 : f32 to vector<2x256xf32>
    %474 = arith.select %469, %472, %473 : vector<2x256xi1>, vector<2x256xf32>
    %c16 = arith.constant 16 : index
    %475 = memref.load %arg3[%c16] : memref<98xf32, #tpu.memory_space<smem>>
    %476 = vector.extract_strided_slice %474 {offsets = [0, 0], sizes = [1, 256], strides = [1, 1]} : vector<2x256xf32> to vector<1x256xf32>
    %477 = vector.broadcast %475 : f32 to vector<1x256xf32>
    %478 = arith.mulf %477, %476 : vector<1x256xf32>
    %479 = arith.addf %459, %478 : vector<1x256xf32>
    %c65 = arith.constant 65 : index
    %480 = memref.load %arg3[%c65] : memref<98xf32, #tpu.memory_space<smem>>
    %481 = vector.extract_strided_slice %474 {offsets = [1, 0], sizes = [1, 256], strides = [1, 1]} : vector<2x256xf32> to vector<1x256xf32>
    %482 = vector.broadcast %480 : f32 to vector<1x256xf32>
    %483 = arith.mulf %482, %481 : vector<1x256xf32>
    %484 = arith.addf %479, %483 : vector<1x256xf32>
    %c0_i32_106 = arith.constant 0 : i32
    %485 = vector.broadcast %c0_i32_106 : i32 to vector<2x256xi32>
    %486 = arith.addi %31, %485 : vector<2x256xi32>
    %c0_i32_107 = arith.constant 0 : i32
    %487 = vector.broadcast %c0_i32_107 : i32 to vector<2x256xi32>
    %488 = arith.cmpi sge, %486, %487 : vector<2x256xi32>
    %c0_i32_108 = arith.constant 0 : i32
    %489 = vector.broadcast %c0_i32_108 : i32 to vector<2x256xi32>
    %490 = arith.addi %31, %489 : vector<2x256xi32>
    %c16_i32_109 = arith.constant 16 : i32
    %491 = vector.broadcast %c16_i32_109 : i32 to vector<2x256xi32>
    %492 = arith.cmpi slt, %490, %491 : vector<2x256xi32>
    %493 = arith.andi %488, %492 : vector<2x256xi1>
    %494 = arith.andi %409, %493 : vector<2x256xi1>
    %495 = vector.extract_strided_slice %21 {offsets = [0, 240], sizes = [2, 16], strides = [1, 1]} : vector<2x256xf32> to vector<2x16xf32>
    %496 = vector.extract_strided_slice %21 {offsets = [0, 0], sizes = [2, 240], strides = [1, 1]} : vector<2x256xf32> to vector<2x240xf32>
    %497 = tpu.concatenate %495, %496 in 1 : vector<2x16xf32>, vector<2x240xf32> -> vector<2x256xf32>
    %cst_110 = arith.constant 0.000000e+00 : f32
    %498 = vector.broadcast %cst_110 : f32 to vector<2x256xf32>
    %499 = arith.select %494, %497, %498 : vector<2x256xi1>, vector<2x256xf32>
    %c17 = arith.constant 17 : index
    %500 = memref.load %arg3[%c17] : memref<98xf32, #tpu.memory_space<smem>>
    %501 = vector.extract_strided_slice %499 {offsets = [0, 0], sizes = [1, 256], strides = [1, 1]} : vector<2x256xf32> to vector<1x256xf32>
    %502 = vector.broadcast %500 : f32 to vector<1x256xf32>
    %503 = arith.mulf %502, %501 : vector<1x256xf32>
    %504 = arith.addf %484, %503 : vector<1x256xf32>
    %c66 = arith.constant 66 : index
    %505 = memref.load %arg3[%c66] : memref<98xf32, #tpu.memory_space<smem>>
    %506 = vector.extract_strided_slice %499 {offsets = [1, 0], sizes = [1, 256], strides = [1, 1]} : vector<2x256xf32> to vector<1x256xf32>
    %507 = vector.broadcast %505 : f32 to vector<1x256xf32>
    %508 = arith.mulf %507, %506 : vector<1x256xf32>
    %509 = arith.addf %504, %508 : vector<1x256xf32>
    %c1_i32_111 = arith.constant 1 : i32
    %510 = vector.broadcast %c1_i32_111 : i32 to vector<2x256xi32>
    %511 = arith.addi %31, %510 : vector<2x256xi32>
    %c0_i32_112 = arith.constant 0 : i32
    %512 = vector.broadcast %c0_i32_112 : i32 to vector<2x256xi32>
    %513 = arith.cmpi sge, %511, %512 : vector<2x256xi32>
    %c1_i32_113 = arith.constant 1 : i32
    %514 = vector.broadcast %c1_i32_113 : i32 to vector<2x256xi32>
    %515 = arith.addi %31, %514 : vector<2x256xi32>
    %c16_i32_114 = arith.constant 16 : i32
    %516 = vector.broadcast %c16_i32_114 : i32 to vector<2x256xi32>
    %517 = arith.cmpi slt, %515, %516 : vector<2x256xi32>
    %518 = arith.andi %513, %517 : vector<2x256xi1>
    %519 = arith.andi %409, %518 : vector<2x256xi1>
    %520 = vector.extract_strided_slice %21 {offsets = [0, 241], sizes = [2, 15], strides = [1, 1]} : vector<2x256xf32> to vector<2x15xf32>
    %521 = vector.extract_strided_slice %21 {offsets = [0, 0], sizes = [2, 241], strides = [1, 1]} : vector<2x256xf32> to vector<2x241xf32>
    %522 = tpu.concatenate %520, %521 in 1 : vector<2x15xf32>, vector<2x241xf32> -> vector<2x256xf32>
    %cst_115 = arith.constant 0.000000e+00 : f32
    %523 = vector.broadcast %cst_115 : f32 to vector<2x256xf32>
    %524 = arith.select %519, %522, %523 : vector<2x256xi1>, vector<2x256xf32>
    %c18 = arith.constant 18 : index
    %525 = memref.load %arg3[%c18] : memref<98xf32, #tpu.memory_space<smem>>
    %526 = vector.extract_strided_slice %524 {offsets = [0, 0], sizes = [1, 256], strides = [1, 1]} : vector<2x256xf32> to vector<1x256xf32>
    %527 = vector.broadcast %525 : f32 to vector<1x256xf32>
    %528 = arith.mulf %527, %526 : vector<1x256xf32>
    %529 = arith.addf %509, %528 : vector<1x256xf32>
    %c67 = arith.constant 67 : index
    %530 = memref.load %arg3[%c67] : memref<98xf32, #tpu.memory_space<smem>>
    %531 = vector.extract_strided_slice %524 {offsets = [1, 0], sizes = [1, 256], strides = [1, 1]} : vector<2x256xf32> to vector<1x256xf32>
    %532 = vector.broadcast %530 : f32 to vector<1x256xf32>
    %533 = arith.mulf %532, %531 : vector<1x256xf32>
    %534 = arith.addf %529, %533 : vector<1x256xf32>
    %c2_i32_116 = arith.constant 2 : i32
    %535 = vector.broadcast %c2_i32_116 : i32 to vector<2x256xi32>
    %536 = arith.addi %31, %535 : vector<2x256xi32>
    %c0_i32_117 = arith.constant 0 : i32
    %537 = vector.broadcast %c0_i32_117 : i32 to vector<2x256xi32>
    %538 = arith.cmpi sge, %536, %537 : vector<2x256xi32>
    %c2_i32_118 = arith.constant 2 : i32
    %539 = vector.broadcast %c2_i32_118 : i32 to vector<2x256xi32>
    %540 = arith.addi %31, %539 : vector<2x256xi32>
    %c16_i32_119 = arith.constant 16 : i32
    %541 = vector.broadcast %c16_i32_119 : i32 to vector<2x256xi32>
    %542 = arith.cmpi slt, %540, %541 : vector<2x256xi32>
    %543 = arith.andi %538, %542 : vector<2x256xi1>
    %544 = arith.andi %409, %543 : vector<2x256xi1>
    %545 = vector.extract_strided_slice %21 {offsets = [0, 242], sizes = [2, 14], strides = [1, 1]} : vector<2x256xf32> to vector<2x14xf32>
    %546 = vector.extract_strided_slice %21 {offsets = [0, 0], sizes = [2, 242], strides = [1, 1]} : vector<2x256xf32> to vector<2x242xf32>
    %547 = tpu.concatenate %545, %546 in 1 : vector<2x14xf32>, vector<2x242xf32> -> vector<2x256xf32>
    %cst_120 = arith.constant 0.000000e+00 : f32
    %548 = vector.broadcast %cst_120 : f32 to vector<2x256xf32>
    %549 = arith.select %544, %547, %548 : vector<2x256xi1>, vector<2x256xf32>
    %c19 = arith.constant 19 : index
    %550 = memref.load %arg3[%c19] : memref<98xf32, #tpu.memory_space<smem>>
    %551 = vector.extract_strided_slice %549 {offsets = [0, 0], sizes = [1, 256], strides = [1, 1]} : vector<2x256xf32> to vector<1x256xf32>
    %552 = vector.broadcast %550 : f32 to vector<1x256xf32>
    %553 = arith.mulf %552, %551 : vector<1x256xf32>
    %554 = arith.addf %534, %553 : vector<1x256xf32>
    %c68 = arith.constant 68 : index
    %555 = memref.load %arg3[%c68] : memref<98xf32, #tpu.memory_space<smem>>
    %556 = vector.extract_strided_slice %549 {offsets = [1, 0], sizes = [1, 256], strides = [1, 1]} : vector<2x256xf32> to vector<1x256xf32>
    %557 = vector.broadcast %555 : f32 to vector<1x256xf32>
    %558 = arith.mulf %557, %556 : vector<1x256xf32>
    %559 = arith.addf %554, %558 : vector<1x256xf32>
    %c3_i32_121 = arith.constant 3 : i32
    %560 = vector.broadcast %c3_i32_121 : i32 to vector<2x256xi32>
    %561 = arith.addi %31, %560 : vector<2x256xi32>
    %c0_i32_122 = arith.constant 0 : i32
    %562 = vector.broadcast %c0_i32_122 : i32 to vector<2x256xi32>
    %563 = arith.cmpi sge, %561, %562 : vector<2x256xi32>
    %c3_i32_123 = arith.constant 3 : i32
    %564 = vector.broadcast %c3_i32_123 : i32 to vector<2x256xi32>
    %565 = arith.addi %31, %564 : vector<2x256xi32>
    %c16_i32_124 = arith.constant 16 : i32
    %566 = vector.broadcast %c16_i32_124 : i32 to vector<2x256xi32>
    %567 = arith.cmpi slt, %565, %566 : vector<2x256xi32>
    %568 = arith.andi %563, %567 : vector<2x256xi1>
    %569 = arith.andi %409, %568 : vector<2x256xi1>
    %570 = vector.extract_strided_slice %21 {offsets = [0, 243], sizes = [2, 13], strides = [1, 1]} : vector<2x256xf32> to vector<2x13xf32>
    %571 = vector.extract_strided_slice %21 {offsets = [0, 0], sizes = [2, 243], strides = [1, 1]} : vector<2x256xf32> to vector<2x243xf32>
    %572 = tpu.concatenate %570, %571 in 1 : vector<2x13xf32>, vector<2x243xf32> -> vector<2x256xf32>
    %cst_125 = arith.constant 0.000000e+00 : f32
    %573 = vector.broadcast %cst_125 : f32 to vector<2x256xf32>
    %574 = arith.select %569, %572, %573 : vector<2x256xi1>, vector<2x256xf32>
    %c20 = arith.constant 20 : index
    %575 = memref.load %arg3[%c20] : memref<98xf32, #tpu.memory_space<smem>>
    %576 = vector.extract_strided_slice %574 {offsets = [0, 0], sizes = [1, 256], strides = [1, 1]} : vector<2x256xf32> to vector<1x256xf32>
    %577 = vector.broadcast %575 : f32 to vector<1x256xf32>
    %578 = arith.mulf %577, %576 : vector<1x256xf32>
    %579 = arith.addf %559, %578 : vector<1x256xf32>
    %c69 = arith.constant 69 : index
    %580 = memref.load %arg3[%c69] : memref<98xf32, #tpu.memory_space<smem>>
    %581 = vector.extract_strided_slice %574 {offsets = [1, 0], sizes = [1, 256], strides = [1, 1]} : vector<2x256xf32> to vector<1x256xf32>
    %582 = vector.broadcast %580 : f32 to vector<1x256xf32>
    %583 = arith.mulf %582, %581 : vector<1x256xf32>
    %584 = arith.addf %579, %583 : vector<1x256xf32>
    %c0_i32_126 = arith.constant 0 : i32
    %585 = vector.broadcast %c0_i32_126 : i32 to vector<2x256xi32>
    %586 = arith.addi %28, %585 : vector<2x256xi32>
    %c0_i32_127 = arith.constant 0 : i32
    %587 = vector.broadcast %c0_i32_127 : i32 to vector<2x256xi32>
    %588 = arith.cmpi sge, %586, %587 : vector<2x256xi32>
    %c0_i32_128 = arith.constant 0 : i32
    %589 = vector.broadcast %c0_i32_128 : i32 to vector<2x256xi32>
    %590 = arith.addi %28, %589 : vector<2x256xi32>
    %c16_i32_129 = arith.constant 16 : i32
    %591 = vector.broadcast %c16_i32_129 : i32 to vector<2x256xi32>
    %592 = arith.cmpi slt, %590, %591 : vector<2x256xi32>
    %593 = arith.andi %588, %592 : vector<2x256xi1>
    %c-3_i32_130 = arith.constant -3 : i32
    %594 = vector.broadcast %c-3_i32_130 : i32 to vector<2x256xi32>
    %595 = arith.addi %31, %594 : vector<2x256xi32>
    %c0_i32_131 = arith.constant 0 : i32
    %596 = vector.broadcast %c0_i32_131 : i32 to vector<2x256xi32>
    %597 = arith.cmpi sge, %595, %596 : vector<2x256xi32>
    %c-3_i32_132 = arith.constant -3 : i32
    %598 = vector.broadcast %c-3_i32_132 : i32 to vector<2x256xi32>
    %599 = arith.addi %31, %598 : vector<2x256xi32>
    %c16_i32_133 = arith.constant 16 : i32
    %600 = vector.broadcast %c16_i32_133 : i32 to vector<2x256xi32>
    %601 = arith.cmpi slt, %599, %600 : vector<2x256xi32>
    %602 = arith.andi %597, %601 : vector<2x256xi1>
    %603 = arith.andi %593, %602 : vector<2x256xi1>
    %604 = vector.extract_strided_slice %21 {offsets = [0, 253], sizes = [2, 3], strides = [1, 1]} : vector<2x256xf32> to vector<2x3xf32>
    %605 = vector.extract_strided_slice %21 {offsets = [0, 0], sizes = [2, 253], strides = [1, 1]} : vector<2x256xf32> to vector<2x253xf32>
    %606 = tpu.concatenate %604, %605 in 1 : vector<2x3xf32>, vector<2x253xf32> -> vector<2x256xf32>
    %cst_134 = arith.constant 0.000000e+00 : f32
    %607 = vector.broadcast %cst_134 : f32 to vector<2x256xf32>
    %608 = arith.select %603, %606, %607 : vector<2x256xi1>, vector<2x256xf32>
    %c21 = arith.constant 21 : index
    %609 = memref.load %arg3[%c21] : memref<98xf32, #tpu.memory_space<smem>>
    %610 = vector.extract_strided_slice %608 {offsets = [0, 0], sizes = [1, 256], strides = [1, 1]} : vector<2x256xf32> to vector<1x256xf32>
    %611 = vector.broadcast %609 : f32 to vector<1x256xf32>
    %612 = arith.mulf %611, %610 : vector<1x256xf32>
    %613 = arith.addf %584, %612 : vector<1x256xf32>
    %c70 = arith.constant 70 : index
    %614 = memref.load %arg3[%c70] : memref<98xf32, #tpu.memory_space<smem>>
    %615 = vector.extract_strided_slice %608 {offsets = [1, 0], sizes = [1, 256], strides = [1, 1]} : vector<2x256xf32> to vector<1x256xf32>
    %616 = vector.broadcast %614 : f32 to vector<1x256xf32>
    %617 = arith.mulf %616, %615 : vector<1x256xf32>
    %618 = arith.addf %613, %617 : vector<1x256xf32>
    %c-2_i32_135 = arith.constant -2 : i32
    %619 = vector.broadcast %c-2_i32_135 : i32 to vector<2x256xi32>
    %620 = arith.addi %31, %619 : vector<2x256xi32>
    %c0_i32_136 = arith.constant 0 : i32
    %621 = vector.broadcast %c0_i32_136 : i32 to vector<2x256xi32>
    %622 = arith.cmpi sge, %620, %621 : vector<2x256xi32>
    %c-2_i32_137 = arith.constant -2 : i32
    %623 = vector.broadcast %c-2_i32_137 : i32 to vector<2x256xi32>
    %624 = arith.addi %31, %623 : vector<2x256xi32>
    %c16_i32_138 = arith.constant 16 : i32
    %625 = vector.broadcast %c16_i32_138 : i32 to vector<2x256xi32>
    %626 = arith.cmpi slt, %624, %625 : vector<2x256xi32>
    %627 = arith.andi %622, %626 : vector<2x256xi1>
    %628 = arith.andi %593, %627 : vector<2x256xi1>
    %629 = vector.extract_strided_slice %21 {offsets = [0, 254], sizes = [2, 2], strides = [1, 1]} : vector<2x256xf32> to vector<2x2xf32>
    %630 = vector.extract_strided_slice %21 {offsets = [0, 0], sizes = [2, 254], strides = [1, 1]} : vector<2x256xf32> to vector<2x254xf32>
    %631 = tpu.concatenate %629, %630 in 1 : vector<2x2xf32>, vector<2x254xf32> -> vector<2x256xf32>
    %cst_139 = arith.constant 0.000000e+00 : f32
    %632 = vector.broadcast %cst_139 : f32 to vector<2x256xf32>
    %633 = arith.select %628, %631, %632 : vector<2x256xi1>, vector<2x256xf32>
    %c22 = arith.constant 22 : index
    %634 = memref.load %arg3[%c22] : memref<98xf32, #tpu.memory_space<smem>>
    %635 = vector.extract_strided_slice %633 {offsets = [0, 0], sizes = [1, 256], strides = [1, 1]} : vector<2x256xf32> to vector<1x256xf32>
    %636 = vector.broadcast %634 : f32 to vector<1x256xf32>
    %637 = arith.mulf %636, %635 : vector<1x256xf32>
    %638 = arith.addf %618, %637 : vector<1x256xf32>
    %c71 = arith.constant 71 : index
    %639 = memref.load %arg3[%c71] : memref<98xf32, #tpu.memory_space<smem>>
    %640 = vector.extract_strided_slice %633 {offsets = [1, 0], sizes = [1, 256], strides = [1, 1]} : vector<2x256xf32> to vector<1x256xf32>
    %641 = vector.broadcast %639 : f32 to vector<1x256xf32>
    %642 = arith.mulf %641, %640 : vector<1x256xf32>
    %643 = arith.addf %638, %642 : vector<1x256xf32>
    %c-1_i32_140 = arith.constant -1 : i32
    %644 = vector.broadcast %c-1_i32_140 : i32 to vector<2x256xi32>
    %645 = arith.addi %31, %644 : vector<2x256xi32>
    %c0_i32_141 = arith.constant 0 : i32
    %646 = vector.broadcast %c0_i32_141 : i32 to vector<2x256xi32>
    %647 = arith.cmpi sge, %645, %646 : vector<2x256xi32>
    %c-1_i32_142 = arith.constant -1 : i32
    %648 = vector.broadcast %c-1_i32_142 : i32 to vector<2x256xi32>
    %649 = arith.addi %31, %648 : vector<2x256xi32>
    %c16_i32_143 = arith.constant 16 : i32
    %650 = vector.broadcast %c16_i32_143 : i32 to vector<2x256xi32>
    %651 = arith.cmpi slt, %649, %650 : vector<2x256xi32>
    %652 = arith.andi %647, %651 : vector<2x256xi1>
    %653 = arith.andi %593, %652 : vector<2x256xi1>
    %654 = vector.extract_strided_slice %21 {offsets = [0, 255], sizes = [2, 1], strides = [1, 1]} : vector<2x256xf32> to vector<2x1xf32>
    %655 = vector.extract_strided_slice %21 {offsets = [0, 0], sizes = [2, 255], strides = [1, 1]} : vector<2x256xf32> to vector<2x255xf32>
    %656 = tpu.concatenate %654, %655 in 1 : vector<2x1xf32>, vector<2x255xf32> -> vector<2x256xf32>
    %cst_144 = arith.constant 0.000000e+00 : f32
    %657 = vector.broadcast %cst_144 : f32 to vector<2x256xf32>
    %658 = arith.select %653, %656, %657 : vector<2x256xi1>, vector<2x256xf32>
    %c23 = arith.constant 23 : index
    %659 = memref.load %arg3[%c23] : memref<98xf32, #tpu.memory_space<smem>>
    %660 = vector.extract_strided_slice %658 {offsets = [0, 0], sizes = [1, 256], strides = [1, 1]} : vector<2x256xf32> to vector<1x256xf32>
    %661 = vector.broadcast %659 : f32 to vector<1x256xf32>
    %662 = arith.mulf %661, %660 : vector<1x256xf32>
    %663 = arith.addf %643, %662 : vector<1x256xf32>
    %c72 = arith.constant 72 : index
    %664 = memref.load %arg3[%c72] : memref<98xf32, #tpu.memory_space<smem>>
    %665 = vector.extract_strided_slice %658 {offsets = [1, 0], sizes = [1, 256], strides = [1, 1]} : vector<2x256xf32> to vector<1x256xf32>
    %666 = vector.broadcast %664 : f32 to vector<1x256xf32>
    %667 = arith.mulf %666, %665 : vector<1x256xf32>
    %668 = arith.addf %663, %667 : vector<1x256xf32>
    %c0_i32_145 = arith.constant 0 : i32
    %669 = vector.broadcast %c0_i32_145 : i32 to vector<2x256xi32>
    %670 = arith.addi %31, %669 : vector<2x256xi32>
    %c0_i32_146 = arith.constant 0 : i32
    %671 = vector.broadcast %c0_i32_146 : i32 to vector<2x256xi32>
    %672 = arith.cmpi sge, %670, %671 : vector<2x256xi32>
    %c0_i32_147 = arith.constant 0 : i32
    %673 = vector.broadcast %c0_i32_147 : i32 to vector<2x256xi32>
    %674 = arith.addi %31, %673 : vector<2x256xi32>
    %c16_i32_148 = arith.constant 16 : i32
    %675 = vector.broadcast %c16_i32_148 : i32 to vector<2x256xi32>
    %676 = arith.cmpi slt, %674, %675 : vector<2x256xi32>
    %677 = arith.andi %672, %676 : vector<2x256xi1>
    %678 = arith.andi %593, %677 : vector<2x256xi1>
    %cst_149 = arith.constant 0.000000e+00 : f32
    %679 = vector.broadcast %cst_149 : f32 to vector<2x256xf32>
    %680 = arith.select %678, %21, %679 : vector<2x256xi1>, vector<2x256xf32>
    %c24 = arith.constant 24 : index
    %681 = memref.load %arg3[%c24] : memref<98xf32, #tpu.memory_space<smem>>
    %682 = vector.extract_strided_slice %680 {offsets = [0, 0], sizes = [1, 256], strides = [1, 1]} : vector<2x256xf32> to vector<1x256xf32>
    %683 = vector.broadcast %681 : f32 to vector<1x256xf32>
    %684 = arith.mulf %683, %682 : vector<1x256xf32>
    %685 = arith.addf %668, %684 : vector<1x256xf32>
    %c73 = arith.constant 73 : index
    %686 = memref.load %arg3[%c73] : memref<98xf32, #tpu.memory_space<smem>>
    %687 = vector.extract_strided_slice %680 {offsets = [1, 0], sizes = [1, 256], strides = [1, 1]} : vector<2x256xf32> to vector<1x256xf32>
    %688 = vector.broadcast %686 : f32 to vector<1x256xf32>
    %689 = arith.mulf %688, %687 : vector<1x256xf32>
    %690 = arith.addf %685, %689 : vector<1x256xf32>
    %c1_i32_150 = arith.constant 1 : i32
    %691 = vector.broadcast %c1_i32_150 : i32 to vector<2x256xi32>
    %692 = arith.addi %31, %691 : vector<2x256xi32>
    %c0_i32_151 = arith.constant 0 : i32
    %693 = vector.broadcast %c0_i32_151 : i32 to vector<2x256xi32>
    %694 = arith.cmpi sge, %692, %693 : vector<2x256xi32>
    %c1_i32_152 = arith.constant 1 : i32
    %695 = vector.broadcast %c1_i32_152 : i32 to vector<2x256xi32>
    %696 = arith.addi %31, %695 : vector<2x256xi32>
    %c16_i32_153 = arith.constant 16 : i32
    %697 = vector.broadcast %c16_i32_153 : i32 to vector<2x256xi32>
    %698 = arith.cmpi slt, %696, %697 : vector<2x256xi32>
    %699 = arith.andi %694, %698 : vector<2x256xi1>
    %700 = arith.andi %593, %699 : vector<2x256xi1>
    %701 = vector.extract_strided_slice %21 {offsets = [0, 1], sizes = [2, 255], strides = [1, 1]} : vector<2x256xf32> to vector<2x255xf32>
    %702 = vector.extract_strided_slice %21 {offsets = [0, 0], sizes = [2, 1], strides = [1, 1]} : vector<2x256xf32> to vector<2x1xf32>
    %703 = tpu.concatenate %701, %702 in 1 : vector<2x255xf32>, vector<2x1xf32> -> vector<2x256xf32>
    %cst_154 = arith.constant 0.000000e+00 : f32
    %704 = vector.broadcast %cst_154 : f32 to vector<2x256xf32>
    %705 = arith.select %700, %703, %704 : vector<2x256xi1>, vector<2x256xf32>
    %c25 = arith.constant 25 : index
    %706 = memref.load %arg3[%c25] : memref<98xf32, #tpu.memory_space<smem>>
    %707 = vector.extract_strided_slice %705 {offsets = [0, 0], sizes = [1, 256], strides = [1, 1]} : vector<2x256xf32> to vector<1x256xf32>
    %708 = vector.broadcast %706 : f32 to vector<1x256xf32>
    %709 = arith.mulf %708, %707 : vector<1x256xf32>
    %710 = arith.addf %690, %709 : vector<1x256xf32>
    %c74 = arith.constant 74 : index
    %711 = memref.load %arg3[%c74] : memref<98xf32, #tpu.memory_space<smem>>
    %712 = vector.extract_strided_slice %705 {offsets = [1, 0], sizes = [1, 256], strides = [1, 1]} : vector<2x256xf32> to vector<1x256xf32>
    %713 = vector.broadcast %711 : f32 to vector<1x256xf32>
    %714 = arith.mulf %713, %712 : vector<1x256xf32>
    %715 = arith.addf %710, %714 : vector<1x256xf32>
    %c2_i32_155 = arith.constant 2 : i32
    %716 = vector.broadcast %c2_i32_155 : i32 to vector<2x256xi32>
    %717 = arith.addi %31, %716 : vector<2x256xi32>
    %c0_i32_156 = arith.constant 0 : i32
    %718 = vector.broadcast %c0_i32_156 : i32 to vector<2x256xi32>
    %719 = arith.cmpi sge, %717, %718 : vector<2x256xi32>
    %c2_i32_157 = arith.constant 2 : i32
    %720 = vector.broadcast %c2_i32_157 : i32 to vector<2x256xi32>
    %721 = arith.addi %31, %720 : vector<2x256xi32>
    %c16_i32_158 = arith.constant 16 : i32
    %722 = vector.broadcast %c16_i32_158 : i32 to vector<2x256xi32>
    %723 = arith.cmpi slt, %721, %722 : vector<2x256xi32>
    %724 = arith.andi %719, %723 : vector<2x256xi1>
    %725 = arith.andi %593, %724 : vector<2x256xi1>
    %726 = vector.extract_strided_slice %21 {offsets = [0, 2], sizes = [2, 254], strides = [1, 1]} : vector<2x256xf32> to vector<2x254xf32>
    %727 = vector.extract_strided_slice %21 {offsets = [0, 0], sizes = [2, 2], strides = [1, 1]} : vector<2x256xf32> to vector<2x2xf32>
    %728 = tpu.concatenate %726, %727 in 1 : vector<2x254xf32>, vector<2x2xf32> -> vector<2x256xf32>
    %cst_159 = arith.constant 0.000000e+00 : f32
    %729 = vector.broadcast %cst_159 : f32 to vector<2x256xf32>
    %730 = arith.select %725, %728, %729 : vector<2x256xi1>, vector<2x256xf32>
    %c26 = arith.constant 26 : index
    %731 = memref.load %arg3[%c26] : memref<98xf32, #tpu.memory_space<smem>>
    %732 = vector.extract_strided_slice %730 {offsets = [0, 0], sizes = [1, 256], strides = [1, 1]} : vector<2x256xf32> to vector<1x256xf32>
    %733 = vector.broadcast %731 : f32 to vector<1x256xf32>
    %734 = arith.mulf %733, %732 : vector<1x256xf32>
    %735 = arith.addf %715, %734 : vector<1x256xf32>
    %c75 = arith.constant 75 : index
    %736 = memref.load %arg3[%c75] : memref<98xf32, #tpu.memory_space<smem>>
    %737 = vector.extract_strided_slice %730 {offsets = [1, 0], sizes = [1, 256], strides = [1, 1]} : vector<2x256xf32> to vector<1x256xf32>
    %738 = vector.broadcast %736 : f32 to vector<1x256xf32>
    %739 = arith.mulf %738, %737 : vector<1x256xf32>
    %740 = arith.addf %735, %739 : vector<1x256xf32>
    %c3_i32_160 = arith.constant 3 : i32
    %741 = vector.broadcast %c3_i32_160 : i32 to vector<2x256xi32>
    %742 = arith.addi %31, %741 : vector<2x256xi32>
    %c0_i32_161 = arith.constant 0 : i32
    %743 = vector.broadcast %c0_i32_161 : i32 to vector<2x256xi32>
    %744 = arith.cmpi sge, %742, %743 : vector<2x256xi32>
    %c3_i32_162 = arith.constant 3 : i32
    %745 = vector.broadcast %c3_i32_162 : i32 to vector<2x256xi32>
    %746 = arith.addi %31, %745 : vector<2x256xi32>
    %c16_i32_163 = arith.constant 16 : i32
    %747 = vector.broadcast %c16_i32_163 : i32 to vector<2x256xi32>
    %748 = arith.cmpi slt, %746, %747 : vector<2x256xi32>
    %749 = arith.andi %744, %748 : vector<2x256xi1>
    %750 = arith.andi %593, %749 : vector<2x256xi1>
    %751 = vector.extract_strided_slice %21 {offsets = [0, 3], sizes = [2, 253], strides = [1, 1]} : vector<2x256xf32> to vector<2x253xf32>
    %752 = vector.extract_strided_slice %21 {offsets = [0, 0], sizes = [2, 3], strides = [1, 1]} : vector<2x256xf32> to vector<2x3xf32>
    %753 = tpu.concatenate %751, %752 in 1 : vector<2x253xf32>, vector<2x3xf32> -> vector<2x256xf32>
    %cst_164 = arith.constant 0.000000e+00 : f32
    %754 = vector.broadcast %cst_164 : f32 to vector<2x256xf32>
    %755 = arith.select %750, %753, %754 : vector<2x256xi1>, vector<2x256xf32>
    %c27 = arith.constant 27 : index
    %756 = memref.load %arg3[%c27] : memref<98xf32, #tpu.memory_space<smem>>
    %757 = vector.extract_strided_slice %755 {offsets = [0, 0], sizes = [1, 256], strides = [1, 1]} : vector<2x256xf32> to vector<1x256xf32>
    %758 = vector.broadcast %756 : f32 to vector<1x256xf32>
    %759 = arith.mulf %758, %757 : vector<1x256xf32>
    %760 = arith.addf %740, %759 : vector<1x256xf32>
    %c76 = arith.constant 76 : index
    %761 = memref.load %arg3[%c76] : memref<98xf32, #tpu.memory_space<smem>>
    %762 = vector.extract_strided_slice %755 {offsets = [1, 0], sizes = [1, 256], strides = [1, 1]} : vector<2x256xf32> to vector<1x256xf32>
    %763 = vector.broadcast %761 : f32 to vector<1x256xf32>
    %764 = arith.mulf %763, %762 : vector<1x256xf32>
    %765 = arith.addf %760, %764 : vector<1x256xf32>
    %c1_i32_165 = arith.constant 1 : i32
    %766 = vector.broadcast %c1_i32_165 : i32 to vector<2x256xi32>
    %767 = arith.addi %28, %766 : vector<2x256xi32>
    %c0_i32_166 = arith.constant 0 : i32
    %768 = vector.broadcast %c0_i32_166 : i32 to vector<2x256xi32>
    %769 = arith.cmpi sge, %767, %768 : vector<2x256xi32>
    %c1_i32_167 = arith.constant 1 : i32
    %770 = vector.broadcast %c1_i32_167 : i32 to vector<2x256xi32>
    %771 = arith.addi %28, %770 : vector<2x256xi32>
    %c16_i32_168 = arith.constant 16 : i32
    %772 = vector.broadcast %c16_i32_168 : i32 to vector<2x256xi32>
    %773 = arith.cmpi slt, %771, %772 : vector<2x256xi32>
    %774 = arith.andi %769, %773 : vector<2x256xi1>
    %c-3_i32_169 = arith.constant -3 : i32
    %775 = vector.broadcast %c-3_i32_169 : i32 to vector<2x256xi32>
    %776 = arith.addi %31, %775 : vector<2x256xi32>
    %c0_i32_170 = arith.constant 0 : i32
    %777 = vector.broadcast %c0_i32_170 : i32 to vector<2x256xi32>
    %778 = arith.cmpi sge, %776, %777 : vector<2x256xi32>
    %c-3_i32_171 = arith.constant -3 : i32
    %779 = vector.broadcast %c-3_i32_171 : i32 to vector<2x256xi32>
    %780 = arith.addi %31, %779 : vector<2x256xi32>
    %c16_i32_172 = arith.constant 16 : i32
    %781 = vector.broadcast %c16_i32_172 : i32 to vector<2x256xi32>
    %782 = arith.cmpi slt, %780, %781 : vector<2x256xi32>
    %783 = arith.andi %778, %782 : vector<2x256xi1>
    %784 = arith.andi %774, %783 : vector<2x256xi1>
    %785 = vector.extract_strided_slice %21 {offsets = [0, 13], sizes = [2, 243], strides = [1, 1]} : vector<2x256xf32> to vector<2x243xf32>
    %786 = vector.extract_strided_slice %21 {offsets = [0, 0], sizes = [2, 13], strides = [1, 1]} : vector<2x256xf32> to vector<2x13xf32>
    %787 = tpu.concatenate %785, %786 in 1 : vector<2x243xf32>, vector<2x13xf32> -> vector<2x256xf32>
    %cst_173 = arith.constant 0.000000e+00 : f32
    %788 = vector.broadcast %cst_173 : f32 to vector<2x256xf32>
    %789 = arith.select %784, %787, %788 : vector<2x256xi1>, vector<2x256xf32>
    %c28 = arith.constant 28 : index
    %790 = memref.load %arg3[%c28] : memref<98xf32, #tpu.memory_space<smem>>
    %791 = vector.extract_strided_slice %789 {offsets = [0, 0], sizes = [1, 256], strides = [1, 1]} : vector<2x256xf32> to vector<1x256xf32>
    %792 = vector.broadcast %790 : f32 to vector<1x256xf32>
    %793 = arith.mulf %792, %791 : vector<1x256xf32>
    %794 = arith.addf %765, %793 : vector<1x256xf32>
    %c77 = arith.constant 77 : index
    %795 = memref.load %arg3[%c77] : memref<98xf32, #tpu.memory_space<smem>>
    %796 = vector.extract_strided_slice %789 {offsets = [1, 0], sizes = [1, 256], strides = [1, 1]} : vector<2x256xf32> to vector<1x256xf32>
    %797 = vector.broadcast %795 : f32 to vector<1x256xf32>
    %798 = arith.mulf %797, %796 : vector<1x256xf32>
    %799 = arith.addf %794, %798 : vector<1x256xf32>
    %c-2_i32_174 = arith.constant -2 : i32
    %800 = vector.broadcast %c-2_i32_174 : i32 to vector<2x256xi32>
    %801 = arith.addi %31, %800 : vector<2x256xi32>
    %c0_i32_175 = arith.constant 0 : i32
    %802 = vector.broadcast %c0_i32_175 : i32 to vector<2x256xi32>
    %803 = arith.cmpi sge, %801, %802 : vector<2x256xi32>
    %c-2_i32_176 = arith.constant -2 : i32
    %804 = vector.broadcast %c-2_i32_176 : i32 to vector<2x256xi32>
    %805 = arith.addi %31, %804 : vector<2x256xi32>
    %c16_i32_177 = arith.constant 16 : i32
    %806 = vector.broadcast %c16_i32_177 : i32 to vector<2x256xi32>
    %807 = arith.cmpi slt, %805, %806 : vector<2x256xi32>
    %808 = arith.andi %803, %807 : vector<2x256xi1>
    %809 = arith.andi %774, %808 : vector<2x256xi1>
    %810 = vector.extract_strided_slice %21 {offsets = [0, 14], sizes = [2, 242], strides = [1, 1]} : vector<2x256xf32> to vector<2x242xf32>
    %811 = vector.extract_strided_slice %21 {offsets = [0, 0], sizes = [2, 14], strides = [1, 1]} : vector<2x256xf32> to vector<2x14xf32>
    %812 = tpu.concatenate %810, %811 in 1 : vector<2x242xf32>, vector<2x14xf32> -> vector<2x256xf32>
    %cst_178 = arith.constant 0.000000e+00 : f32
    %813 = vector.broadcast %cst_178 : f32 to vector<2x256xf32>
    %814 = arith.select %809, %812, %813 : vector<2x256xi1>, vector<2x256xf32>
    %c29 = arith.constant 29 : index
    %815 = memref.load %arg3[%c29] : memref<98xf32, #tpu.memory_space<smem>>
    %816 = vector.extract_strided_slice %814 {offsets = [0, 0], sizes = [1, 256], strides = [1, 1]} : vector<2x256xf32> to vector<1x256xf32>
    %817 = vector.broadcast %815 : f32 to vector<1x256xf32>
    %818 = arith.mulf %817, %816 : vector<1x256xf32>
    %819 = arith.addf %799, %818 : vector<1x256xf32>
    %c78 = arith.constant 78 : index
    %820 = memref.load %arg3[%c78] : memref<98xf32, #tpu.memory_space<smem>>
    %821 = vector.extract_strided_slice %814 {offsets = [1, 0], sizes = [1, 256], strides = [1, 1]} : vector<2x256xf32> to vector<1x256xf32>
    %822 = vector.broadcast %820 : f32 to vector<1x256xf32>
    %823 = arith.mulf %822, %821 : vector<1x256xf32>
    %824 = arith.addf %819, %823 : vector<1x256xf32>
    %c-1_i32_179 = arith.constant -1 : i32
    %825 = vector.broadcast %c-1_i32_179 : i32 to vector<2x256xi32>
    %826 = arith.addi %31, %825 : vector<2x256xi32>
    %c0_i32_180 = arith.constant 0 : i32
    %827 = vector.broadcast %c0_i32_180 : i32 to vector<2x256xi32>
    %828 = arith.cmpi sge, %826, %827 : vector<2x256xi32>
    %c-1_i32_181 = arith.constant -1 : i32
    %829 = vector.broadcast %c-1_i32_181 : i32 to vector<2x256xi32>
    %830 = arith.addi %31, %829 : vector<2x256xi32>
    %c16_i32_182 = arith.constant 16 : i32
    %831 = vector.broadcast %c16_i32_182 : i32 to vector<2x256xi32>
    %832 = arith.cmpi slt, %830, %831 : vector<2x256xi32>
    %833 = arith.andi %828, %832 : vector<2x256xi1>
    %834 = arith.andi %774, %833 : vector<2x256xi1>
    %835 = vector.extract_strided_slice %21 {offsets = [0, 15], sizes = [2, 241], strides = [1, 1]} : vector<2x256xf32> to vector<2x241xf32>
    %836 = vector.extract_strided_slice %21 {offsets = [0, 0], sizes = [2, 15], strides = [1, 1]} : vector<2x256xf32> to vector<2x15xf32>
    %837 = tpu.concatenate %835, %836 in 1 : vector<2x241xf32>, vector<2x15xf32> -> vector<2x256xf32>
    %cst_183 = arith.constant 0.000000e+00 : f32
    %838 = vector.broadcast %cst_183 : f32 to vector<2x256xf32>
    %839 = arith.select %834, %837, %838 : vector<2x256xi1>, vector<2x256xf32>
    %c30 = arith.constant 30 : index
    %840 = memref.load %arg3[%c30] : memref<98xf32, #tpu.memory_space<smem>>
    %841 = vector.extract_strided_slice %839 {offsets = [0, 0], sizes = [1, 256], strides = [1, 1]} : vector<2x256xf32> to vector<1x256xf32>
    %842 = vector.broadcast %840 : f32 to vector<1x256xf32>
    %843 = arith.mulf %842, %841 : vector<1x256xf32>
    %844 = arith.addf %824, %843 : vector<1x256xf32>
    %c79 = arith.constant 79 : index
    %845 = memref.load %arg3[%c79] : memref<98xf32, #tpu.memory_space<smem>>
    %846 = vector.extract_strided_slice %839 {offsets = [1, 0], sizes = [1, 256], strides = [1, 1]} : vector<2x256xf32> to vector<1x256xf32>
    %847 = vector.broadcast %845 : f32 to vector<1x256xf32>
    %848 = arith.mulf %847, %846 : vector<1x256xf32>
    %849 = arith.addf %844, %848 : vector<1x256xf32>
    %c0_i32_184 = arith.constant 0 : i32
    %850 = vector.broadcast %c0_i32_184 : i32 to vector<2x256xi32>
    %851 = arith.addi %31, %850 : vector<2x256xi32>
    %c0_i32_185 = arith.constant 0 : i32
    %852 = vector.broadcast %c0_i32_185 : i32 to vector<2x256xi32>
    %853 = arith.cmpi sge, %851, %852 : vector<2x256xi32>
    %c0_i32_186 = arith.constant 0 : i32
    %854 = vector.broadcast %c0_i32_186 : i32 to vector<2x256xi32>
    %855 = arith.addi %31, %854 : vector<2x256xi32>
    %c16_i32_187 = arith.constant 16 : i32
    %856 = vector.broadcast %c16_i32_187 : i32 to vector<2x256xi32>
    %857 = arith.cmpi slt, %855, %856 : vector<2x256xi32>
    %858 = arith.andi %853, %857 : vector<2x256xi1>
    %859 = arith.andi %774, %858 : vector<2x256xi1>
    %860 = vector.extract_strided_slice %21 {offsets = [0, 16], sizes = [2, 240], strides = [1, 1]} : vector<2x256xf32> to vector<2x240xf32>
    %861 = vector.extract_strided_slice %21 {offsets = [0, 0], sizes = [2, 16], strides = [1, 1]} : vector<2x256xf32> to vector<2x16xf32>
    %862 = tpu.concatenate %860, %861 in 1 : vector<2x240xf32>, vector<2x16xf32> -> vector<2x256xf32>
    %cst_188 = arith.constant 0.000000e+00 : f32
    %863 = vector.broadcast %cst_188 : f32 to vector<2x256xf32>
    %864 = arith.select %859, %862, %863 : vector<2x256xi1>, vector<2x256xf32>
    %c31 = arith.constant 31 : index
    %865 = memref.load %arg3[%c31] : memref<98xf32, #tpu.memory_space<smem>>
    %866 = vector.extract_strided_slice %864 {offsets = [0, 0], sizes = [1, 256], strides = [1, 1]} : vector<2x256xf32> to vector<1x256xf32>
    %867 = vector.broadcast %865 : f32 to vector<1x256xf32>
    %868 = arith.mulf %867, %866 : vector<1x256xf32>
    %869 = arith.addf %849, %868 : vector<1x256xf32>
    %c80 = arith.constant 80 : index
    %870 = memref.load %arg3[%c80] : memref<98xf32, #tpu.memory_space<smem>>
    %871 = vector.extract_strided_slice %864 {offsets = [1, 0], sizes = [1, 256], strides = [1, 1]} : vector<2x256xf32> to vector<1x256xf32>
    %872 = vector.broadcast %870 : f32 to vector<1x256xf32>
    %873 = arith.mulf %872, %871 : vector<1x256xf32>
    %874 = arith.addf %869, %873 : vector<1x256xf32>
    %c1_i32_189 = arith.constant 1 : i32
    %875 = vector.broadcast %c1_i32_189 : i32 to vector<2x256xi32>
    %876 = arith.addi %31, %875 : vector<2x256xi32>
    %c0_i32_190 = arith.constant 0 : i32
    %877 = vector.broadcast %c0_i32_190 : i32 to vector<2x256xi32>
    %878 = arith.cmpi sge, %876, %877 : vector<2x256xi32>
    %c1_i32_191 = arith.constant 1 : i32
    %879 = vector.broadcast %c1_i32_191 : i32 to vector<2x256xi32>
    %880 = arith.addi %31, %879 : vector<2x256xi32>
    %c16_i32_192 = arith.constant 16 : i32
    %881 = vector.broadcast %c16_i32_192 : i32 to vector<2x256xi32>
    %882 = arith.cmpi slt, %880, %881 : vector<2x256xi32>
    %883 = arith.andi %878, %882 : vector<2x256xi1>
    %884 = arith.andi %774, %883 : vector<2x256xi1>
    %885 = vector.extract_strided_slice %21 {offsets = [0, 17], sizes = [2, 239], strides = [1, 1]} : vector<2x256xf32> to vector<2x239xf32>
    %886 = vector.extract_strided_slice %21 {offsets = [0, 0], sizes = [2, 17], strides = [1, 1]} : vector<2x256xf32> to vector<2x17xf32>
    %887 = tpu.concatenate %885, %886 in 1 : vector<2x239xf32>, vector<2x17xf32> -> vector<2x256xf32>
    %cst_193 = arith.constant 0.000000e+00 : f32
    %888 = vector.broadcast %cst_193 : f32 to vector<2x256xf32>
    %889 = arith.select %884, %887, %888 : vector<2x256xi1>, vector<2x256xf32>
    %c32 = arith.constant 32 : index
    %890 = memref.load %arg3[%c32] : memref<98xf32, #tpu.memory_space<smem>>
    %891 = vector.extract_strided_slice %889 {offsets = [0, 0], sizes = [1, 256], strides = [1, 1]} : vector<2x256xf32> to vector<1x256xf32>
    %892 = vector.broadcast %890 : f32 to vector<1x256xf32>
    %893 = arith.mulf %892, %891 : vector<1x256xf32>
    %894 = arith.addf %874, %893 : vector<1x256xf32>
    %c81 = arith.constant 81 : index
    %895 = memref.load %arg3[%c81] : memref<98xf32, #tpu.memory_space<smem>>
    %896 = vector.extract_strided_slice %889 {offsets = [1, 0], sizes = [1, 256], strides = [1, 1]} : vector<2x256xf32> to vector<1x256xf32>
    %897 = vector.broadcast %895 : f32 to vector<1x256xf32>
    %898 = arith.mulf %897, %896 : vector<1x256xf32>
    %899 = arith.addf %894, %898 : vector<1x256xf32>
    %c2_i32_194 = arith.constant 2 : i32
    %900 = vector.broadcast %c2_i32_194 : i32 to vector<2x256xi32>
    %901 = arith.addi %31, %900 : vector<2x256xi32>
    %c0_i32_195 = arith.constant 0 : i32
    %902 = vector.broadcast %c0_i32_195 : i32 to vector<2x256xi32>
    %903 = arith.cmpi sge, %901, %902 : vector<2x256xi32>
    %c2_i32_196 = arith.constant 2 : i32
    %904 = vector.broadcast %c2_i32_196 : i32 to vector<2x256xi32>
    %905 = arith.addi %31, %904 : vector<2x256xi32>
    %c16_i32_197 = arith.constant 16 : i32
    %906 = vector.broadcast %c16_i32_197 : i32 to vector<2x256xi32>
    %907 = arith.cmpi slt, %905, %906 : vector<2x256xi32>
    %908 = arith.andi %903, %907 : vector<2x256xi1>
    %909 = arith.andi %774, %908 : vector<2x256xi1>
    %910 = vector.extract_strided_slice %21 {offsets = [0, 18], sizes = [2, 238], strides = [1, 1]} : vector<2x256xf32> to vector<2x238xf32>
    %911 = vector.extract_strided_slice %21 {offsets = [0, 0], sizes = [2, 18], strides = [1, 1]} : vector<2x256xf32> to vector<2x18xf32>
    %912 = tpu.concatenate %910, %911 in 1 : vector<2x238xf32>, vector<2x18xf32> -> vector<2x256xf32>
    %cst_198 = arith.constant 0.000000e+00 : f32
    %913 = vector.broadcast %cst_198 : f32 to vector<2x256xf32>
    %914 = arith.select %909, %912, %913 : vector<2x256xi1>, vector<2x256xf32>
    %c33 = arith.constant 33 : index
    %915 = memref.load %arg3[%c33] : memref<98xf32, #tpu.memory_space<smem>>
    %916 = vector.extract_strided_slice %914 {offsets = [0, 0], sizes = [1, 256], strides = [1, 1]} : vector<2x256xf32> to vector<1x256xf32>
    %917 = vector.broadcast %915 : f32 to vector<1x256xf32>
    %918 = arith.mulf %917, %916 : vector<1x256xf32>
    %919 = arith.addf %899, %918 : vector<1x256xf32>
    %c82 = arith.constant 82 : index
    %920 = memref.load %arg3[%c82] : memref<98xf32, #tpu.memory_space<smem>>
    %921 = vector.extract_strided_slice %914 {offsets = [1, 0], sizes = [1, 256], strides = [1, 1]} : vector<2x256xf32> to vector<1x256xf32>
    %922 = vector.broadcast %920 : f32 to vector<1x256xf32>
    %923 = arith.mulf %922, %921 : vector<1x256xf32>
    %924 = arith.addf %919, %923 : vector<1x256xf32>
    %c3_i32_199 = arith.constant 3 : i32
    %925 = vector.broadcast %c3_i32_199 : i32 to vector<2x256xi32>
    %926 = arith.addi %31, %925 : vector<2x256xi32>
    %c0_i32_200 = arith.constant 0 : i32
    %927 = vector.broadcast %c0_i32_200 : i32 to vector<2x256xi32>
    %928 = arith.cmpi sge, %926, %927 : vector<2x256xi32>
    %c3_i32_201 = arith.constant 3 : i32
    %929 = vector.broadcast %c3_i32_201 : i32 to vector<2x256xi32>
    %930 = arith.addi %31, %929 : vector<2x256xi32>
    %c16_i32_202 = arith.constant 16 : i32
    %931 = vector.broadcast %c16_i32_202 : i32 to vector<2x256xi32>
    %932 = arith.cmpi slt, %930, %931 : vector<2x256xi32>
    %933 = arith.andi %928, %932 : vector<2x256xi1>
    %934 = arith.andi %774, %933 : vector<2x256xi1>
    %935 = vector.extract_strided_slice %21 {offsets = [0, 19], sizes = [2, 237], strides = [1, 1]} : vector<2x256xf32> to vector<2x237xf32>
    %936 = vector.extract_strided_slice %21 {offsets = [0, 0], sizes = [2, 19], strides = [1, 1]} : vector<2x256xf32> to vector<2x19xf32>
    %937 = tpu.concatenate %935, %936 in 1 : vector<2x237xf32>, vector<2x19xf32> -> vector<2x256xf32>
    %cst_203 = arith.constant 0.000000e+00 : f32
    %938 = vector.broadcast %cst_203 : f32 to vector<2x256xf32>
    %939 = arith.select %934, %937, %938 : vector<2x256xi1>, vector<2x256xf32>
    %c34 = arith.constant 34 : index
    %940 = memref.load %arg3[%c34] : memref<98xf32, #tpu.memory_space<smem>>
    %941 = vector.extract_strided_slice %939 {offsets = [0, 0], sizes = [1, 256], strides = [1, 1]} : vector<2x256xf32> to vector<1x256xf32>
    %942 = vector.broadcast %940 : f32 to vector<1x256xf32>
    %943 = arith.mulf %942, %941 : vector<1x256xf32>
    %944 = arith.addf %924, %943 : vector<1x256xf32>
    %c83 = arith.constant 83 : index
    %945 = memref.load %arg3[%c83] : memref<98xf32, #tpu.memory_space<smem>>
    %946 = vector.extract_strided_slice %939 {offsets = [1, 0], sizes = [1, 256], strides = [1, 1]} : vector<2x256xf32> to vector<1x256xf32>
    %947 = vector.broadcast %945 : f32 to vector<1x256xf32>
    %948 = arith.mulf %947, %946 : vector<1x256xf32>
    %949 = arith.addf %944, %948 : vector<1x256xf32>
    %c2_i32_204 = arith.constant 2 : i32
    %950 = vector.broadcast %c2_i32_204 : i32 to vector<2x256xi32>
    %951 = arith.addi %28, %950 : vector<2x256xi32>
    %c0_i32_205 = arith.constant 0 : i32
    %952 = vector.broadcast %c0_i32_205 : i32 to vector<2x256xi32>
    %953 = arith.cmpi sge, %951, %952 : vector<2x256xi32>
    %c2_i32_206 = arith.constant 2 : i32
    %954 = vector.broadcast %c2_i32_206 : i32 to vector<2x256xi32>
    %955 = arith.addi %28, %954 : vector<2x256xi32>
    %c16_i32_207 = arith.constant 16 : i32
    %956 = vector.broadcast %c16_i32_207 : i32 to vector<2x256xi32>
    %957 = arith.cmpi slt, %955, %956 : vector<2x256xi32>
    %958 = arith.andi %953, %957 : vector<2x256xi1>
    %c-3_i32_208 = arith.constant -3 : i32
    %959 = vector.broadcast %c-3_i32_208 : i32 to vector<2x256xi32>
    %960 = arith.addi %31, %959 : vector<2x256xi32>
    %c0_i32_209 = arith.constant 0 : i32
    %961 = vector.broadcast %c0_i32_209 : i32 to vector<2x256xi32>
    %962 = arith.cmpi sge, %960, %961 : vector<2x256xi32>
    %c-3_i32_210 = arith.constant -3 : i32
    %963 = vector.broadcast %c-3_i32_210 : i32 to vector<2x256xi32>
    %964 = arith.addi %31, %963 : vector<2x256xi32>
    %c16_i32_211 = arith.constant 16 : i32
    %965 = vector.broadcast %c16_i32_211 : i32 to vector<2x256xi32>
    %966 = arith.cmpi slt, %964, %965 : vector<2x256xi32>
    %967 = arith.andi %962, %966 : vector<2x256xi1>
    %968 = arith.andi %958, %967 : vector<2x256xi1>
    %969 = vector.extract_strided_slice %21 {offsets = [0, 29], sizes = [2, 227], strides = [1, 1]} : vector<2x256xf32> to vector<2x227xf32>
    %970 = vector.extract_strided_slice %21 {offsets = [0, 0], sizes = [2, 29], strides = [1, 1]} : vector<2x256xf32> to vector<2x29xf32>
    %971 = tpu.concatenate %969, %970 in 1 : vector<2x227xf32>, vector<2x29xf32> -> vector<2x256xf32>
    %cst_212 = arith.constant 0.000000e+00 : f32
    %972 = vector.broadcast %cst_212 : f32 to vector<2x256xf32>
    %973 = arith.select %968, %971, %972 : vector<2x256xi1>, vector<2x256xf32>
    %c35 = arith.constant 35 : index
    %974 = memref.load %arg3[%c35] : memref<98xf32, #tpu.memory_space<smem>>
    %975 = vector.extract_strided_slice %973 {offsets = [0, 0], sizes = [1, 256], strides = [1, 1]} : vector<2x256xf32> to vector<1x256xf32>
    %976 = vector.broadcast %974 : f32 to vector<1x256xf32>
    %977 = arith.mulf %976, %975 : vector<1x256xf32>
    %978 = arith.addf %949, %977 : vector<1x256xf32>
    %c84 = arith.constant 84 : index
    %979 = memref.load %arg3[%c84] : memref<98xf32, #tpu.memory_space<smem>>
    %980 = vector.extract_strided_slice %973 {offsets = [1, 0], sizes = [1, 256], strides = [1, 1]} : vector<2x256xf32> to vector<1x256xf32>
    %981 = vector.broadcast %979 : f32 to vector<1x256xf32>
    %982 = arith.mulf %981, %980 : vector<1x256xf32>
    %983 = arith.addf %978, %982 : vector<1x256xf32>
    %c-2_i32_213 = arith.constant -2 : i32
    %984 = vector.broadcast %c-2_i32_213 : i32 to vector<2x256xi32>
    %985 = arith.addi %31, %984 : vector<2x256xi32>
    %c0_i32_214 = arith.constant 0 : i32
    %986 = vector.broadcast %c0_i32_214 : i32 to vector<2x256xi32>
    %987 = arith.cmpi sge, %985, %986 : vector<2x256xi32>
    %c-2_i32_215 = arith.constant -2 : i32
    %988 = vector.broadcast %c-2_i32_215 : i32 to vector<2x256xi32>
    %989 = arith.addi %31, %988 : vector<2x256xi32>
    %c16_i32_216 = arith.constant 16 : i32
    %990 = vector.broadcast %c16_i32_216 : i32 to vector<2x256xi32>
    %991 = arith.cmpi slt, %989, %990 : vector<2x256xi32>
    %992 = arith.andi %987, %991 : vector<2x256xi1>
    %993 = arith.andi %958, %992 : vector<2x256xi1>
    %994 = vector.extract_strided_slice %21 {offsets = [0, 30], sizes = [2, 226], strides = [1, 1]} : vector<2x256xf32> to vector<2x226xf32>
    %995 = vector.extract_strided_slice %21 {offsets = [0, 0], sizes = [2, 30], strides = [1, 1]} : vector<2x256xf32> to vector<2x30xf32>
    %996 = tpu.concatenate %994, %995 in 1 : vector<2x226xf32>, vector<2x30xf32> -> vector<2x256xf32>
    %cst_217 = arith.constant 0.000000e+00 : f32
    %997 = vector.broadcast %cst_217 : f32 to vector<2x256xf32>
    %998 = arith.select %993, %996, %997 : vector<2x256xi1>, vector<2x256xf32>
    %c36 = arith.constant 36 : index
    %999 = memref.load %arg3[%c36] : memref<98xf32, #tpu.memory_space<smem>>
    %1000 = vector.extract_strided_slice %998 {offsets = [0, 0], sizes = [1, 256], strides = [1, 1]} : vector<2x256xf32> to vector<1x256xf32>
    %1001 = vector.broadcast %999 : f32 to vector<1x256xf32>
    %1002 = arith.mulf %1001, %1000 : vector<1x256xf32>
    %1003 = arith.addf %983, %1002 : vector<1x256xf32>
    %c85 = arith.constant 85 : index
    %1004 = memref.load %arg3[%c85] : memref<98xf32, #tpu.memory_space<smem>>
    %1005 = vector.extract_strided_slice %998 {offsets = [1, 0], sizes = [1, 256], strides = [1, 1]} : vector<2x256xf32> to vector<1x256xf32>
    %1006 = vector.broadcast %1004 : f32 to vector<1x256xf32>
    %1007 = arith.mulf %1006, %1005 : vector<1x256xf32>
    %1008 = arith.addf %1003, %1007 : vector<1x256xf32>
    %c-1_i32_218 = arith.constant -1 : i32
    %1009 = vector.broadcast %c-1_i32_218 : i32 to vector<2x256xi32>
    %1010 = arith.addi %31, %1009 : vector<2x256xi32>
    %c0_i32_219 = arith.constant 0 : i32
    %1011 = vector.broadcast %c0_i32_219 : i32 to vector<2x256xi32>
    %1012 = arith.cmpi sge, %1010, %1011 : vector<2x256xi32>
    %c-1_i32_220 = arith.constant -1 : i32
    %1013 = vector.broadcast %c-1_i32_220 : i32 to vector<2x256xi32>
    %1014 = arith.addi %31, %1013 : vector<2x256xi32>
    %c16_i32_221 = arith.constant 16 : i32
    %1015 = vector.broadcast %c16_i32_221 : i32 to vector<2x256xi32>
    %1016 = arith.cmpi slt, %1014, %1015 : vector<2x256xi32>
    %1017 = arith.andi %1012, %1016 : vector<2x256xi1>
    %1018 = arith.andi %958, %1017 : vector<2x256xi1>
    %1019 = vector.extract_strided_slice %21 {offsets = [0, 31], sizes = [2, 225], strides = [1, 1]} : vector<2x256xf32> to vector<2x225xf32>
    %1020 = vector.extract_strided_slice %21 {offsets = [0, 0], sizes = [2, 31], strides = [1, 1]} : vector<2x256xf32> to vector<2x31xf32>
    %1021 = tpu.concatenate %1019, %1020 in 1 : vector<2x225xf32>, vector<2x31xf32> -> vector<2x256xf32>
    %cst_222 = arith.constant 0.000000e+00 : f32
    %1022 = vector.broadcast %cst_222 : f32 to vector<2x256xf32>
    %1023 = arith.select %1018, %1021, %1022 : vector<2x256xi1>, vector<2x256xf32>
    %c37 = arith.constant 37 : index
    %1024 = memref.load %arg3[%c37] : memref<98xf32, #tpu.memory_space<smem>>
    %1025 = vector.extract_strided_slice %1023 {offsets = [0, 0], sizes = [1, 256], strides = [1, 1]} : vector<2x256xf32> to vector<1x256xf32>
    %1026 = vector.broadcast %1024 : f32 to vector<1x256xf32>
    %1027 = arith.mulf %1026, %1025 : vector<1x256xf32>
    %1028 = arith.addf %1008, %1027 : vector<1x256xf32>
    %c86 = arith.constant 86 : index
    %1029 = memref.load %arg3[%c86] : memref<98xf32, #tpu.memory_space<smem>>
    %1030 = vector.extract_strided_slice %1023 {offsets = [1, 0], sizes = [1, 256], strides = [1, 1]} : vector<2x256xf32> to vector<1x256xf32>
    %1031 = vector.broadcast %1029 : f32 to vector<1x256xf32>
    %1032 = arith.mulf %1031, %1030 : vector<1x256xf32>
    %1033 = arith.addf %1028, %1032 : vector<1x256xf32>
    %c0_i32_223 = arith.constant 0 : i32
    %1034 = vector.broadcast %c0_i32_223 : i32 to vector<2x256xi32>
    %1035 = arith.addi %31, %1034 : vector<2x256xi32>
    %c0_i32_224 = arith.constant 0 : i32
    %1036 = vector.broadcast %c0_i32_224 : i32 to vector<2x256xi32>
    %1037 = arith.cmpi sge, %1035, %1036 : vector<2x256xi32>
    %c0_i32_225 = arith.constant 0 : i32
    %1038 = vector.broadcast %c0_i32_225 : i32 to vector<2x256xi32>
    %1039 = arith.addi %31, %1038 : vector<2x256xi32>
    %c16_i32_226 = arith.constant 16 : i32
    %1040 = vector.broadcast %c16_i32_226 : i32 to vector<2x256xi32>
    %1041 = arith.cmpi slt, %1039, %1040 : vector<2x256xi32>
    %1042 = arith.andi %1037, %1041 : vector<2x256xi1>
    %1043 = arith.andi %958, %1042 : vector<2x256xi1>
    %1044 = vector.extract_strided_slice %21 {offsets = [0, 32], sizes = [2, 224], strides = [1, 1]} : vector<2x256xf32> to vector<2x224xf32>
    %1045 = vector.extract_strided_slice %21 {offsets = [0, 0], sizes = [2, 32], strides = [1, 1]} : vector<2x256xf32> to vector<2x32xf32>
    %1046 = tpu.concatenate %1044, %1045 in 1 : vector<2x224xf32>, vector<2x32xf32> -> vector<2x256xf32>
    %cst_227 = arith.constant 0.000000e+00 : f32
    %1047 = vector.broadcast %cst_227 : f32 to vector<2x256xf32>
    %1048 = arith.select %1043, %1046, %1047 : vector<2x256xi1>, vector<2x256xf32>
    %c38 = arith.constant 38 : index
    %1049 = memref.load %arg3[%c38] : memref<98xf32, #tpu.memory_space<smem>>
    %1050 = vector.extract_strided_slice %1048 {offsets = [0, 0], sizes = [1, 256], strides = [1, 1]} : vector<2x256xf32> to vector<1x256xf32>
    %1051 = vector.broadcast %1049 : f32 to vector<1x256xf32>
    %1052 = arith.mulf %1051, %1050 : vector<1x256xf32>
    %1053 = arith.addf %1033, %1052 : vector<1x256xf32>
    %c87 = arith.constant 87 : index
    %1054 = memref.load %arg3[%c87] : memref<98xf32, #tpu.memory_space<smem>>
    %1055 = vector.extract_strided_slice %1048 {offsets = [1, 0], sizes = [1, 256], strides = [1, 1]} : vector<2x256xf32> to vector<1x256xf32>
    %1056 = vector.broadcast %1054 : f32 to vector<1x256xf32>
    %1057 = arith.mulf %1056, %1055 : vector<1x256xf32>
    %1058 = arith.addf %1053, %1057 : vector<1x256xf32>
    %c1_i32_228 = arith.constant 1 : i32
    %1059 = vector.broadcast %c1_i32_228 : i32 to vector<2x256xi32>
    %1060 = arith.addi %31, %1059 : vector<2x256xi32>
    %c0_i32_229 = arith.constant 0 : i32
    %1061 = vector.broadcast %c0_i32_229 : i32 to vector<2x256xi32>
    %1062 = arith.cmpi sge, %1060, %1061 : vector<2x256xi32>
    %c1_i32_230 = arith.constant 1 : i32
    %1063 = vector.broadcast %c1_i32_230 : i32 to vector<2x256xi32>
    %1064 = arith.addi %31, %1063 : vector<2x256xi32>
    %c16_i32_231 = arith.constant 16 : i32
    %1065 = vector.broadcast %c16_i32_231 : i32 to vector<2x256xi32>
    %1066 = arith.cmpi slt, %1064, %1065 : vector<2x256xi32>
    %1067 = arith.andi %1062, %1066 : vector<2x256xi1>
    %1068 = arith.andi %958, %1067 : vector<2x256xi1>
    %1069 = vector.extract_strided_slice %21 {offsets = [0, 33], sizes = [2, 223], strides = [1, 1]} : vector<2x256xf32> to vector<2x223xf32>
    %1070 = vector.extract_strided_slice %21 {offsets = [0, 0], sizes = [2, 33], strides = [1, 1]} : vector<2x256xf32> to vector<2x33xf32>
    %1071 = tpu.concatenate %1069, %1070 in 1 : vector<2x223xf32>, vector<2x33xf32> -> vector<2x256xf32>
    %cst_232 = arith.constant 0.000000e+00 : f32
    %1072 = vector.broadcast %cst_232 : f32 to vector<2x256xf32>
    %1073 = arith.select %1068, %1071, %1072 : vector<2x256xi1>, vector<2x256xf32>
    %c39 = arith.constant 39 : index
    %1074 = memref.load %arg3[%c39] : memref<98xf32, #tpu.memory_space<smem>>
    %1075 = vector.extract_strided_slice %1073 {offsets = [0, 0], sizes = [1, 256], strides = [1, 1]} : vector<2x256xf32> to vector<1x256xf32>
    %1076 = vector.broadcast %1074 : f32 to vector<1x256xf32>
    %1077 = arith.mulf %1076, %1075 : vector<1x256xf32>
    %1078 = arith.addf %1058, %1077 : vector<1x256xf32>
    %c88 = arith.constant 88 : index
    %1079 = memref.load %arg3[%c88] : memref<98xf32, #tpu.memory_space<smem>>
    %1080 = vector.extract_strided_slice %1073 {offsets = [1, 0], sizes = [1, 256], strides = [1, 1]} : vector<2x256xf32> to vector<1x256xf32>
    %1081 = vector.broadcast %1079 : f32 to vector<1x256xf32>
    %1082 = arith.mulf %1081, %1080 : vector<1x256xf32>
    %1083 = arith.addf %1078, %1082 : vector<1x256xf32>
    %c2_i32_233 = arith.constant 2 : i32
    %1084 = vector.broadcast %c2_i32_233 : i32 to vector<2x256xi32>
    %1085 = arith.addi %31, %1084 : vector<2x256xi32>
    %c0_i32_234 = arith.constant 0 : i32
    %1086 = vector.broadcast %c0_i32_234 : i32 to vector<2x256xi32>
    %1087 = arith.cmpi sge, %1085, %1086 : vector<2x256xi32>
    %c2_i32_235 = arith.constant 2 : i32
    %1088 = vector.broadcast %c2_i32_235 : i32 to vector<2x256xi32>
    %1089 = arith.addi %31, %1088 : vector<2x256xi32>
    %c16_i32_236 = arith.constant 16 : i32
    %1090 = vector.broadcast %c16_i32_236 : i32 to vector<2x256xi32>
    %1091 = arith.cmpi slt, %1089, %1090 : vector<2x256xi32>
    %1092 = arith.andi %1087, %1091 : vector<2x256xi1>
    %1093 = arith.andi %958, %1092 : vector<2x256xi1>
    %1094 = vector.extract_strided_slice %21 {offsets = [0, 34], sizes = [2, 222], strides = [1, 1]} : vector<2x256xf32> to vector<2x222xf32>
    %1095 = vector.extract_strided_slice %21 {offsets = [0, 0], sizes = [2, 34], strides = [1, 1]} : vector<2x256xf32> to vector<2x34xf32>
    %1096 = tpu.concatenate %1094, %1095 in 1 : vector<2x222xf32>, vector<2x34xf32> -> vector<2x256xf32>
    %cst_237 = arith.constant 0.000000e+00 : f32
    %1097 = vector.broadcast %cst_237 : f32 to vector<2x256xf32>
    %1098 = arith.select %1093, %1096, %1097 : vector<2x256xi1>, vector<2x256xf32>
    %c40 = arith.constant 40 : index
    %1099 = memref.load %arg3[%c40] : memref<98xf32, #tpu.memory_space<smem>>
    %1100 = vector.extract_strided_slice %1098 {offsets = [0, 0], sizes = [1, 256], strides = [1, 1]} : vector<2x256xf32> to vector<1x256xf32>
    %1101 = vector.broadcast %1099 : f32 to vector<1x256xf32>
    %1102 = arith.mulf %1101, %1100 : vector<1x256xf32>
    %1103 = arith.addf %1083, %1102 : vector<1x256xf32>
    %c89 = arith.constant 89 : index
    %1104 = memref.load %arg3[%c89] : memref<98xf32, #tpu.memory_space<smem>>
    %1105 = vector.extract_strided_slice %1098 {offsets = [1, 0], sizes = [1, 256], strides = [1, 1]} : vector<2x256xf32> to vector<1x256xf32>
    %1106 = vector.broadcast %1104 : f32 to vector<1x256xf32>
    %1107 = arith.mulf %1106, %1105 : vector<1x256xf32>
    %1108 = arith.addf %1103, %1107 : vector<1x256xf32>
    %c3_i32_238 = arith.constant 3 : i32
    %1109 = vector.broadcast %c3_i32_238 : i32 to vector<2x256xi32>
    %1110 = arith.addi %31, %1109 : vector<2x256xi32>
    %c0_i32_239 = arith.constant 0 : i32
    %1111 = vector.broadcast %c0_i32_239 : i32 to vector<2x256xi32>
    %1112 = arith.cmpi sge, %1110, %1111 : vector<2x256xi32>
    %c3_i32_240 = arith.constant 3 : i32
    %1113 = vector.broadcast %c3_i32_240 : i32 to vector<2x256xi32>
    %1114 = arith.addi %31, %1113 : vector<2x256xi32>
    %c16_i32_241 = arith.constant 16 : i32
    %1115 = vector.broadcast %c16_i32_241 : i32 to vector<2x256xi32>
    %1116 = arith.cmpi slt, %1114, %1115 : vector<2x256xi32>
    %1117 = arith.andi %1112, %1116 : vector<2x256xi1>
    %1118 = arith.andi %958, %1117 : vector<2x256xi1>
    %1119 = vector.extract_strided_slice %21 {offsets = [0, 35], sizes = [2, 221], strides = [1, 1]} : vector<2x256xf32> to vector<2x221xf32>
    %1120 = vector.extract_strided_slice %21 {offsets = [0, 0], sizes = [2, 35], strides = [1, 1]} : vector<2x256xf32> to vector<2x35xf32>
    %1121 = tpu.concatenate %1119, %1120 in 1 : vector<2x221xf32>, vector<2x35xf32> -> vector<2x256xf32>
    %cst_242 = arith.constant 0.000000e+00 : f32
    %1122 = vector.broadcast %cst_242 : f32 to vector<2x256xf32>
    %1123 = arith.select %1118, %1121, %1122 : vector<2x256xi1>, vector<2x256xf32>
    %c41 = arith.constant 41 : index
    %1124 = memref.load %arg3[%c41] : memref<98xf32, #tpu.memory_space<smem>>
    %1125 = vector.extract_strided_slice %1123 {offsets = [0, 0], sizes = [1, 256], strides = [1, 1]} : vector<2x256xf32> to vector<1x256xf32>
    %1126 = vector.broadcast %1124 : f32 to vector<1x256xf32>
    %1127 = arith.mulf %1126, %1125 : vector<1x256xf32>
    %1128 = arith.addf %1108, %1127 : vector<1x256xf32>
    %c90 = arith.constant 90 : index
    %1129 = memref.load %arg3[%c90] : memref<98xf32, #tpu.memory_space<smem>>
    %1130 = vector.extract_strided_slice %1123 {offsets = [1, 0], sizes = [1, 256], strides = [1, 1]} : vector<2x256xf32> to vector<1x256xf32>
    %1131 = vector.broadcast %1129 : f32 to vector<1x256xf32>
    %1132 = arith.mulf %1131, %1130 : vector<1x256xf32>
    %1133 = arith.addf %1128, %1132 : vector<1x256xf32>
    %c3_i32_243 = arith.constant 3 : i32
    %1134 = vector.broadcast %c3_i32_243 : i32 to vector<2x256xi32>
    %1135 = arith.addi %28, %1134 : vector<2x256xi32>
    %c0_i32_244 = arith.constant 0 : i32
    %1136 = vector.broadcast %c0_i32_244 : i32 to vector<2x256xi32>
    %1137 = arith.cmpi sge, %1135, %1136 : vector<2x256xi32>
    %c3_i32_245 = arith.constant 3 : i32
    %1138 = vector.broadcast %c3_i32_245 : i32 to vector<2x256xi32>
    %1139 = arith.addi %28, %1138 : vector<2x256xi32>
    %c16_i32_246 = arith.constant 16 : i32
    %1140 = vector.broadcast %c16_i32_246 : i32 to vector<2x256xi32>
    %1141 = arith.cmpi slt, %1139, %1140 : vector<2x256xi32>
    %1142 = arith.andi %1137, %1141 : vector<2x256xi1>
    %c-3_i32_247 = arith.constant -3 : i32
    %1143 = vector.broadcast %c-3_i32_247 : i32 to vector<2x256xi32>
    %1144 = arith.addi %31, %1143 : vector<2x256xi32>
    %c0_i32_248 = arith.constant 0 : i32
    %1145 = vector.broadcast %c0_i32_248 : i32 to vector<2x256xi32>
    %1146 = arith.cmpi sge, %1144, %1145 : vector<2x256xi32>
    %c-3_i32_249 = arith.constant -3 : i32
    %1147 = vector.broadcast %c-3_i32_249 : i32 to vector<2x256xi32>
    %1148 = arith.addi %31, %1147 : vector<2x256xi32>
    %c16_i32_250 = arith.constant 16 : i32
    %1149 = vector.broadcast %c16_i32_250 : i32 to vector<2x256xi32>
    %1150 = arith.cmpi slt, %1148, %1149 : vector<2x256xi32>
    %1151 = arith.andi %1146, %1150 : vector<2x256xi1>
    %1152 = arith.andi %1142, %1151 : vector<2x256xi1>
    %1153 = vector.extract_strided_slice %21 {offsets = [0, 45], sizes = [2, 211], strides = [1, 1]} : vector<2x256xf32> to vector<2x211xf32>
    %1154 = vector.extract_strided_slice %21 {offsets = [0, 0], sizes = [2, 45], strides = [1, 1]} : vector<2x256xf32> to vector<2x45xf32>
    %1155 = tpu.concatenate %1153, %1154 in 1 : vector<2x211xf32>, vector<2x45xf32> -> vector<2x256xf32>
    %cst_251 = arith.constant 0.000000e+00 : f32
    %1156 = vector.broadcast %cst_251 : f32 to vector<2x256xf32>
    %1157 = arith.select %1152, %1155, %1156 : vector<2x256xi1>, vector<2x256xf32>
    %c42 = arith.constant 42 : index
    %1158 = memref.load %arg3[%c42] : memref<98xf32, #tpu.memory_space<smem>>
    %1159 = vector.extract_strided_slice %1157 {offsets = [0, 0], sizes = [1, 256], strides = [1, 1]} : vector<2x256xf32> to vector<1x256xf32>
    %1160 = vector.broadcast %1158 : f32 to vector<1x256xf32>
    %1161 = arith.mulf %1160, %1159 : vector<1x256xf32>
    %1162 = arith.addf %1133, %1161 : vector<1x256xf32>
    %c91 = arith.constant 91 : index
    %1163 = memref.load %arg3[%c91] : memref<98xf32, #tpu.memory_space<smem>>
    %1164 = vector.extract_strided_slice %1157 {offsets = [1, 0], sizes = [1, 256], strides = [1, 1]} : vector<2x256xf32> to vector<1x256xf32>
    %1165 = vector.broadcast %1163 : f32 to vector<1x256xf32>
    %1166 = arith.mulf %1165, %1164 : vector<1x256xf32>
    %1167 = arith.addf %1162, %1166 : vector<1x256xf32>
    %c-2_i32_252 = arith.constant -2 : i32
    %1168 = vector.broadcast %c-2_i32_252 : i32 to vector<2x256xi32>
    %1169 = arith.addi %31, %1168 : vector<2x256xi32>
    %c0_i32_253 = arith.constant 0 : i32
    %1170 = vector.broadcast %c0_i32_253 : i32 to vector<2x256xi32>
    %1171 = arith.cmpi sge, %1169, %1170 : vector<2x256xi32>
    %c-2_i32_254 = arith.constant -2 : i32
    %1172 = vector.broadcast %c-2_i32_254 : i32 to vector<2x256xi32>
    %1173 = arith.addi %31, %1172 : vector<2x256xi32>
    %c16_i32_255 = arith.constant 16 : i32
    %1174 = vector.broadcast %c16_i32_255 : i32 to vector<2x256xi32>
    %1175 = arith.cmpi slt, %1173, %1174 : vector<2x256xi32>
    %1176 = arith.andi %1171, %1175 : vector<2x256xi1>
    %1177 = arith.andi %1142, %1176 : vector<2x256xi1>
    %1178 = vector.extract_strided_slice %21 {offsets = [0, 46], sizes = [2, 210], strides = [1, 1]} : vector<2x256xf32> to vector<2x210xf32>
    %1179 = vector.extract_strided_slice %21 {offsets = [0, 0], sizes = [2, 46], strides = [1, 1]} : vector<2x256xf32> to vector<2x46xf32>
    %1180 = tpu.concatenate %1178, %1179 in 1 : vector<2x210xf32>, vector<2x46xf32> -> vector<2x256xf32>
    %cst_256 = arith.constant 0.000000e+00 : f32
    %1181 = vector.broadcast %cst_256 : f32 to vector<2x256xf32>
    %1182 = arith.select %1177, %1180, %1181 : vector<2x256xi1>, vector<2x256xf32>
    %c43 = arith.constant 43 : index
    %1183 = memref.load %arg3[%c43] : memref<98xf32, #tpu.memory_space<smem>>
    %1184 = vector.extract_strided_slice %1182 {offsets = [0, 0], sizes = [1, 256], strides = [1, 1]} : vector<2x256xf32> to vector<1x256xf32>
    %1185 = vector.broadcast %1183 : f32 to vector<1x256xf32>
    %1186 = arith.mulf %1185, %1184 : vector<1x256xf32>
    %1187 = arith.addf %1167, %1186 : vector<1x256xf32>
    %c92 = arith.constant 92 : index
    %1188 = memref.load %arg3[%c92] : memref<98xf32, #tpu.memory_space<smem>>
    %1189 = vector.extract_strided_slice %1182 {offsets = [1, 0], sizes = [1, 256], strides = [1, 1]} : vector<2x256xf32> to vector<1x256xf32>
    %1190 = vector.broadcast %1188 : f32 to vector<1x256xf32>
    %1191 = arith.mulf %1190, %1189 : vector<1x256xf32>
    %1192 = arith.addf %1187, %1191 : vector<1x256xf32>
    %c-1_i32_257 = arith.constant -1 : i32
    %1193 = vector.broadcast %c-1_i32_257 : i32 to vector<2x256xi32>
    %1194 = arith.addi %31, %1193 : vector<2x256xi32>
    %c0_i32_258 = arith.constant 0 : i32
    %1195 = vector.broadcast %c0_i32_258 : i32 to vector<2x256xi32>
    %1196 = arith.cmpi sge, %1194, %1195 : vector<2x256xi32>
    %c-1_i32_259 = arith.constant -1 : i32
    %1197 = vector.broadcast %c-1_i32_259 : i32 to vector<2x256xi32>
    %1198 = arith.addi %31, %1197 : vector<2x256xi32>
    %c16_i32_260 = arith.constant 16 : i32
    %1199 = vector.broadcast %c16_i32_260 : i32 to vector<2x256xi32>
    %1200 = arith.cmpi slt, %1198, %1199 : vector<2x256xi32>
    %1201 = arith.andi %1196, %1200 : vector<2x256xi1>
    %1202 = arith.andi %1142, %1201 : vector<2x256xi1>
    %1203 = vector.extract_strided_slice %21 {offsets = [0, 47], sizes = [2, 209], strides = [1, 1]} : vector<2x256xf32> to vector<2x209xf32>
    %1204 = vector.extract_strided_slice %21 {offsets = [0, 0], sizes = [2, 47], strides = [1, 1]} : vector<2x256xf32> to vector<2x47xf32>
    %1205 = tpu.concatenate %1203, %1204 in 1 : vector<2x209xf32>, vector<2x47xf32> -> vector<2x256xf32>
    %cst_261 = arith.constant 0.000000e+00 : f32
    %1206 = vector.broadcast %cst_261 : f32 to vector<2x256xf32>
    %1207 = arith.select %1202, %1205, %1206 : vector<2x256xi1>, vector<2x256xf32>
    %c44 = arith.constant 44 : index
    %1208 = memref.load %arg3[%c44] : memref<98xf32, #tpu.memory_space<smem>>
    %1209 = vector.extract_strided_slice %1207 {offsets = [0, 0], sizes = [1, 256], strides = [1, 1]} : vector<2x256xf32> to vector<1x256xf32>
    %1210 = vector.broadcast %1208 : f32 to vector<1x256xf32>
    %1211 = arith.mulf %1210, %1209 : vector<1x256xf32>
    %1212 = arith.addf %1192, %1211 : vector<1x256xf32>
    %c93 = arith.constant 93 : index
    %1213 = memref.load %arg3[%c93] : memref<98xf32, #tpu.memory_space<smem>>
    %1214 = vector.extract_strided_slice %1207 {offsets = [1, 0], sizes = [1, 256], strides = [1, 1]} : vector<2x256xf32> to vector<1x256xf32>
    %1215 = vector.broadcast %1213 : f32 to vector<1x256xf32>
    %1216 = arith.mulf %1215, %1214 : vector<1x256xf32>
    %1217 = arith.addf %1212, %1216 : vector<1x256xf32>
    %c0_i32_262 = arith.constant 0 : i32
    %1218 = vector.broadcast %c0_i32_262 : i32 to vector<2x256xi32>
    %1219 = arith.addi %31, %1218 : vector<2x256xi32>
    %c0_i32_263 = arith.constant 0 : i32
    %1220 = vector.broadcast %c0_i32_263 : i32 to vector<2x256xi32>
    %1221 = arith.cmpi sge, %1219, %1220 : vector<2x256xi32>
    %c0_i32_264 = arith.constant 0 : i32
    %1222 = vector.broadcast %c0_i32_264 : i32 to vector<2x256xi32>
    %1223 = arith.addi %31, %1222 : vector<2x256xi32>
    %c16_i32_265 = arith.constant 16 : i32
    %1224 = vector.broadcast %c16_i32_265 : i32 to vector<2x256xi32>
    %1225 = arith.cmpi slt, %1223, %1224 : vector<2x256xi32>
    %1226 = arith.andi %1221, %1225 : vector<2x256xi1>
    %1227 = arith.andi %1142, %1226 : vector<2x256xi1>
    %1228 = vector.extract_strided_slice %21 {offsets = [0, 48], sizes = [2, 208], strides = [1, 1]} : vector<2x256xf32> to vector<2x208xf32>
    %1229 = vector.extract_strided_slice %21 {offsets = [0, 0], sizes = [2, 48], strides = [1, 1]} : vector<2x256xf32> to vector<2x48xf32>
    %1230 = tpu.concatenate %1228, %1229 in 1 : vector<2x208xf32>, vector<2x48xf32> -> vector<2x256xf32>
    %cst_266 = arith.constant 0.000000e+00 : f32
    %1231 = vector.broadcast %cst_266 : f32 to vector<2x256xf32>
    %1232 = arith.select %1227, %1230, %1231 : vector<2x256xi1>, vector<2x256xf32>
    %c45 = arith.constant 45 : index
    %1233 = memref.load %arg3[%c45] : memref<98xf32, #tpu.memory_space<smem>>
    %1234 = vector.extract_strided_slice %1232 {offsets = [0, 0], sizes = [1, 256], strides = [1, 1]} : vector<2x256xf32> to vector<1x256xf32>
    %1235 = vector.broadcast %1233 : f32 to vector<1x256xf32>
    %1236 = arith.mulf %1235, %1234 : vector<1x256xf32>
    %1237 = arith.addf %1217, %1236 : vector<1x256xf32>
    %c94 = arith.constant 94 : index
    %1238 = memref.load %arg3[%c94] : memref<98xf32, #tpu.memory_space<smem>>
    %1239 = vector.extract_strided_slice %1232 {offsets = [1, 0], sizes = [1, 256], strides = [1, 1]} : vector<2x256xf32> to vector<1x256xf32>
    %1240 = vector.broadcast %1238 : f32 to vector<1x256xf32>
    %1241 = arith.mulf %1240, %1239 : vector<1x256xf32>
    %1242 = arith.addf %1237, %1241 : vector<1x256xf32>
    %c1_i32_267 = arith.constant 1 : i32
    %1243 = vector.broadcast %c1_i32_267 : i32 to vector<2x256xi32>
    %1244 = arith.addi %31, %1243 : vector<2x256xi32>
    %c0_i32_268 = arith.constant 0 : i32
    %1245 = vector.broadcast %c0_i32_268 : i32 to vector<2x256xi32>
    %1246 = arith.cmpi sge, %1244, %1245 : vector<2x256xi32>
    %c1_i32_269 = arith.constant 1 : i32
    %1247 = vector.broadcast %c1_i32_269 : i32 to vector<2x256xi32>
    %1248 = arith.addi %31, %1247 : vector<2x256xi32>
    %c16_i32_270 = arith.constant 16 : i32
    %1249 = vector.broadcast %c16_i32_270 : i32 to vector<2x256xi32>
    %1250 = arith.cmpi slt, %1248, %1249 : vector<2x256xi32>
    %1251 = arith.andi %1246, %1250 : vector<2x256xi1>
    %1252 = arith.andi %1142, %1251 : vector<2x256xi1>
    %1253 = vector.extract_strided_slice %21 {offsets = [0, 49], sizes = [2, 207], strides = [1, 1]} : vector<2x256xf32> to vector<2x207xf32>
    %1254 = vector.extract_strided_slice %21 {offsets = [0, 0], sizes = [2, 49], strides = [1, 1]} : vector<2x256xf32> to vector<2x49xf32>
    %1255 = tpu.concatenate %1253, %1254 in 1 : vector<2x207xf32>, vector<2x49xf32> -> vector<2x256xf32>
    %cst_271 = arith.constant 0.000000e+00 : f32
    %1256 = vector.broadcast %cst_271 : f32 to vector<2x256xf32>
    %1257 = arith.select %1252, %1255, %1256 : vector<2x256xi1>, vector<2x256xf32>
    %c46 = arith.constant 46 : index
    %1258 = memref.load %arg3[%c46] : memref<98xf32, #tpu.memory_space<smem>>
    %1259 = vector.extract_strided_slice %1257 {offsets = [0, 0], sizes = [1, 256], strides = [1, 1]} : vector<2x256xf32> to vector<1x256xf32>
    %1260 = vector.broadcast %1258 : f32 to vector<1x256xf32>
    %1261 = arith.mulf %1260, %1259 : vector<1x256xf32>
    %1262 = arith.addf %1242, %1261 : vector<1x256xf32>
    %c95 = arith.constant 95 : index
    %1263 = memref.load %arg3[%c95] : memref<98xf32, #tpu.memory_space<smem>>
    %1264 = vector.extract_strided_slice %1257 {offsets = [1, 0], sizes = [1, 256], strides = [1, 1]} : vector<2x256xf32> to vector<1x256xf32>
    %1265 = vector.broadcast %1263 : f32 to vector<1x256xf32>
    %1266 = arith.mulf %1265, %1264 : vector<1x256xf32>
    %1267 = arith.addf %1262, %1266 : vector<1x256xf32>
    %c2_i32_272 = arith.constant 2 : i32
    %1268 = vector.broadcast %c2_i32_272 : i32 to vector<2x256xi32>
    %1269 = arith.addi %31, %1268 : vector<2x256xi32>
    %c0_i32_273 = arith.constant 0 : i32
    %1270 = vector.broadcast %c0_i32_273 : i32 to vector<2x256xi32>
    %1271 = arith.cmpi sge, %1269, %1270 : vector<2x256xi32>
    %c2_i32_274 = arith.constant 2 : i32
    %1272 = vector.broadcast %c2_i32_274 : i32 to vector<2x256xi32>
    %1273 = arith.addi %31, %1272 : vector<2x256xi32>
    %c16_i32_275 = arith.constant 16 : i32
    %1274 = vector.broadcast %c16_i32_275 : i32 to vector<2x256xi32>
    %1275 = arith.cmpi slt, %1273, %1274 : vector<2x256xi32>
    %1276 = arith.andi %1271, %1275 : vector<2x256xi1>
    %1277 = arith.andi %1142, %1276 : vector<2x256xi1>
    %1278 = vector.extract_strided_slice %21 {offsets = [0, 50], sizes = [2, 206], strides = [1, 1]} : vector<2x256xf32> to vector<2x206xf32>
    %1279 = vector.extract_strided_slice %21 {offsets = [0, 0], sizes = [2, 50], strides = [1, 1]} : vector<2x256xf32> to vector<2x50xf32>
    %1280 = tpu.concatenate %1278, %1279 in 1 : vector<2x206xf32>, vector<2x50xf32> -> vector<2x256xf32>
    %cst_276 = arith.constant 0.000000e+00 : f32
    %1281 = vector.broadcast %cst_276 : f32 to vector<2x256xf32>
    %1282 = arith.select %1277, %1280, %1281 : vector<2x256xi1>, vector<2x256xf32>
    %c47 = arith.constant 47 : index
    %1283 = memref.load %arg3[%c47] : memref<98xf32, #tpu.memory_space<smem>>
    %1284 = vector.extract_strided_slice %1282 {offsets = [0, 0], sizes = [1, 256], strides = [1, 1]} : vector<2x256xf32> to vector<1x256xf32>
    %1285 = vector.broadcast %1283 : f32 to vector<1x256xf32>
    %1286 = arith.mulf %1285, %1284 : vector<1x256xf32>
    %1287 = arith.addf %1267, %1286 : vector<1x256xf32>
    %c96 = arith.constant 96 : index
    %1288 = memref.load %arg3[%c96] : memref<98xf32, #tpu.memory_space<smem>>
    %1289 = vector.extract_strided_slice %1282 {offsets = [1, 0], sizes = [1, 256], strides = [1, 1]} : vector<2x256xf32> to vector<1x256xf32>
    %1290 = vector.broadcast %1288 : f32 to vector<1x256xf32>
    %1291 = arith.mulf %1290, %1289 : vector<1x256xf32>
    %1292 = arith.addf %1287, %1291 : vector<1x256xf32>
    %c3_i32_277 = arith.constant 3 : i32
    %1293 = vector.broadcast %c3_i32_277 : i32 to vector<2x256xi32>
    %1294 = arith.addi %31, %1293 : vector<2x256xi32>
    %c0_i32_278 = arith.constant 0 : i32
    %1295 = vector.broadcast %c0_i32_278 : i32 to vector<2x256xi32>
    %1296 = arith.cmpi sge, %1294, %1295 : vector<2x256xi32>
    %c3_i32_279 = arith.constant 3 : i32
    %1297 = vector.broadcast %c3_i32_279 : i32 to vector<2x256xi32>
    %1298 = arith.addi %31, %1297 : vector<2x256xi32>
    %c16_i32_280 = arith.constant 16 : i32
    %1299 = vector.broadcast %c16_i32_280 : i32 to vector<2x256xi32>
    %1300 = arith.cmpi slt, %1298, %1299 : vector<2x256xi32>
    %1301 = arith.andi %1296, %1300 : vector<2x256xi1>
    %1302 = arith.andi %1142, %1301 : vector<2x256xi1>
    %1303 = vector.extract_strided_slice %21 {offsets = [0, 51], sizes = [2, 205], strides = [1, 1]} : vector<2x256xf32> to vector<2x205xf32>
    %1304 = vector.extract_strided_slice %21 {offsets = [0, 0], sizes = [2, 51], strides = [1, 1]} : vector<2x256xf32> to vector<2x51xf32>
    %1305 = tpu.concatenate %1303, %1304 in 1 : vector<2x205xf32>, vector<2x51xf32> -> vector<2x256xf32>
    %cst_281 = arith.constant 0.000000e+00 : f32
    %1306 = vector.broadcast %cst_281 : f32 to vector<2x256xf32>
    %1307 = arith.select %1302, %1305, %1306 : vector<2x256xi1>, vector<2x256xf32>
    %c48 = arith.constant 48 : index
    %1308 = memref.load %arg3[%c48] : memref<98xf32, #tpu.memory_space<smem>>
    %1309 = vector.extract_strided_slice %1307 {offsets = [0, 0], sizes = [1, 256], strides = [1, 1]} : vector<2x256xf32> to vector<1x256xf32>
    %1310 = vector.broadcast %1308 : f32 to vector<1x256xf32>
    %1311 = arith.mulf %1310, %1309 : vector<1x256xf32>
    %1312 = arith.addf %1292, %1311 : vector<1x256xf32>
    %c97 = arith.constant 97 : index
    %1313 = memref.load %arg3[%c97] : memref<98xf32, #tpu.memory_space<smem>>
    %1314 = vector.extract_strided_slice %1307 {offsets = [1, 0], sizes = [1, 256], strides = [1, 1]} : vector<2x256xf32> to vector<1x256xf32>
    %1315 = vector.broadcast %1313 : f32 to vector<1x256xf32>
    %1316 = arith.mulf %1315, %1314 : vector<1x256xf32>
    %1317 = arith.addf %1312, %1316 : vector<1x256xf32>
    %cst_282 = arith.constant 0.000000e+00 : f32
    %1318 = vector.broadcast %cst_282 : f32 to vector<1x256xf32>
    %1319 = arith.subf %1318, %1317 : vector<1x256xf32>
    %1320 = math.exp %1319 : vector<1x256xf32>
    %cst_283 = arith.constant 1.000000e+00 : f32
    %1321 = vector.broadcast %cst_283 : f32 to vector<1x256xf32>
    %1322 = arith.addf %1321, %1320 : vector<1x256xf32>
    %cst_284 = arith.constant 1.000000e+00 : f32
    %1323 = vector.broadcast %cst_284 : f32 to vector<1x256xf32>
    %1324 = arith.divf %1323, %1322 : vector<1x256xf32>
    %1325 = vector.broadcast %1324 : vector<1x256xf32> to vector<8x256xf32>
    %1326 = arith.mulf %14, %1325 : vector<8x256xf32>
    %c0_285 = arith.constant 0 : index
    %c0_286 = arith.constant 0 : index
    %c0_287 = arith.constant 0 : index
    %1327 = vector.load %arg5[%c0_285, %c0_286, %c0_287] : memref<1x8x256xf32, #tpu.memory_space<vmem>>, vector<1x8x256xf32>
    %1328 = vector.shape_cast %1327 : vector<1x8x256xf32> to vector<8x256xf32>
    %1329 = vector.shape_cast %1326 : vector<8x256xf32> to vector<1x8x256xf32>
    tpu.vector_store %arg5[%c0_285, %c0_286, %c0_287], %1329 {strides = array<i32>} : memref<1x8x256xf32, #tpu.memory_space<vmem>>, vector<1x8x256xf32>,
    return
  }
  func.func @transform_0(%arg0: i32) -> (i32, i32) {
    %c0_i32 = arith.constant 0 : i32
    %c0_i32_0 = arith.constant 0 : i32
    %c0_i32_1 = arith.constant 0 : i32
    return %c0_i32, %c0_i32_0 : i32, i32
  }
  func.func @transform_1(%arg0: i32) -> (i32, i32) {
    %c0_i32 = arith.constant 0 : i32
    %c0_i32_0 = arith.constant 0 : i32
    %c0_i32_1 = arith.constant 0 : i32
    return %c0_i32, %c0_i32_0 : i32, i32
  }
  func.func @transform_2(%arg0: i32) -> i32 {
    %c0_i32 = arith.constant 0 : i32
    %c0_i32_0 = arith.constant 0 : i32
    return %c0_i32 : i32
  }
  func.func @transform_3(%arg0: i32) -> (i32, i32, i32) {
    %c0_i32 = arith.constant 0 : i32
    %c0_i32_0 = arith.constant 0 : i32
    %c0_i32_1 = arith.constant 0 : i32
    return %arg0, %c0_i32, %c0_i32_0 : i32, i32, i32
  }
  func.func @transform_4(%arg0: i32) -> (i32, i32, i32) {
    %c0_i32 = arith.constant 0 : i32
    %c0_i32_0 = arith.constant 0 : i32
    %c0_i32_1 = arith.constant 0 : i32
    return %arg0, %c0_i32, %c0_i32_0 : i32, i32, i32
  }
}

</mosaic_0001>

<llo_original>
// kernel: tpu_custom_call.1
$region0: #{tpu_custom_call.1}
  #allocation0 [shape = 'u32[]', space=smem, size = 0x4, offset = 0x4, fixed_abs, tag = 'smem constant byte address 0x4 - core index']
  #allocation1 [shape = 'u32[144,128]{1,0:T(1,128)}', space=vmem, size = 0x12000, scoped, tag = 'internal scratch']
  %s0 = inlined_call_operand.vmem [shape: f32[8,8], index: 0, kind: input, shape index: {}]
  %s1 = inlined_call_operand.vmem [shape: f32[8,1], index: 1, kind: input, shape index: {}]
  %s2 = inlined_call_operand.vmem [shape: f32[98], index: 2, kind: input, shape index: {}]
  %s3 = inlined_call_operand.hbm [shape: f32[2,8,256], index: 3, kind: input, shape index: {}]
  %s4 = inlined_call_operand.hbm [shape: f32[2,8,256], index: 4, kind: output, shape index: {}]
  %s5 = sld [smem:[#allocation0]]
  $region57: #{tpu_custom_call.1} parent=0
    _
  %s7 = ssub.s32 1, %s5
  %s8 = scalar_select 0, %s7, %s5
  $region1: #{tpu_custom_call.1} parent=0
    #allocation2 [shape = 'u8[512]{0}', space=smem, size = 0x200, scoped, tag = 'input window, operand 2, single buffered']
    #allocation3 [shape = 's32[2]{0}', space=sflag, size = 0x8, scoped, tag = 'scoped memory for tpu_custom_call.1']
    #allocation4 [shape = 's32[2]{0}', space=sflag, size = 0x8, scoped, tag = 'scoped memory for tpu_custom_call.1']
    #allocation5 [shape = 's32[2]{0}', space=sflag, size = 0x8, scoped, tag = 'scoped memory for tpu_custom_call.1']
    #allocation6 [shape = 'u8[16384]{0}', space=vmem, size = 0x4000, scoped, tag = 'input window, operand 3']
    #allocation7 [shape = 'u8[16384]{0}', space=vmem, size = 0x4000, scoped, tag = 'output window, operand 0']
    %9 = vsyncpa [#allocation5], 0
    %10 = vsyncpa [#allocation3], 0
    %s11 = scalar_lea.sflag [#allocation3], 1
    %12 = vsyncpa %s11, 0
    %13 = vsyncpa [#allocation4], 0
    %s14 = scalar_lea.sflag [#allocation4], 1
    %15 = vsyncpa %s14, 0
    loop: start=0, step=1, limit=4
    $region2: #{tpu_custom_call.1} parent=1 // loop_pre_header
      _
    $region3: #{tpu_custom_call.1} parent=1 // loop_header
      %s17 = sphi 0, %s21
      %p18 = scmp.ge.s32.totalorder %s17, 4
      %s25 = sphi 0, %s25
      %s27 = sphi 0, %s25
      %s28 = sphi 0, %s27
      %s42 = sphi 0, %s28
      %s46 = sphi 0, %s46
      %s48 = sphi 0, %s46
      %s49 = sphi 0, %s48
      %s63 = sphi 0, %s49
      %s67 = sphi 0, %s67
      %s69 = sphi 0, %s67
      %s70 = sphi 0, %s69
      %s84 = sphi 0, %s70
      %s90 = sphi 0, %s92
      %s93 = sphi 0, %s90
      %s94 = sphi 0, %s93
      %s110 = sphi 0, %s94
      %s116 = sphi 0, %s118
      %s119 = sphi 0, %s116
      %s120 = sphi 0, %s119
      %s136 = sphi 0, %s120
    $region4: #{tpu_custom_call.1} parent=1 // loop_header_branch
      %20 = sbr.rel (%p18) target = $region8
    $region5: #{tpu_custom_call.1} parent=1 // loop_body
      %s22 = ssub.s32 %s17, 1
      %s23 = ssub.s32 %s17, 2
      %s24 = sadd.s32 %s17, 1
      %s26 = sadd.s32 %s25, 1
      %p29 = scmp.eq.s32.totalorder %s17, 1
      %p30 = scmp.ne.s32.totalorder %s25, %s27
      %p31 = scmp.eq.s32.totalorder %s17, 0
      %p32 = por %p30, %p31
      %p33 = scmp.ne.s32.totalorder %s25, %s27
      %p34 = scmp.eq.s32.totalorder %s22, 1
      %p35 = por %p33, %p34
      %p36 = scmp.ne.s32.totalorder %s27, %s28
      %p37 = scmp.eq.s32.totalorder %s22, 0
      %p38 = por %p36, %p37
      %p39 = scmp.ne.s32.totalorder %s27, %s28
      %p40 = scmp.eq.s32.totalorder %s23, 1
      %p41 = por %p39, %p40
      %p43 = scmp.ne.s32.totalorder %s28, %s42
      %p44 = scmp.eq.s32.totalorder %s23, 0
      %p45 = por %p43, %p44
      %s47 = sadd.s32 %s46, 1
      %p50 = scmp.eq.s32.totalorder %s17, 1
      %p51 = scmp.ne.s32.totalorder %s46, %s48
      %p52 = scmp.eq.s32.totalorder %s17, 0
      %p53 = por %p51, %p52
      %p54 = scmp.ne.s32.totalorder %s46, %s48
      %p55 = scmp.eq.s32.totalorder %s22, 1
      %p56 = por %p54, %p55
      %p57 = scmp.ne.s32.totalorder %s48, %s49
      %p58 = scmp.eq.s32.totalorder %s22, 0
      %p59 = por %p57, %p58
      %p60 = scmp.ne.s32.totalorder %s48, %s49
      %p61 = scmp.eq.s32.totalorder %s23, 1
      %p62 = por %p60, %p61
      %p64 = scmp.ne.s32.totalorder %s49, %s63
      %p65 = scmp.eq.s32.totalorder %s23, 0
      %p66 = por %p64, %p65
      %s68 = sadd.s32 %s67, 1
      %p71 = scmp.eq.s32.totalorder %s17, 1
      %p72 = scmp.ne.s32.totalorder %s67, %s69
      %p73 = scmp.eq.s32.totalorder %s17, 0
      %p74 = por %p72, %p73
      %p75 = scmp.ne.s32.totalorder %s67, %s69
      %p76 = scmp.eq.s32.totalorder %s22, 1
      %p77 = por %p75, %p76
      %p78 = scmp.ne.s32.totalorder %s69, %s70
      %p79 = scmp.eq.s32.totalorder %s22, 0
      %p80 = por %p78, %p79
      %p81 = scmp.ne.s32.totalorder %s69, %s70
      %p82 = scmp.eq.s32.totalorder %s23, 1
      %p83 = por %p81, %p82
      %p85 = scmp.ne.s32.totalorder %s70, %s84
      %p86 = scmp.eq.s32.totalorder %s23, 0
      %p87 = por %p85, %p86
      %s88 = ssub.s32 %s17, %s24
      %p89 = scmp.eq.s32.totalorder %s88, 0
      %s91 = sadd.s32 %s90, 1
      %s92 = scalar_select %p89, %s90, %s91
      %p95 = pneg %p89
      %p96 = scmp.eq.s32.totalorder %s17, 1
      %p97 = por %p95, %p96
      %p98 = scmp.ne.s32.totalorder %s90, %s93
      %p99 = scmp.eq.s32.totalorder %s17, 0
      %p100 = por %p98, %p99
      %p101 = scmp.ne.s32.totalorder %s90, %s93
      %p102 = scmp.eq.s32.totalorder %s22, 1
      %p103 = por %p101, %p102
      %p104 = scmp.ne.s32.totalorder %s93, %s94
      %p105 = scmp.eq.s32.totalorder %s22, 0
      %p106 = por %p104, %p105
      %p107 = scmp.ne.s32.totalorder %s93, %s94
      %p108 = scmp.eq.s32.totalorder %s23, 1
      %p109 = por %p107, %p108
      %p111 = scmp.ne.s32.totalorder %s94, %s110
      %p112 = scmp.eq.s32.totalorder %s23, 0
      %p113 = por %p111, %p112
      %s114 = ssub.s32 %s17, %s24
      %p115 = scmp.eq.s32.totalorder %s114, 0
      %s117 = sadd.s32 %s116, 1
      %s118 = scalar_select %p115, %s116, %s117
      %p121 = pneg %p115
      %p122 = scmp.eq.s32.totalorder %s17, 1
      %p123 = por %p121, %p122
      %p124 = scmp.ne.s32.totalorder %s116, %s119
      %p125 = scmp.eq.s32.totalorder %s17, 0
      %p126 = por %p124, %p125
      %p127 = scmp.ne.s32.totalorder %s116, %s119
      %p128 = scmp.eq.s32.totalorder %s22, 1
      %p129 = por %p127, %p128
      %p130 = scmp.ne.s32.totalorder %s119, %s120
      %p131 = scmp.eq.s32.totalorder %s22, 0
      %p132 = por %p130, %p131
      %p133 = scmp.ne.s32.totalorder %s119, %s120
      %p134 = scmp.eq.s32.totalorder %s23, 1
      %p135 = por %p133, %p134
      %p137 = scmp.ne.s32.totalorder %s120, %s136
      %p138 = scmp.eq.s32.totalorder %s23, 0
      %p139 = por %p137, %p138
      %p140 = scmp.le.s32.totalorder 1, %s17
      %p141 = scmp.lt.s32.totalorder %s17, 3
      %p142 = pnand %p140, %p141
      %p143 = pneg %p142
      // Predicated region
      $region9: #{tpu_custom_call.1} parent=5 // pred_check
        _
      $region10: #{tpu_custom_call.1} parent=5 // pred_check_branch
        %145 = sbr.rel (%p142) target = $region12
      $region11: #{tpu_custom_call.1} parent=5 // pred_region
        %s146 = ssub.s32 %s17, 1
        // Predicated region
        $region13: #{tpu_custom_call.1} parent=11 // pred_check
          %p147 = pneg %p38
        $region14: #{tpu_custom_call.1} parent=11 // pred_check_branch
          %149 = sbr.rel (%p147) target = $region16
        $region15: #{tpu_custom_call.1} parent=11 // pred_region
          _
        $region16: #{tpu_custom_call.1} parent=11 // pred_fallthru
          _
        // Predicated region
        $region17: #{tpu_custom_call.1} parent=11 // pred_check
          %p150 = pneg %p59
        $region18: #{tpu_custom_call.1} parent=11 // pred_check_branch
          %152 = sbr.rel (%p150) target = $region20
        $region19: #{tpu_custom_call.1} parent=11 // pred_region
          _
        $region20: #{tpu_custom_call.1} parent=11 // pred_fallthru
          _
        // Predicated region
        $region21: #{tpu_custom_call.1} parent=11 // pred_check
          %p153 = pneg %p80
        $region22: #{tpu_custom_call.1} parent=11 // pred_check_branch
          %155 = sbr.rel (%p153) target = $region24
        $region23: #{tpu_custom_call.1} parent=11 // pred_region
          %s157 = ssub.s32 16, 16
          %158 = vsyncadd [#allocation5], %s157
          %s160 = sshll.u32 %s2, 4
          %s161 = int_to_ptr.vmem [resolvable:$true] %s160
          %163 = dma.vmem_to_smem %s161, 16, [#allocation2], [#allocation5]
        $region24: #{tpu_custom_call.1} parent=11 // pred_fallthru
          _
      $region12: #{tpu_custom_call.1} parent=5 // pred_fallthru
        _
      %p164 = scmp.lt.s32.totalorder %s17, 2
      // Predicated region
      $region25: #{tpu_custom_call.1} parent=5 // pred_check
        %p165 = pneg %p164
      $region26: #{tpu_custom_call.1} parent=5 // pred_check_branch
        %167 = sbr.rel (%p165) target = $region28
      $region27: #{tpu_custom_call.1} parent=5 // pred_region
        // Predicated region
        $region29: #{tpu_custom_call.1} parent=27 // pred_check
          %p168 = pneg %p100
        $region30: #{tpu_custom_call.1} parent=27 // pred_check_branch
          %170 = sbr.rel (%p168) target = $region32
        $region31: #{tpu_custom_call.1} parent=27 // pred_region
          %s171 = sand.u32 %s90, 1
          %s172 = scalar_lea.sflag [#allocation3], %s171
          %s173 = sand.u32 %s90, 1
          %s174 = smul.addr %s173, 16
          %s175 = scalar_lea.vmem [#allocation6], %s174
          %s177 = ssub.s32 256, 256
          %178 = vsyncadd %s172, %s177
          %s179 = smul.addr %s17, 2
          %s180 = smul.addr %s179, 128
          %s181 = scalar_lea.hbm %s3, %s180
          %s183 = sshll.u32 %s175, 4
          %s184 = int_to_ptr.vmem [resolvable:$true] %s183
          %186 = dma.hbm_to_vmem [thread:$0]  %s181, 256, %s184, %s172
        $region32: #{tpu_custom_call.1} parent=27 // pred_fallthru
          _
      $region28: #{tpu_custom_call.1} parent=5 // pred_fallthru
        _
      %p187 = scmp.le.s32.totalorder 1, %s17
      %p188 = scmp.lt.s32.totalorder %s17, 3
      %p189 = pnand %p187, %p188
      %p190 = pneg %p189
      // Predicated region
      $region33: #{tpu_custom_call.1} parent=5 // pred_check
        _
      $region34: #{tpu_custom_call.1} parent=5 // pred_check_branch
        %192 = sbr.rel (%p189) target = $region36
      $region35: #{tpu_custom_call.1} parent=5 // pred_region
        %s193 = ssub.s32 %s17, 1
        // Predicated region
        $region37: #{tpu_custom_call.1} parent=35 // pred_check
          %p194 = pneg %p80
        $region38: #{tpu_custom_call.1} parent=35 // pred_check_branch
          %196 = sbr.rel (%p194) target = $region40
        $region39: #{tpu_custom_call.1} parent=35 // pred_region
          %197 = dma.done [#allocation5], 16
        $region40: #{tpu_custom_call.1} parent=35 // pred_fallthru
          _
        %s198 = sand.u32 %s93, 1
        %s199 = scalar_lea.sflag [#allocation3], %s198
        %s200 = sand.u32 %s93, 1
        %s201 = smul.addr %s200, 16
        %s202 = scalar_lea.vmem [#allocation6], %s201
        // Predicated region
        $region41: #{tpu_custom_call.1} parent=35 // pred_check
          %p203 = pneg %p106
        $region42: #{tpu_custom_call.1} parent=35 // pred_check_branch
          %205 = sbr.rel (%p203) target = $region44
        $region43: #{tpu_custom_call.1} parent=35 // pred_region
          %206 = dma.done %s199, 256
        $region44: #{tpu_custom_call.1} parent=35 // pred_fallthru
          _
        %207 = sfence
        %p208 = pneg %p38
        %p209 = pneg %p35
        %p210 = pneg %p59
        %p211 = pneg %p56
        %p212 = pneg %p80
        %p213 = pneg %p77
        %s214 = sand.u32 %s93, 1
        %s215 = scalar_lea.sflag [#allocation3], %s214
        %s216 = sand.u32 %s93, 1
        %s217 = smul.addr %s216, 16
        %s218 = scalar_lea.vmem [#allocation6], %s217
        %p219 = pneg %p106
        %p220 = pneg %p103
        %p221 = pneg %p132
        %p222 = pneg %p129
        %s223 = sand.u32 %s119, 1
        %s224 = scalar_lea.sflag [#allocation4], %s223
        %s225 = sand.u32 %s119, 1
        %s226 = smul.addr %s225, 16
        %s227 = scalar_lea.vmem [#allocation7], %s226
        %v228 = vld [vmem:[%s202] sm:$0xff]
        %v229 = vld [vmem:[%s202 + $0x8] sm:$0xff]
        %v230 = vld [vmem:[%s0] sm:$0xff]
        %v231 = vld [vmem:[%s1] sm:$0xff]
        %233 = vset.pattern.permute.xlu0 0
        %234 = vperm.xlu0 %233, %v231
        %v235 = vpop.permute.xlu0 %234
        %vm237 = vcmask 64512
        %v239 = vsel %vm237, %v230, 0
        %v241 = vand.u32 %v229, 4294901760
        %242 = vmatprep.subr.mxu0 %v241
        %v243 = vand.u32 %v228, 4294901760
        %244 = vmatpush1.msra.mxu0 %v243
        %245 = vmatprep.subr.mxu0 0.0
        %246 = vmatpush1.msra.mxu0 0.0
        %247 = vmatprep.subr.mxu0 0.0
        %248 = vmatpush1.msra.mxu0 0.0
        %249 = vmatprep.subr.mxu0 0.0
        %250 = vmatpush1.msra.mxu0 0.0
        %251 = vmatprep.subr.mxu0 0.0
        %252 = vmatpush1.msra.mxu0 0.0
        %253 = vmatprep.subr.mxu0 0.0
        %254 = vmatpush1.msra.mxu0 0.0
        %255 = vmatprep.subr.mxu0 0.0
        %256 = vmatpush1.msra.mxu0 0.0
        %257 = vmatprep.subr.mxu0 0.0
        %258 = vmatpush1.msra.mxu0 0.0
        %259 = vmatprep.subr.mxu0 0.0
        %260 = vmatpush1.msra.mxu0 0.0
        %261 = vmatprep.subr.mxu0 0.0
        %262 = vmatpush1.msra.mxu0 0.0
        %263 = vmatprep.subr.mxu0 0.0
        %264 = vmatpush1.msra.mxu0 0.0
        %265 = vmatprep.subr.mxu0 0.0
        %266 = vmatpush1.msra.mxu0 0.0
        %267 = vmatprep.subr.mxu0 0.0
        %268 = vmatpush1.msra.mxu0 0.0
        %269 = vmatprep.subr.mxu0 0.0
        %270 = vmatpush1.msra.mxu0 0.0
        %271 = vmatprep.subr.mxu0 0.0
        %272 = vmatpush1.msra.mxu0 0.0
        %273 = vmatprep.subr.mxu0 0.0
        %274 = vmatpush1.msra.mxu0 0.0
        %275 = vmatprep.subr.mxu0 0.0
        %276 = vmatpush1.msra.mxu0 0.0
        %277 = vmatprep.subr.mxu0 0.0
        %278 = vmatpush1.msra.mxu0 0.0
        %279 = vmatprep.subr.mxu0 0.0
        %280 = vmatpush1.msra.mxu0 0.0
        %281 = vmatprep.subr.mxu0 0.0
        %282 = vmatpush1.msra.mxu0 0.0
        %283 = vmatprep.subr.mxu0 0.0
        %284 = vmatpush1.msra.mxu0 0.0
        %285 = vmatprep.subr.mxu0 0.0
        %286 = vmatpush1.msra.mxu0 0.0
        %287 = vmatprep.subr.mxu0 0.0
        %288 = vmatpush1.msra.mxu0 0.0
        %289 = vmatprep.subr.mxu0 0.0
        %290 = vmatpush1.msra.mxu0 0.0
        %291 = vmatprep.subr.mxu0 0.0
        %292 = vmatpush1.msra.mxu0 0.0
        %293 = vmatprep.subr.mxu0 0.0
        %294 = vmatpush1.msra.mxu0 0.0
        %295 = vmatprep.subr.mxu0 0.0
        %296 = vmatpush1.msra.mxu0 0.0
        %297 = vmatprep.subr.mxu0 0.0
        %298 = vmatpush1.msra.mxu0 0.0
        %299 = vmatprep.subr.mxu0 0.0
        %300 = vmatpush1.msra.mxu0 0.0
        %301 = vmatprep.subr.mxu0 0.0
        %302 = vmatpush1.msra.mxu0 0.0
        %303 = vmatprep.subr.mxu0 0.0
        %304 = vmatpush1.msra.mxu0 0.0
        %305 = vmatprep.subr.mxu0 0.0
        %306 = vmatpush1.msra.mxu0 0.0
        %307 = vmatprep.mubr.f32.mxu0 0.0
        %v308 = vand.u32 %v239, 4294901760
        %v309 = vsub.f32 %v239, %v308
        %v310 = vand.u32 %v309, 4294901760
        %v311 = vsub.f32 %v309, %v310
        %v312 = vand.u32 %v311, 4294901760
        %313 = vmatmul.mubr.f32.gmra.mrb[0].mxu0 %v312
        %v314 = vpop.f32.mrb[0].mxu0
        %v315 = vadd.f32 %v235, %v314
        %v316 = vpop.f32.mrb[0].mxu0
        %v317 = vadd.f32 %v235, %v316
        %318 = vdwg.mxu0
        %v319 = vand.u32 %v229, 4294901760
        %v320 = vsub.f32 %v229, %v319
        %v321 = vand.u32 %v320, 4294901760
        %v322 = vsub.f32 %v320, %v321
        %v323 = vand.u32 %v322, 4294901760
        %324 = vmatprep.subr.mxu0 %v323
        %v325 = vand.u32 %v228, 4294901760
        %v326 = vsub.f32 %v228, %v325
        %v327 = vand.u32 %v326, 4294901760
        %v328 = vsub.f32 %v326, %v327
        %v329 = vand.u32 %v328, 4294901760
        %330 = vmatpush1.msra.mxu0 %v329
        %331 = vmatprep.subr.mxu0 0.0
        %332 = vmatpush1.msra.mxu0 0.0
        %333 = vmatprep.subr.mxu0 0.0
        %334 = vmatpush1.msra.mxu0 0.0
        %335 = vmatprep.subr.mxu0 0.0
        %336 = vmatpush1.msra.mxu0 0.0
        %337 = vmatprep.subr.mxu0 0.0
        %338 = vmatpush1.msra.mxu0 0.0
        %339 = vmatprep.subr.mxu0 0.0
        %340 = vmatpush1.msra.mxu0 0.0
        %341 = vmatprep.subr.mxu0 0.0
        %342 = vmatpush1.msra.mxu0 0.0
        %343 = vmatprep.subr.mxu0 0.0
        %344 = vmatpush1.msra.mxu0 0.0
        %345 = vmatprep.subr.mxu0 0.0
        %346 = vmatpush1.msra.mxu0 0.0
        %347 = vmatprep.subr.mxu0 0.0
        %348 = vmatpush1.msra.mxu0 0.0
        %349 = vmatprep.subr.mxu0 0.0
        %350 = vmatpush1.msra.mxu0 0.0
        %351 = vmatprep.subr.mxu0 0.0
        %352 = vmatpush1.msra.mxu0 0.0
        %353 = vmatprep.subr.mxu0 0.0
        %354 = vmatpush1.msra.mxu0 0.0
        %355 = vmatprep.subr.mxu0 0.0
        %356 = vmatpush1.msra.mxu0 0.0
        %357 = vmatprep.subr.mxu0 0.0
        %358 = vmatpush1.msra.mxu0 0.0
        %359 = vmatprep.subr.mxu0 0.0
        %360 = vmatpush1.msra.mxu0 0.0
        %361 = vmatprep.subr.mxu0 0.0
        %362 = vmatpush1.msra.mxu0 0.0
        %363 = vmatprep.subr.mxu0 0.0
        %364 = vmatpush1.msra.mxu0 0.0
        %365 = vmatprep.subr.mxu0 0.0
        %366 = vmatpush1.msra.mxu0 0.0
        %367 = vmatprep.subr.mxu0 0.0
        %368 = vmatpush1.msra.mxu0 0.0
        %369 = vmatprep.subr.mxu0 0.0
        %370 = vmatpush1.msra.mxu0 0.0
        %371 = vmatprep.subr.mxu0 0.0
        %372 = vmatpush1.msra.mxu0 0.0
        %373 = vmatprep.subr.mxu0 0.0
        %374 = vmatpush1.msra.mxu0 0.0
        %375 = vmatprep.subr.mxu0 0.0
        %376 = vmatpush1.msra.mxu0 0.0
        %377 = vmatprep.subr.mxu0 0.0
        %378 = vmatpush1.msra.mxu0 0.0
        %379 = vmatprep.subr.mxu0 0.0
        %380 = vmatpush1.msra.mxu0 0.0
        %381 = vmatprep.subr.mxu0 0.0
        %382 = vmatpush1.msra.mxu0 0.0
        %383 = vmatprep.subr.mxu0 0.0
        %384 = vmatpush1.msra.mxu0 0.0
        %385 = vmatprep.subr.mxu0 0.0
        %386 = vmatpush1.msra.mxu0 0.0
        %387 = vmatprep.subr.mxu0 0.0
        %388 = vmatpush1.msra.mxu0 0.0
        %389 = vmatprep.subr.mxu0 0.0
        %390 = vmatpush1.msra.mxu0 0.0
        %391 = vmatprep.subr.mxu0 0.0
        %392 = vmatpush1.msra.mxu0 0.0
        %393 = vmatprep.mubr.f32.mxu0 0.0
        %v394 = vand.u32 %v239, 4294901760
        %395 = vmatmul.mubr.f32.gmra.mrb[0].mxu0 %v394
        %v396 = vpop.f32.mrb[0].mxu0
        %v397 = vadd.f32 %v315, %v396
        %v398 = vpop.f32.mrb[0].mxu0
        %v399 = vadd.f32 %v317, %v398
        %400 = vdwg.mxu0
        %v401 = vand.u32 %v229, 4294901760
        %v402 = vsub.f32 %v229, %v401
        %403 = vmatprep.subr.mxu0 %v402
        %v404 = vand.u32 %v228, 4294901760
        %v405 = vsub.f32 %v228, %v404
        %406 = vmatpush1.msra.mxu0 %v405
        %407 = vmatprep.subr.mxu0 0.0
        %408 = vmatpush1.msra.mxu0 0.0
        %409 = vmatprep.subr.mxu0 0.0
        %410 = vmatpush1.msra.mxu0 0.0
        %411 = vmatprep.subr.mxu0 0.0
        %412 = vmatpush1.msra.mxu0 0.0
        %413 = vmatprep.subr.mxu0 0.0
        %414 = vmatpush1.msra.mxu0 0.0
        %415 = vmatprep.subr.mxu0 0.0
        %416 = vmatpush1.msra.mxu0 0.0
        %417 = vmatprep.subr.mxu0 0.0
        %418 = vmatpush1.msra.mxu0 0.0
        %419 = vmatprep.subr.mxu0 0.0
        %420 = vmatpush1.msra.mxu0 0.0
        %421 = vmatprep.subr.mxu0 0.0
        %422 = vmatpush1.msra.mxu0 0.0
        %423 = vmatprep.subr.mxu0 0.0
        %424 = vmatpush1.msra.mxu0 0.0
        %425 = vmatprep.subr.mxu0 0.0
        %426 = vmatpush1.msra.mxu0 0.0
        %427 = vmatprep.subr.mxu0 0.0
        %428 = vmatpush1.msra.mxu0 0.0
        %429 = vmatprep.subr.mxu0 0.0
        %430 = vmatpush1.msra.mxu0 0.0
        %431 = vmatprep.subr.mxu0 0.0
        %432 = vmatpush1.msra.mxu0 0.0
        %433 = vmatprep.subr.mxu0 0.0
        %434 = vmatpush1.msra.mxu0 0.0
        %435 = vmatprep.subr.mxu0 0.0
        %436 = vmatpush1.msra.mxu0 0.0
        %437 = vmatprep.subr.mxu0 0.0
        %438 = vmatpush1.msra.mxu0 0.0
        %439 = vmatprep.subr.mxu0 0.0
        %440 = vmatpush1.msra.mxu0 0.0
        %441 = vmatprep.subr.mxu0 0.0
        %442 = vmatpush1.msra.mxu0 0.0
        %443 = vmatprep.subr.mxu0 0.0
        %444 = vmatpush1.msra.mxu0 0.0
        %445 = vmatprep.subr.mxu0 0.0
        %446 = vmatpush1.msra.mxu0 0.0
        %447 = vmatprep.subr.mxu0 0.0
        %448 = vmatpush1.msra.mxu0 0.0
        %449 = vmatprep.subr.mxu0 0.0
        %450 = vmatpush1.msra.mxu0 0.0
        %451 = vmatprep.subr.mxu0 0.0
        %452 = vmatpush1.msra.mxu0 0.0
        %453 = vmatprep.subr.mxu0 0.0
        %454 = vmatpush1.msra.mxu0 0.0
        %455 = vmatprep.subr.mxu0 0.0
        %456 = vmatpush1.msra.mxu0 0.0
        %457 = vmatprep.subr.mxu0 0.0
        %458 = vmatpush1.msra.mxu0 0.0
        %459 = vmatprep.subr.mxu0 0.0
        %460 = vmatpush1.msra.mxu0 0.0
        %461 = vmatprep.subr.mxu0 0.0
        %462 = vmatpush1.msra.mxu0 0.0
        %463 = vmatprep.subr.mxu0 0.0
        %464 = vmatpush1.msra.mxu0 0.0
        %465 = vmatprep.subr.mxu0 0.0
        %466 = vmatpush1.msra.mxu0 0.0
        %467 = vmatprep.subr.mxu0 0.0
        %468 = vmatpush1.msra.mxu0 0.0
        %469 = vmatprep.mubr.f32.mxu0 0.0
        %v470 = vand.u32 %v239, 4294901760
        %v471 = vsub.f32 %v239, %v470
        %472 = vmatmul.mubr.f32.gmra.mrb[0].mxu0 %v471
        %v473 = vpop.f32.mrb[0].mxu0
        %v474 = vadd.f32 %v397, %v473
        %v475 = vpop.f32.mrb[0].mxu0
        %v476 = vadd.f32 %v399, %v475
        %477 = vdwg.mxu0
        %v478 = vand.u32 %v229, 4294901760
        %479 = vmatprep.subr.mxu0 %v478
        %v480 = vand.u32 %v228, 4294901760
        %481 = vmatpush1.msra.mxu0 %v480
        %482 = vmatprep.subr.mxu0 0.0
        %483 = vmatpush1.msra.mxu0 0.0
        %484 = vmatprep.subr.mxu0 0.0
        %485 = vmatpush1.msra.mxu0 0.0
        %486 = vmatprep.subr.mxu0 0.0
        %487 = vmatpush1.msra.mxu0 0.0
        %488 = vmatprep.subr.mxu0 0.0
        %489 = vmatpush1.msra.mxu0 0.0
        %490 = vmatprep.subr.mxu0 0.0
        %491 = vmatpush1.msra.mxu0 0.0
        %492 = vmatprep.subr.mxu0 0.0
        %493 = vmatpush1.msra.mxu0 0.0
        %494 = vmatprep.subr.mxu0 0.0
        %495 = vmatpush1.msra.mxu0 0.0
        %496 = vmatprep.subr.mxu0 0.0
        %497 = vmatpush1.msra.mxu0 0.0
        %498 = vmatprep.subr.mxu0 0.0
        %499 = vmatpush1.msra.mxu0 0.0
        %500 = vmatprep.subr.mxu0 0.0
        %501 = vmatpush1.msra.mxu0 0.0
        %502 = vmatprep.subr.mxu0 0.0
        %503 = vmatpush1.msra.mxu0 0.0
        %504 = vmatprep.subr.mxu0 0.0
        %505 = vmatpush1.msra.mxu0 0.0
        %506 = vmatprep.subr.mxu0 0.0
        %507 = vmatpush1.msra.mxu0 0.0
        %508 = vmatprep.subr.mxu0 0.0
        %509 = vmatpush1.msra.mxu0 0.0
        %510 = vmatprep.subr.mxu0 0.0
        %511 = vmatpush1.msra.mxu0 0.0
        %512 = vmatprep.subr.mxu0 0.0
        %513 = vmatpush1.msra.mxu0 0.0
        %514 = vmatprep.subr.mxu0 0.0
        %515 = vmatpush1.msra.mxu0 0.0
        %516 = vmatprep.subr.mxu0 0.0
        %517 = vmatpush1.msra.mxu0 0.0
        %518 = vmatprep.subr.mxu0 0.0
        %519 = vmatpush1.msra.mxu0 0.0
        %520 = vmatprep.subr.mxu0 0.0
        %521 = vmatpush1.msra.mxu0 0.0
        %522 = vmatprep.subr.mxu0 0.0
        %523 = vmatpush1.msra.mxu0 0.0
        %524 = vmatprep.subr.mxu0 0.0
        %525 = vmatpush1.msra.mxu0 0.0
        %526 = vmatprep.subr.mxu0 0.0
        %527 = vmatpush1.msra.mxu0 0.0
        %528 = vmatprep.subr.mxu0 0.0
        %529 = vmatpush1.msra.mxu0 0.0
        %530 = vmatprep.subr.mxu0 0.0
        %531 = vmatpush1.msra.mxu0 0.0
        %532 = vmatprep.subr.mxu0 0.0
        %533 = vmatpush1.msra.mxu0 0.0
        %534 = vmatprep.subr.mxu0 0.0
        %535 = vmatpush1.msra.mxu0 0.0
        %536 = vmatprep.subr.mxu0 0.0
        %537 = vmatpush1.msra.mxu0 0.0
        %538 = vmatprep.subr.mxu0 0.0
        %539 = vmatpush1.msra.mxu0 0.0
        %540 = vmatprep.subr.mxu0 0.0
        %541 = vmatpush1.msra.mxu0 0.0
        %542 = vmatprep.subr.mxu0 0.0
        %543 = vmatpush1.msra.mxu0 0.0
        %544 = vmatprep.mubr.f32.mxu0 0.0
        %v545 = vand.u32 %v239, 4294901760
        %v546 = vsub.f32 %v239, %v545
        %v547 = vand.u32 %v546, 4294901760
        %548 = vmatmul.mubr.f32.gmra.mrb[0].mxu0 %v547
        %v549 = vpop.f32.mrb[0].mxu0
        %v550 = vadd.f32 %v474, %v549
        %v551 = vpop.f32.mrb[0].mxu0
        %v552 = vadd.f32 %v476, %v551
        %553 = vdwg.mxu0
        %v554 = vand.u32 %v229, 4294901760
        %v555 = vsub.f32 %v229, %v554
        %v556 = vand.u32 %v555, 4294901760
        %557 = vmatprep.subr.mxu0 %v556
        %v558 = vand.u32 %v228, 4294901760
        %v559 = vsub.f32 %v228, %v558
        %v560 = vand.u32 %v559, 4294901760
        %561 = vmatpush1.msra.mxu0 %v560
        %562 = vmatprep.subr.mxu0 0.0
        %563 = vmatpush1.msra.mxu0 0.0
        %564 = vmatprep.subr.mxu0 0.0
        %565 = vmatpush1.msra.mxu0 0.0
        %566 = vmatprep.subr.mxu0 0.0
        %567 = vmatpush1.msra.mxu0 0.0
        %568 = vmatprep.subr.mxu0 0.0
        %569 = vmatpush1.msra.mxu0 0.0
        %570 = vmatprep.subr.mxu0 0.0
        %571 = vmatpush1.msra.mxu0 0.0
        %572 = vmatprep.subr.mxu0 0.0
        %573 = vmatpush1.msra.mxu0 0.0
        %574 = vmatprep.subr.mxu0 0.0
        %575 = vmatpush1.msra.mxu0 0.0
        %576 = vmatprep.subr.mxu0 0.0
        %577 = vmatpush1.msra.mxu0 0.0
        %578 = vmatprep.subr.mxu0 0.0
        %579 = vmatpush1.msra.mxu0 0.0
        %580 = vmatprep.subr.mxu0 0.0
        %581 = vmatpush1.msra.mxu0 0.0
        %582 = vmatprep.subr.mxu0 0.0
        %583 = vmatpush1.msra.mxu0 0.0
        %584 = vmatprep.subr.mxu0 0.0
        %585 = vmatpush1.msra.mxu0 0.0
        %586 = vmatprep.subr.mxu0 0.0
        %587 = vmatpush1.msra.mxu0 0.0
        %588 = vmatprep.subr.mxu0 0.0
        %589 = vmatpush1.msra.mxu0 0.0
        %590 = vmatprep.subr.mxu0 0.0
        %591 = vmatpush1.msra.mxu0 0.0
        %592 = vmatprep.subr.mxu0 0.0
        %593 = vmatpush1.msra.mxu0 0.0
        %594 = vmatprep.subr.mxu0 0.0
        %595 = vmatpush1.msra.mxu0 0.0
        %596 = vmatprep.subr.mxu0 0.0
        %597 = vmatpush1.msra.mxu0 0.0
        %598 = vmatprep.subr.mxu0 0.0
        %599 = vmatpush1.msra.mxu0 0.0
        %600 = vmatprep.subr.mxu0 0.0
        %601 = vmatpush1.msra.mxu0 0.0
        %602 = vmatprep.subr.mxu0 0.0
        %603 = vmatpush1.msra.mxu0 0.0
        %604 = vmatprep.subr.mxu0 0.0
        %605 = vmatpush1.msra.mxu0 0.0
        %606 = vmatprep.subr.mxu0 0.0
        %607 = vmatpush1.msra.mxu0 0.0
        %608 = vmatprep.subr.mxu0 0.0
        %609 = vmatpush1.msra.mxu0 0.0
        %610 = vmatprep.subr.mxu0 0.0
        %611 = vmatpush1.msra.mxu0 0.0
        %612 = vmatprep.subr.mxu0 0.0
        %613 = vmatpush1.msra.mxu0 0.0
        %614 = vmatprep.subr.mxu0 0.0
        %615 = vmatpush1.msra.mxu0 0.0
        %616 = vmatprep.subr.mxu0 0.0
        %617 = vmatpush1.msra.mxu0 0.0
        %618 = vmatprep.subr.mxu0 0.0
        %619 = vmatpush1.msra.mxu0 0.0
        %620 = vmatprep.subr.mxu0 0.0
        %621 = vmatpush1.msra.mxu0 0.0
        %622 = vmatprep.subr.mxu0 0.0
        %623 = vmatpush1.msra.mxu0 0.0
        %624 = vmatprep.mubr.f32.mxu0 0.0
        %v625 = vand.u32 %v239, 4294901760
        %626 = vmatmul.mubr.f32.gmra.mrb[0].mxu0 %v625
        %v627 = vpop.f32.mrb[0].mxu0
        %v628 = vadd.f32 %v550, %v627
        %v629 = vpop.f32.mrb[0].mxu0
        %v630 = vadd.f32 %v552, %v629
        %631 = vdwg.mxu0
        %v632 = vand.u32 %v229, 4294901760
        %633 = vmatprep.subr.mxu0 %v632
        %v634 = vand.u32 %v228, 4294901760
        %635 = vmatpush1.msra.mxu0 %v634
        %636 = vmatprep.subr.mxu0 0.0
        %637 = vmatpush1.msra.mxu0 0.0
        %638 = vmatprep.subr.mxu0 0.0
        %639 = vmatpush1.msra.mxu0 0.0
        %640 = vmatprep.subr.mxu0 0.0
        %641 = vmatpush1.msra.mxu0 0.0
        %642 = vmatprep.subr.mxu0 0.0
        %643 = vmatpush1.msra.mxu0 0.0
        %644 = vmatprep.subr.mxu0 0.0
        %645 = vmatpush1.msra.mxu0 0.0
        %646 = vmatprep.subr.mxu0 0.0
        %647 = vmatpush1.msra.mxu0 0.0
        %648 = vmatprep.subr.mxu0 0.0
        %649 = vmatpush1.msra.mxu0 0.0
        %650 = vmatprep.subr.mxu0 0.0
        %651 = vmatpush1.msra.mxu0 0.0
        %652 = vmatprep.subr.mxu0 0.0
        %653 = vmatpush1.msra.mxu0 0.0
        %654 = vmatprep.subr.mxu0 0.0
        %655 = vmatpush1.msra.mxu0 0.0
        %656 = vmatprep.subr.mxu0 0.0
        %657 = vmatpush1.msra.mxu0 0.0
        %658 = vmatprep.subr.mxu0 0.0
        %659 = vmatpush1.msra.mxu0 0.0
        %660 = vmatprep.subr.mxu0 0.0
        %661 = vmatpush1.msra.mxu0 0.0
        %662 = vmatprep.subr.mxu0 0.0
        %663 = vmatpush1.msra.mxu0 0.0
        %664 = vmatprep.subr.mxu0 0.0
        %665 = vmatpush1.msra.mxu0 0.0
        %666 = vmatprep.subr.mxu0 0.0
        %667 = vmatpush1.msra.mxu0 0.0
        %668 = vmatprep.subr.mxu0 0.0
        %669 = vmatpush1.msra.mxu0 0.0
        %670 = vmatprep.subr.mxu0 0.0
        %671 = vmatpush1.msra.mxu0 0.0
        %672 = vmatprep.subr.mxu0 0.0
        %673 = vmatpush1.msra.mxu0 0.0
        %674 = vmatprep.subr.mxu0 0.0
        %675 = vmatpush1.msra.mxu0 0.0
        %676 = vmatprep.subr.mxu0 0.0
        %677 = vmatpush1.msra.mxu0 0.0
        %678 = vmatprep.subr.mxu0 0.0
        %679 = vmatpush1.msra.mxu0 0.0
        %680 = vmatprep.subr.mxu0 0.0
        %681 = vmatpush1.msra.mxu0 0.0
        %682 = vmatprep.subr.mxu0 0.0
        %683 = vmatpush1.msra.mxu0 0.0
        %684 = vmatprep.subr.mxu0 0.0
        %685 = vmatpush1.msra.mxu0 0.0
        %686 = vmatprep.subr.mxu0 0.0
        %687 = vmatpush1.msra.mxu0 0.0
        %688 = vmatprep.subr.mxu0 0.0
        %689 = vmatpush1.msra.mxu0 0.0
        %690 = vmatprep.subr.mxu0 0.0
        %691 = vmatpush1.msra.mxu0 0.0
        %692 = vmatprep.subr.mxu0 0.0
        %693 = vmatpush1.msra.mxu0 0.0
        %694 = vmatprep.subr.mxu0 0.0
        %695 = vmatpush1.msra.mxu0 0.0
        %696 = vmatprep.subr.mxu0 0.0
        %697 = vmatpush1.msra.mxu0 0.0
        %698 = vmatprep.mubr.f32.mxu0 0.0
        %v699 = vand.u32 %v239, 4294901760
        %700 = vmatmul.mubr.f32.gmra.mrb[0].mxu0 %v699
        %v701 = vpop.f32.mrb[0].mxu0
        %v702 = vadd.f32 %v628, %v701
        %v703 = vpop.f32.mrb[0].mxu0
        %v704 = vadd.f32 %v630, %v703
        %705 = vdwg.mxu0
        %v706 = vsub.f32 0.0, %v702
        %v707 = vsub.f32 0.0, %v704
        %v708 = vmul.f32 %v706, 1.442695
        %v709 = vpow.pop %v708
        %v710 = vmul.f32 %v707, 1.442695
        %v711 = vpow.pop %v710
        %v712 = vadd.f32 %v709, 1.0
        %v713 = vadd.f32 %v711, 1.0
        %v714 = vrcp.pop %v712
        %v715 = vmul.f32 1.0, %v714
        %v716 = vrcp.pop %v713
        %v717 = vmul.f32 1.0, %v716
        %v718 = vmul.f32 %v228, %v715
        %v719 = vmul.f32 %v229, %v717
        %v720 = vrot.slane %v718, 4
        %v721 = vadd.f32 %v718, %v720
        %v722 = vrot.slane %v721, 2
        %v723 = vadd.f32 %v721, %v722
        %v724 = vrot.slane %v723, 1
        %v725 = vadd.f32 %v723, %v724
        %v726 = vrot.slane %v719, 4
        %v727 = vadd.f32 %v719, %v726
        %v728 = vrot.slane %v727, 2
        %v729 = vadd.f32 %v727, %v728
        %v730 = vrot.slane %v729, 1
        %v731 = vadd.f32 %v729, %v730
        %v732 = vmul.f32 %v725, 0.125
        %v733 = vmul.f32 %v731, 0.125
        %v734 = vrot.slane %v718, 4
        %v735 = vmax.f32 %v718, %v734
        %v736 = vrot.slane %v735, 2
        %v737 = vmax.f32 %v735, %v736
        %v738 = vrot.slane %v737, 1
        %v739 = vmax.f32 %v737, %v738
        %v740 = vrot.slane %v719, 4
        %v741 = vmax.f32 %v719, %v740
        %v742 = vrot.slane %v741, 2
        %v743 = vmax.f32 %v741, %v742
        %v744 = vrot.slane %v743, 1
        %v745 = vmax.f32 %v743, %v744
        %vm746 = vcmask 1040384
        %v747 = vsel %vm746, %v732, %v739
        %v748 = vsel %vm746, %v733, %v745
        %v749 = vlaneseq
        %v750 = vand.u32 %v749, 127
        %v751 = vadd.s32 %v750, 128
        %v752 = vcvt.s32.f32 %v750
        %v753 = vcvt.s32.f32 %v751
        %v754 = vadd.f32 %v752, 0.5
        %v755 = vadd.f32 %v753, 0.5
        %v756 = vmul.f32 %v754, 0.0625
        %v757 = vmul.f32 %v755, 0.0625
        %v758 = vcvt.f32.s32.to.zero.pseudo %v756
        %v759 = vcvt.f32.s32.to.zero.pseudo %v757
        %v760 = vmul.u32 %v758, 16
        %v761 = vmul.u32 %v759, 16
        %v762 = vsub.s32 %v750, %v760
        %v763 = vsub.s32 %v751, %v761
        %v764 = vadd.s32 %v758, 4294967293
        %v765 = vadd.s32 %v759, 4294967293
        %vm766 = vcmp.ge.s32.totalorder %v764, 0
        %vm767 = vcmp.ge.s32.totalorder %v765, 0
        %vm768 = vcmp.lt.s32.totalorder %v764, 16
        %vm769 = vcmp.lt.s32.totalorder %v765, 16
        %vm770 = vmand %vm766, %vm768
        %vm771 = vmand %vm767, %vm769
        %v772 = vadd.s32 %v762, 4294967293
        %v773 = vadd.s32 %v763, 4294967293
        %vm774 = vcmp.ge.s32.totalorder %v772, 0
        %vm775 = vcmp.ge.s32.totalorder %v773, 0
        %vm776 = vcmp.lt.s32.totalorder %v772, 16
        %vm777 = vcmp.lt.s32.totalorder %v773, 16
        %vm778 = vmand %vm774, %vm776
        %vm779 = vmand %vm775, %vm777
        %vm780 = vmand %vm770, %vm778
        %vm781 = vmand %vm771, %vm779
        %783 = vrot.lane.b32.xlu0 %v748, 51
        %v784 = vpop.permute.xlu0 %783
        %787 = vrot.lane.b32.xlu0 %v747, 51
        %v788 = vpop.permute.xlu0 %787
        %vm789 = vcmask 416768
        %v790 = vsel %vm789, %v788, %v784
        %v793 = vsel %vm789, %v784, %v788
        %v794 = vsel %vm780, %v793, 0.0
        %v795 = vsel %vm781, %v790, 0.0
        %s796 = sld [smem:[#allocation2]]
        %v797 = vstv %s796
        %v798 = vmul.f32 %v797, %v794
        %v799 = vmul.f32 %v797, %v795
        %v800 = vadd.f32 %v798, 0.0
        %v801 = vadd.f32 %v799, 0.0
        %s802 = sld [smem:[#allocation2 + $0x31]]
        %v803 = vstv %s802
        %v804 = vmul.f32 %v803, %v794
        %v805 = vmul.f32 %v803, %v795
        %v808 = vrot.slane %v804, 1
        %v809 = vrot.slane %v805, 1
        %v812 = vadd.f32 %v800, %v808
        %v813 = vadd.f32 %v801, %v809
        %v814 = vadd.s32 %v762, 4294967294
        %v815 = vadd.s32 %v763, 4294967294
        %vm816 = vcmp.ge.s32.totalorder %v814, 0
        %vm817 = vcmp.ge.s32.totalorder %v815, 0
        %vm818 = vcmp.lt.s32.totalorder %v814, 16
        %vm819 = vcmp.lt.s32.totalorder %v815, 16
        %vm820 = vmand %vm816, %vm818
        %vm821 = vmand %vm817, %vm819
        %vm822 = vmand %vm770, %vm820
        %vm823 = vmand %vm771, %vm821
        %824 = vrot.lane.b32.xlu0 %v748, 50
        %v825 = vpop.permute.xlu0 %824
        %827 = vrot.lane.b32.xlu0 %v747, 50
        %v828 = vpop.permute.xlu0 %827
        %vm829 = vcmask 408576
        %v830 = vsel %vm829, %v828, %v825
        %v833 = vsel %vm829, %v825, %v828
        %v834 = vsel %vm822, %v833, 0.0
        %v835 = vsel %vm823, %v830, 0.0
        %s836 = sld [smem:[#allocation2 + $0x1]]
        %v837 = vstv %s836
        %v838 = vmul.f32 %v837, %v834
        %v839 = vmul.f32 %v837, %v835
        %v840 = vadd.f32 %v812, %v838
        %v841 = vadd.f32 %v813, %v839
        %s842 = sld [smem:[#allocation2 + $0x32]]
        %v843 = vstv %s842
        %v844 = vmul.f32 %v843, %v834
        %v845 = vmul.f32 %v843, %v835
        %v848 = vrot.slane %v844, 1
        %v849 = vrot.slane %v845, 1
        %v852 = vadd.f32 %v840, %v848
        %v853 = vadd.f32 %v841, %v849
        %v854 = vadd.s32 %v762, 4294967295
        %v855 = vadd.s32 %v763, 4294967295
        %vm856 = vcmp.ge.s32.totalorder %v854, 0
        %vm857 = vcmp.ge.s32.totalorder %v855, 0
        %vm858 = vcmp.lt.s32.totalorder %v854, 16
        %vm859 = vcmp.lt.s32.totalorder %v855, 16
        %vm860 = vmand %vm856, %vm858
        %vm861 = vmand %vm857, %vm859
        %vm862 = vmand %vm770, %vm860
        %vm863 = vmand %vm771, %vm861
        %864 = vrot.lane.b32.xlu0 %v748, 49
        %v865 = vpop.permute.xlu0 %864
        %867 = vrot.lane.b32.xlu0 %v747, 49
        %v868 = vpop.permute.xlu0 %867
        %vm869 = vcmask 400384
        %v870 = vsel %vm869, %v868, %v865
        %v873 = vsel %vm869, %v865, %v868
        %v874 = vsel %vm862, %v873, 0.0
        %v875 = vsel %vm863, %v870, 0.0
        %s876 = sld [smem:[#allocation2 + $0x2]]
        %v877 = vstv %s876
        %v878 = vmul.f32 %v877, %v874
        %v879 = vmul.f32 %v877, %v875
        %v880 = vadd.f32 %v852, %v878
        %v881 = vadd.f32 %v853, %v879
        %s882 = sld [smem:[#allocation2 + $0x33]]
        %v883 = vstv %s882
        %v884 = vmul.f32 %v883, %v874
        %v885 = vmul.f32 %v883, %v875
        %v888 = vrot.slane %v884, 1
        %v889 = vrot.slane %v885, 1
        %v892 = vadd.f32 %v880, %v888
        %v893 = vadd.f32 %v881, %v889
        %vm894 = vcmp.ge.s32.totalorder %v762, 0
        %vm895 = vcmp.ge.s32.totalorder %v763, 0
        %vm896 = vcmp.lt.s32.totalorder %v762, 16
        %vm897 = vcmp.lt.s32.totalorder %v763, 16
        %vm898 = vmand %vm894, %vm896
        %vm899 = vmand %vm895, %vm897
        %vm900 = vmand %vm770, %vm898
        %vm901 = vmand %vm771, %vm899
        %902 = vrot.lane.b32.xlu0 %v748, 48
        %v903 = vpop.permute.xlu0 %902
        %905 = vrot.lane.b32.xlu0 %v747, 48
        %v906 = vpop.permute.xlu0 %905
        %vm907 = vcmask 392192
        %v908 = vsel %vm907, %v906, %v903
        %v911 = vsel %vm907, %v903, %v906
        %v912 = vsel %vm900, %v911, 0.0
        %v913 = vsel %vm901, %v908, 0.0
        %s914 = sld [smem:[#allocation2 + $0x3]]
        %v915 = vstv %s914
        %v916 = vmul.f32 %v915, %v912
        %v917 = vmul.f32 %v915, %v913
        %v918 = vadd.f32 %v892, %v916
        %v919 = vadd.f32 %v893, %v917
        %s920 = sld [smem:[#allocation2 + $0x34]]
        %v921 = vstv %s920
        %v922 = vmul.f32 %v921, %v912
        %v923 = vmul.f32 %v921, %v913
        %v926 = vrot.slane %v922, 1
        %v927 = vrot.slane %v923, 1
        %v930 = vadd.f32 %v918, %v926
        %v931 = vadd.f32 %v919, %v927
        %v932 = vadd.s32 %v762, 1
        %v933 = vadd.s32 %v763, 1
        %vm934 = vcmp.ge.s32.totalorder %v932, 0
        %vm935 = vcmp.ge.s32.totalorder %v933, 0
        %vm936 = vcmp.lt.s32.totalorder %v932, 16
        %vm937 = vcmp.lt.s32.totalorder %v933, 16
        %vm938 = vmand %vm934, %vm936
        %vm939 = vmand %vm935, %vm937
        %vm940 = vmand %vm770, %vm938
        %vm941 = vmand %vm771, %vm939
        %942 = vrot.lane.b32.xlu0 %v748, 47
        %v943 = vpop.permute.xlu0 %942
        %945 = vrot.lane.b32.xlu0 %v747, 47
        %v946 = vpop.permute.xlu0 %945
        %vm947 = vcmask 384000
        %v948 = vsel %vm947, %v946, %v943
        %v951 = vsel %vm947, %v943, %v946
        %v952 = vsel %vm940, %v951, 0.0
        %v953 = vsel %vm941, %v948, 0.0
        %s954 = sld [smem:[#allocation2 + $0x4]]
        %v955 = vstv %s954
        %v956 = vmul.f32 %v955, %v952
        %v957 = vmul.f32 %v955, %v953
        %v958 = vadd.f32 %v930, %v956
        %v959 = vadd.f32 %v931, %v957
        %s960 = sld [smem:[#allocation2 + $0x35]]
        %v961 = vstv %s960
        %v962 = vmul.f32 %v961, %v952
        %v963 = vmul.f32 %v961, %v953
        %v966 = vrot.slane %v962, 1
        %v967 = vrot.slane %v963, 1
        %v970 = vadd.f32 %v958, %v966
        %v971 = vadd.f32 %v959, %v967
        %v972 = vadd.s32 %v762, 2
        %v973 = vadd.s32 %v763, 2
        %vm974 = vcmp.ge.s32.totalorder %v972, 0
        %vm975 = vcmp.ge.s32.totalorder %v973, 0
        %vm976 = vcmp.lt.s32.totalorder %v972, 16
        %vm977 = vcmp.lt.s32.totalorder %v973, 16
        %vm978 = vmand %vm974, %vm976
        %vm979 = vmand %vm975, %vm977
        %vm980 = vmand %vm770, %vm978
        %vm981 = vmand %vm771, %vm979
        %982 = vrot.lane.b32.xlu0 %v748, 46
        %v983 = vpop.permute.xlu0 %982
        %985 = vrot.lane.b32.xlu0 %v747, 46
        %v986 = vpop.permute.xlu0 %985
        %vm987 = vcmask 375808
        %v988 = vsel %vm987, %v986, %v983
        %v991 = vsel %vm987, %v983, %v986
        %v992 = vsel %vm980, %v991, 0.0
        %v993 = vsel %vm981, %v988, 0.0
        %s994 = sld [smem:[#allocation2 + $0x5]]
        %v995 = vstv %s994
        %v996 = vmul.f32 %v995, %v992
        %v997 = vmul.f32 %v995, %v993
        %v998 = vadd.f32 %v970, %v996
        %v999 = vadd.f32 %v971, %v997
        %s1000 = sld [smem:[#allocation2 + $0x36]]
        %v1001 = vstv %s1000
        %v1002 = vmul.f32 %v1001, %v992
        %v1003 = vmul.f32 %v1001, %v993
        %v1006 = vrot.slane %v1002, 1
        %v1007 = vrot.slane %v1003, 1
        %v1010 = vadd.f32 %v998, %v1006
        %v1011 = vadd.f32 %v999, %v1007
        %v1012 = vadd.s32 %v762, 3
        %v1013 = vadd.s32 %v763, 3
        %vm1014 = vcmp.ge.s32.totalorder %v1012, 0
        %vm1015 = vcmp.ge.s32.totalorder %v1013, 0
        %vm1016 = vcmp.lt.s32.totalorder %v1012, 16
        %vm1017 = vcmp.lt.s32.totalorder %v1013, 16
        %vm1018 = vmand %vm1014, %vm1016
        %vm1019 = vmand %vm1015, %vm1017
        %vm1020 = vmand %vm770, %vm1018
        %vm1021 = vmand %vm771, %vm1019
        %1022 = vrot.lane.b32.xlu0 %v748, 45
        %v1023 = vpop.permute.xlu0 %1022
        %1025 = vrot.lane.b32.xlu0 %v747, 45
        %v1026 = vpop.permute.xlu0 %1025
        %vm1027 = vcmask 367616
        %v1028 = vsel %vm1027, %v1026, %v1023
        %v1031 = vsel %vm1027, %v1023, %v1026
        %v1032 = vsel %vm1020, %v1031, 0.0
        %v1033 = vsel %vm1021, %v1028, 0.0
        %s1034 = sld [smem:[#allocation2 + $0x6]]
        %v1035 = vstv %s1034
        %v1036 = vmul.f32 %v1035, %v1032
        %v1037 = vmul.f32 %v1035, %v1033
        %v1038 = vadd.f32 %v1010, %v1036
        %v1039 = vadd.f32 %v1011, %v1037
        %s1040 = sld [smem:[#allocation2 + $0x37]]
        %v1041 = vstv %s1040
        %v1042 = vmul.f32 %v1041, %v1032
        %v1043 = vmul.f32 %v1041, %v1033
        %v1046 = vrot.slane %v1042, 1
        %v1047 = vrot.slane %v1043, 1
        %v1050 = vadd.f32 %v1038, %v1046
        %v1051 = vadd.f32 %v1039, %v1047
        %v1052 = vadd.s32 %v758, 4294967294
        %v1053 = vadd.s32 %v759, 4294967294
        %vm1054 = vcmp.ge.s32.totalorder %v1052, 0
        %vm1055 = vcmp.ge.s32.totalorder %v1053, 0
        %vm1056 = vcmp.lt.s32.totalorder %v1052, 16
        %vm1057 = vcmp.lt.s32.totalorder %v1053, 16
        %vm1058 = vmand %vm1054, %vm1056
        %vm1059 = vmand %vm1055, %vm1057
        %vm1060 = vmand %vm1058, %vm778
        %vm1061 = vmand %vm1059, %vm779
        %1062 = vrot.lane.b32.xlu0 %v748, 35
        %v1063 = vpop.permute.xlu0 %1062
        %1065 = vrot.lane.b32.xlu0 %v747, 35
        %v1066 = vpop.permute.xlu0 %1065
        %vm1067 = vcmask 285696
        %v1068 = vsel %vm1067, %v1066, %v1063
        %v1071 = vsel %vm1067, %v1063, %v1066
        %v1072 = vsel %vm1060, %v1071, 0.0
        %v1073 = vsel %vm1061, %v1068, 0.0
        %s1074 = sld [smem:[#allocation2 + $0x7]]
        %v1075 = vstv %s1074
        %v1076 = vmul.f32 %v1075, %v1072
        %v1077 = vmul.f32 %v1075, %v1073
        %v1078 = vadd.f32 %v1050, %v1076
        %v1079 = vadd.f32 %v1051, %v1077
        %s1080 = sld [smem:[#allocation2 + $0x38]]
        %v1081 = vstv %s1080
        %v1082 = vmul.f32 %v1081, %v1072
        %v1083 = vmul.f32 %v1081, %v1073
        %v1086 = vrot.slane %v1082, 1
        %v1087 = vrot.slane %v1083, 1
        %v1090 = vadd.f32 %v1078, %v1086
        %v1091 = vadd.f32 %v1079, %v1087
        %vm1092 = vmand %vm1058, %vm820
        %vm1093 = vmand %vm1059, %vm821
        %1094 = vrot.lane.b32.xlu0 %v748, 34
        %v1095 = vpop.permute.xlu0 %1094
        %1097 = vrot.lane.b32.xlu0 %v747, 34
        %v1098 = vpop.permute.xlu0 %1097
        %vm1099 = vcmask 277504
        %v1100 = vsel %vm1099, %v1098, %v1095
        %v1103 = vsel %vm1099, %v1095, %v1098
        %v1104 = vsel %vm1092, %v1103, 0.0
        %v1105 = vsel %vm1093, %v1100, 0.0
        %s1106 = sld [smem:[#allocation2 + $0x8]]
        %v1107 = vstv %s1106
        %v1108 = vmul.f32 %v1107, %v1104
        %v1109 = vmul.f32 %v1107, %v1105
        %v1110 = vadd.f32 %v1090, %v1108
        %v1111 = vadd.f32 %v1091, %v1109
        %s1112 = sld [smem:[#allocation2 + $0x39]]
        %v1113 = vstv %s1112
        %v1114 = vmul.f32 %v1113, %v1104
        %v1115 = vmul.f32 %v1113, %v1105
        %v1118 = vrot.slane %v1114, 1
        %v1119 = vrot.slane %v1115, 1
        %v1122 = vadd.f32 %v1110, %v1118
        %v1123 = vadd.f32 %v1111, %v1119
        %vm1124 = vmand %vm1058, %vm860
        %vm1125 = vmand %vm1059, %vm861
        %1126 = vrot.lane.b32.xlu0 %v748, 33
        %v1127 = vpop.permute.xlu0 %1126
        %1129 = vrot.lane.b32.xlu0 %v747, 33
        %v1130 = vpop.permute.xlu0 %1129
        %vm1131 = vcmask 269312
        %v1132 = vsel %vm1131, %v1130, %v1127
        %v1135 = vsel %vm1131, %v1127, %v1130
        %v1136 = vsel %vm1124, %v1135, 0.0
        %v1137 = vsel %vm1125, %v1132, 0.0
        %s1138 = sld [smem:[#allocation2 + $0x9]]
        %v1139 = vstv %s1138
        %v1140 = vmul.f32 %v1139, %v1136
        %v1141 = vmul.f32 %v1139, %v1137
        %v1142 = vadd.f32 %v1122, %v1140
        %v1143 = vadd.f32 %v1123, %v1141
        %s1144 = sld [smem:[#allocation2 + $0x3a]]
        %v1145 = vstv %s1144
        %v1146 = vmul.f32 %v1145, %v1136
        %v1147 = vmul.f32 %v1145, %v1137
        %v1150 = vrot.slane %v1146, 1
        %v1151 = vrot.slane %v1147, 1
        %v1154 = vadd.f32 %v1142, %v1150
        %v1155 = vadd.f32 %v1143, %v1151
        %vm1156 = vmand %vm1058, %vm898
        %vm1157 = vmand %vm1059, %vm899
        %1158 = vrot.lane.b32.xlu0 %v748, 32
        %v1159 = vpop.permute.xlu0 %1158
        %1161 = vrot.lane.b32.xlu0 %v747, 32
        %v1162 = vpop.permute.xlu0 %1161
        %vm1163 = vcmask 261120
        %v1164 = vsel %vm1163, %v1162, %v1159
        %v1167 = vsel %vm1163, %v1159, %v1162
        %v1168 = vsel %vm1156, %v1167, 0.0
        %v1169 = vsel %vm1157, %v1164, 0.0
        %s1170 = sld [smem:[#allocation2 + $0xa]]
        %v1171 = vstv %s1170
        %v1172 = vmul.f32 %v1171, %v1168
        %v1173 = vmul.f32 %v1171, %v1169
        %v1174 = vadd.f32 %v1154, %v1172
        %v1175 = vadd.f32 %v1155, %v1173
        %s1176 = sld [smem:[#allocation2 + $0x3b]]
        %v1177 = vstv %s1176
        %v1178 = vmul.f32 %v1177, %v1168
        %v1179 = vmul.f32 %v1177, %v1169
        %v1182 = vrot.slane %v1178, 1
        %v1183 = vrot.slane %v1179, 1
        %v1186 = vadd.f32 %v1174, %v1182
        %v1187 = vadd.f32 %v1175, %v1183
        %vm1188 = vmand %vm1058, %vm938
        %vm1189 = vmand %vm1059, %vm939
        %1190 = vrot.lane.b32.xlu0 %v748, 31
        %v1191 = vpop.permute.xlu0 %1190
        %1193 = vrot.lane.b32.xlu0 %v747, 31
        %v1194 = vpop.permute.xlu0 %1193
        %vm1195 = vcmask 252928
        %v1196 = vsel %vm1195, %v1194, %v1191
        %v1199 = vsel %vm1195, %v1191, %v1194
        %v1200 = vsel %vm1188, %v1199, 0.0
        %v1201 = vsel %vm1189, %v1196, 0.0
        %s1202 = sld [smem:[#allocation2 + $0xb]]
        %v1203 = vstv %s1202
        %v1204 = vmul.f32 %v1203, %v1200
        %v1205 = vmul.f32 %v1203, %v1201
        %v1206 = vadd.f32 %v1186, %v1204
        %v1207 = vadd.f32 %v1187, %v1205
        %s1208 = sld [smem:[#allocation2 + $0x3c]]
        %v1209 = vstv %s1208
        %v1210 = vmul.f32 %v1209, %v1200
        %v1211 = vmul.f32 %v1209, %v1201
        %v1214 = vrot.slane %v1210, 1
        %v1215 = vrot.slane %v1211, 1
        %v1218 = vadd.f32 %v1206, %v1214
        %v1219 = vadd.f32 %v1207, %v1215
        %vm1220 = vmand %vm1058, %vm978
        %vm1221 = vmand %vm1059, %vm979
        %1222 = vrot.lane.b32.xlu0 %v748, 30
        %v1223 = vpop.permute.xlu0 %1222
        %1225 = vrot.lane.b32.xlu0 %v747, 30
        %v1226 = vpop.permute.xlu0 %1225
        %vm1227 = vcmask 244736
        %v1228 = vsel %vm1227, %v1226, %v1223
        %v1231 = vsel %vm1227, %v1223, %v1226
        %v1232 = vsel %vm1220, %v1231, 0.0
        %v1233 = vsel %vm1221, %v1228, 0.0
        %s1234 = sld [smem:[#allocation2 + $0xc]]
        %v1235 = vstv %s1234
        %v1236 = vmul.f32 %v1235, %v1232
        %v1237 = vmul.f32 %v1235, %v1233
        %v1238 = vadd.f32 %v1218, %v1236
        %v1239 = vadd.f32 %v1219, %v1237
        %s1240 = sld [smem:[#allocation2 + $0x3d]]
        %v1241 = vstv %s1240
        %v1242 = vmul.f32 %v1241, %v1232
        %v1243 = vmul.f32 %v1241, %v1233
        %v1246 = vrot.slane %v1242, 1
        %v1247 = vrot.slane %v1243, 1
        %v1250 = vadd.f32 %v1238, %v1246
        %v1251 = vadd.f32 %v1239, %v1247
        %vm1252 = vmand %vm1058, %vm1018
        %vm1253 = vmand %vm1059, %vm1019
        %1254 = vrot.lane.b32.xlu0 %v748, 29
        %v1255 = vpop.permute.xlu0 %1254
        %1257 = vrot.lane.b32.xlu0 %v747, 29
        %v1258 = vpop.permute.xlu0 %1257
        %vm1259 = vcmask 236544
        %v1260 = vsel %vm1259, %v1258, %v1255
        %v1263 = vsel %vm1259, %v1255, %v1258
        %v1264 = vsel %vm1252, %v1263, 0.0
        %v1265 = vsel %vm1253, %v1260, 0.0
        %s1266 = sld [smem:[#allocation2 + $0xd]]
        %v1267 = vstv %s1266
        %v1268 = vmul.f32 %v1267, %v1264
        %v1269 = vmul.f32 %v1267, %v1265
        %v1270 = vadd.f32 %v1250, %v1268
        %v1271 = vadd.f32 %v1251, %v1269
        %s1272 = sld [smem:[#allocation2 + $0x3e]]
        %v1273 = vstv %s1272
        %v1274 = vmul.f32 %v1273, %v1264
        %v1275 = vmul.f32 %v1273, %v1265
        %v1278 = vrot.slane %v1274, 1
        %v1279 = vrot.slane %v1275, 1
        %v1282 = vadd.f32 %v1270, %v1278
        %v1283 = vadd.f32 %v1271, %v1279
        %v1284 = vadd.s32 %v758, 4294967295
        %v1285 = vadd.s32 %v759, 4294967295
        %vm1286 = vcmp.ge.s32.totalorder %v1284, 0
        %vm1287 = vcmp.ge.s32.totalorder %v1285, 0
        %vm1288 = vcmp.lt.s32.totalorder %v1284, 16
        %vm1289 = vcmp.lt.s32.totalorder %v1285, 16
        %vm1290 = vmand %vm1286, %vm1288
        %vm1291 = vmand %vm1287, %vm1289
        %vm1292 = vmand %vm1290, %vm778
        %vm1293 = vmand %vm1291, %vm779
        %1294 = vrot.lane.b32.xlu0 %v748, 19
        %v1295 = vpop.permute.xlu0 %1294
        %1297 = vrot.lane.b32.xlu0 %v747, 19
        %v1298 = vpop.permute.xlu0 %1297
        %vm1299 = vcmask 154624
        %v1300 = vsel %vm1299, %v1298, %v1295
        %v1303 = vsel %vm1299, %v1295, %v1298
        %v1304 = vsel %vm1292, %v1303, 0.0
        %v1305 = vsel %vm1293, %v1300, 0.0
        %s1306 = sld [smem:[#allocation2 + $0xe]]
        %v1307 = vstv %s1306
        %v1308 = vmul.f32 %v1307, %v1304
        %v1309 = vmul.f32 %v1307, %v1305
        %v1310 = vadd.f32 %v1282, %v1308
        %v1311 = vadd.f32 %v1283, %v1309
        %s1312 = sld [smem:[#allocation2 + $0x3f]]
        %v1313 = vstv %s1312
        %v1314 = vmul.f32 %v1313, %v1304
        %v1315 = vmul.f32 %v1313, %v1305
        %v1318 = vrot.slane %v1314, 1
        %v1319 = vrot.slane %v1315, 1
        %v1322 = vadd.f32 %v1310, %v1318
        %v1323 = vadd.f32 %v1311, %v1319
        %vm1324 = vmand %vm1290, %vm820
        %vm1325 = vmand %vm1291, %vm821
        %1326 = vrot.lane.b32.xlu0 %v748, 18
        %v1327 = vpop.permute.xlu0 %1326
        %1329 = vrot.lane.b32.xlu0 %v747, 18
        %v1330 = vpop.permute.xlu0 %1329
        %vm1331 = vcmask 146432
        %v1332 = vsel %vm1331, %v1330, %v1327
        %v1335 = vsel %vm1331, %v1327, %v1330
        %v1336 = vsel %vm1324, %v1335, 0.0
        %v1337 = vsel %vm1325, %v1332, 0.0
        %s1338 = sld [smem:[#allocation2 + $0xf]]
        %v1339 = vstv %s1338
        %v1340 = vmul.f32 %v1339, %v1336
        %v1341 = vmul.f32 %v1339, %v1337
        %v1342 = vadd.f32 %v1322, %v1340
        %v1343 = vadd.f32 %v1323, %v1341
        %s1344 = sld [smem:[#allocation2 + $0x40]]
        %v1345 = vstv %s1344
        %v1346 = vmul.f32 %v1345, %v1336
        %v1347 = vmul.f32 %v1345, %v1337
        %v1350 = vrot.slane %v1346, 1
        %v1351 = vrot.slane %v1347, 1
        %v1354 = vadd.f32 %v1342, %v1350
        %v1355 = vadd.f32 %v1343, %v1351
        %vm1356 = vmand %vm1290, %vm860
        %vm1357 = vmand %vm1291, %vm861
        %1358 = vrot.lane.b32.xlu0 %v748, 17
        %v1359 = vpop.permute.xlu0 %1358
        %1361 = vrot.lane.b32.xlu0 %v747, 17
        %v1362 = vpop.permute.xlu0 %1361
        %vm1363 = vcmask 138240
        %v1364 = vsel %vm1363, %v1362, %v1359
        %v1367 = vsel %vm1363, %v1359, %v1362
        %v1368 = vsel %vm1356, %v1367, 0.0
        %v1369 = vsel %vm1357, %v1364, 0.0
        %s1370 = sld [smem:[#allocation2 + $0x10]]
        %v1371 = vstv %s1370
        %v1372 = vmul.f32 %v1371, %v1368
        %v1373 = vmul.f32 %v1371, %v1369
        %v1374 = vadd.f32 %v1354, %v1372
        %v1375 = vadd.f32 %v1355, %v1373
        %s1376 = sld [smem:[#allocation2 + $0x41]]
        %v1377 = vstv %s1376
        %v1378 = vmul.f32 %v1377, %v1368
        %v1379 = vmul.f32 %v1377, %v1369
        %v1382 = vrot.slane %v1378, 1
        %v1383 = vrot.slane %v1379, 1
        %v1386 = vadd.f32 %v1374, %v1382
        %v1387 = vadd.f32 %v1375, %v1383
        %vm1388 = vmand %vm1290, %vm898
        %vm1389 = vmand %vm1291, %vm899
        %1390 = vrot.lane.b32.xlu0 %v748, 16
        %v1391 = vpop.permute.xlu0 %1390
        %1393 = vrot.lane.b32.xlu0 %v747, 16
        %v1394 = vpop.permute.xlu0 %1393
        %vm1395 = vcmask 130048
        %v1396 = vsel %vm1395, %v1394, %v1391
        %v1399 = vsel %vm1395, %v1391, %v1394
        %v1400 = vsel %vm1388, %v1399, 0.0
        %v1401 = vsel %vm1389, %v1396, 0.0
        %s1402 = sld [smem:[#allocation2 + $0x11]]
        %v1403 = vstv %s1402
        %v1404 = vmul.f32 %v1403, %v1400
        %v1405 = vmul.f32 %v1403, %v1401
        %v1406 = vadd.f32 %v1386, %v1404
        %v1407 = vadd.f32 %v1387, %v1405
        %s1408 = sld [smem:[#allocation2 + $0x42]]
        %v1409 = vstv %s1408
        %v1410 = vmul.f32 %v1409, %v1400
        %v1411 = vmul.f32 %v1409, %v1401
        %v1414 = vrot.slane %v1410, 1
        %v1415 = vrot.slane %v1411, 1
        %v1418 = vadd.f32 %v1406, %v1414
        %v1419 = vadd.f32 %v1407, %v1415
        %vm1420 = vmand %vm1290, %vm938
        %vm1421 = vmand %vm1291, %vm939
        %1422 = vrot.lane.b32.xlu0 %v748, 15
        %v1423 = vpop.permute.xlu0 %1422
        %1425 = vrot.lane.b32.xlu0 %v747, 15
        %v1426 = vpop.permute.xlu0 %1425
        %vm1427 = vcmask 121856
        %v1428 = vsel %vm1427, %v1426, %v1423
        %v1431 = vsel %vm1427, %v1423, %v1426
        %v1432 = vsel %vm1420, %v1431, 0.0
        %v1433 = vsel %vm1421, %v1428, 0.0
        %s1434 = sld [smem:[#allocation2 + $0x12]]
        %v1435 = vstv %s1434
        %v1436 = vmul.f32 %v1435, %v1432
        %v1437 = vmul.f32 %v1435, %v1433
        %v1438 = vadd.f32 %v1418, %v1436
        %v1439 = vadd.f32 %v1419, %v1437
        %s1440 = sld [smem:[#allocation2 + $0x43]]
        %v1441 = vstv %s1440
        %v1442 = vmul.f32 %v1441, %v1432
        %v1443 = vmul.f32 %v1441, %v1433
        %v1446 = vrot.slane %v1442, 1
        %v1447 = vrot.slane %v1443, 1
        %v1450 = vadd.f32 %v1438, %v1446
        %v1451 = vadd.f32 %v1439, %v1447
        %vm1452 = vmand %vm1290, %vm978
        %vm1453 = vmand %vm1291, %vm979
        %1454 = vrot.lane.b32.xlu0 %v748, 14
        %v1455 = vpop.permute.xlu0 %1454
        %1457 = vrot.lane.b32.xlu0 %v747, 14
        %v1458 = vpop.permute.xlu0 %1457
        %vm1459 = vcmask 113664
        %v1460 = vsel %vm1459, %v1458, %v1455
        %v1463 = vsel %vm1459, %v1455, %v1458
        %v1464 = vsel %vm1452, %v1463, 0.0
        %v1465 = vsel %vm1453, %v1460, 0.0
        %s1466 = sld [smem:[#allocation2 + $0x13]]
        %v1467 = vstv %s1466
        %v1468 = vmul.f32 %v1467, %v1464
        %v1469 = vmul.f32 %v1467, %v1465
        %v1470 = vadd.f32 %v1450, %v1468
        %v1471 = vadd.f32 %v1451, %v1469
        %s1472 = sld [smem:[#allocation2 + $0x44]]
        %v1473 = vstv %s1472
        %v1474 = vmul.f32 %v1473, %v1464
        %v1475 = vmul.f32 %v1473, %v1465
        %v1478 = vrot.slane %v1474, 1
        %v1479 = vrot.slane %v1475, 1
        %v1482 = vadd.f32 %v1470, %v1478
        %v1483 = vadd.f32 %v1471, %v1479
        %vm1484 = vmand %vm1290, %vm1018
        %vm1485 = vmand %vm1291, %vm1019
        %1486 = vrot.lane.b32.xlu0 %v748, 13
        %v1487 = vpop.permute.xlu0 %1486
        %1489 = vrot.lane.b32.xlu0 %v747, 13
        %v1490 = vpop.permute.xlu0 %1489
        %vm1491 = vcmask 105472
        %v1492 = vsel %vm1491, %v1490, %v1487
        %v1495 = vsel %vm1491, %v1487, %v1490
        %v1496 = vsel %vm1484, %v1495, 0.0
        %v1497 = vsel %vm1485, %v1492, 0.0
        %s1498 = sld [smem:[#allocation2 + $0x14]]
        %v1499 = vstv %s1498
        %v1500 = vmul.f32 %v1499, %v1496
        %v1501 = vmul.f32 %v1499, %v1497
        %v1502 = vadd.f32 %v1482, %v1500
        %v1503 = vadd.f32 %v1483, %v1501
        %s1504 = sld [smem:[#allocation2 + $0x45]]
        %v1505 = vstv %s1504
        %v1506 = vmul.f32 %v1505, %v1496
        %v1507 = vmul.f32 %v1505, %v1497
        %v1510 = vrot.slane %v1506, 1
        %v1511 = vrot.slane %v1507, 1
        %v1514 = vadd.f32 %v1502, %v1510
        %v1515 = vadd.f32 %v1503, %v1511
        %vm1516 = vcmp.ge.s32.totalorder %v758, 0
        %vm1517 = vcmp.ge.s32.totalorder %v759, 0
        %vm1518 = vcmp.lt.s32.totalorder %v758, 16
        %vm1519 = vcmp.lt.s32.totalorder %v759, 16
        %vm1520 = vmand %vm1516, %vm1518
        %vm1521 = vmand %vm1517, %vm1519
        %vm1522 = vmand %vm1520, %vm778
        %vm1523 = vmand %vm1521, %vm779
        %1524 = vrot.lane.b32.xlu0 %v748, 3
        %v1525 = vpop.permute.xlu0 %1524
        %1527 = vrot.lane.b32.xlu0 %v747, 3
        %v1528 = vpop.permute.xlu0 %1527
        %vm1529 = vcmask 23552
        %v1530 = vsel %vm1529, %v1528, %v1525
        %v1533 = vsel %vm1529, %v1525, %v1528
        %v1534 = vsel %vm1522, %v1533, 0.0
        %v1535 = vsel %vm1523, %v1530, 0.0
        %s1536 = sld [smem:[#allocation2 + $0x15]]
        %v1537 = vstv %s1536
        %v1538 = vmul.f32 %v1537, %v1534
        %v1539 = vmul.f32 %v1537, %v1535
        %v1540 = vadd.f32 %v1514, %v1538
        %v1541 = vadd.f32 %v1515, %v1539
        %s1542 = sld [smem:[#allocation2 + $0x46]]
        %v1543 = vstv %s1542
        %v1544 = vmul.f32 %v1543, %v1534
        %v1545 = vmul.f32 %v1543, %v1535
        %v1548 = vrot.slane %v1544, 1
        %v1549 = vrot.slane %v1545, 1
        %v1552 = vadd.f32 %v1540, %v1548
        %v1553 = vadd.f32 %v1541, %v1549
        %vm1554 = vmand %vm1520, %vm820
        %vm1555 = vmand %vm1521, %vm821
        %1556 = vrot.lane.b32.xlu0 %v748, 2
        %v1557 = vpop.permute.xlu0 %1556
        %1559 = vrot.lane.b32.xlu0 %v747, 2
        %v1560 = vpop.permute.xlu0 %1559
        %vm1561 = vcmask 15360
        %v1562 = vsel %vm1561, %v1560, %v1557
        %v1565 = vsel %vm1561, %v1557, %v1560
        %v1566 = vsel %vm1554, %v1565, 0.0
        %v1567 = vsel %vm1555, %v1562, 0.0
        %s1568 = sld [smem:[#allocation2 + $0x16]]
        %v1569 = vstv %s1568
        %v1570 = vmul.f32 %v1569, %v1566
        %v1571 = vmul.f32 %v1569, %v1567
        %v1572 = vadd.f32 %v1552, %v1570
        %v1573 = vadd.f32 %v1553, %v1571
        %s1574 = sld [smem:[#allocation2 + $0x47]]
        %v1575 = vstv %s1574
        %v1576 = vmul.f32 %v1575, %v1566
        %v1577 = vmul.f32 %v1575, %v1567
        %v1580 = vrot.slane %v1576, 1
        %v1581 = vrot.slane %v1577, 1
        %v1584 = vadd.f32 %v1572, %v1580
        %v1585 = vadd.f32 %v1573, %v1581
        %vm1586 = vmand %vm1520, %vm860
        %vm1587 = vmand %vm1521, %vm861
        %1588 = vrot.lane.b32.xlu0 %v748, 1
        %v1589 = vpop.permute.xlu0 %1588
        %1591 = vrot.lane.b32.xlu0 %v747, 1
        %v1592 = vpop.permute.xlu0 %1591
        %vm1593 = vcmask 7168
        %v1594 = vsel %vm1593, %v1592, %v1589
        %v1597 = vsel %vm1593, %v1589, %v1592
        %v1598 = vsel %vm1586, %v1597, 0.0
        %v1599 = vsel %vm1587, %v1594, 0.0
        %s1600 = sld [smem:[#allocation2 + $0x17]]
        %v1601 = vstv %s1600
        %v1602 = vmul.f32 %v1601, %v1598
        %v1603 = vmul.f32 %v1601, %v1599
        %v1604 = vadd.f32 %v1584, %v1602
        %v1605 = vadd.f32 %v1585, %v1603
        %s1606 = sld [smem:[#allocation2 + $0x48]]
        %v1607 = vstv %s1606
        %v1608 = vmul.f32 %v1607, %v1598
        %v1609 = vmul.f32 %v1607, %v1599
        %v1612 = vrot.slane %v1608, 1
        %v1613 = vrot.slane %v1609, 1
        %v1616 = vadd.f32 %v1604, %v1612
        %v1617 = vadd.f32 %v1605, %v1613
        %vm1618 = vmand %vm1520, %vm898
        %vm1619 = vmand %vm1521, %vm899
        %v1620 = vsel %vm1618, %v747, 0.0
        %v1621 = vsel %vm1619, %v748, 0.0
        %s1622 = sld [smem:[#allocation2 + $0x18]]
        %v1623 = vstv %s1622
        %v1624 = vmul.f32 %v1623, %v1620
        %v1625 = vmul.f32 %v1623, %v1621
        %v1626 = vadd.f32 %v1616, %v1624
        %v1627 = vadd.f32 %v1617, %v1625
        %s1628 = sld [smem:[#allocation2 + $0x49]]
        %v1629 = vstv %s1628
        %v1630 = vmul.f32 %v1629, %v1620
        %v1631 = vmul.f32 %v1629, %v1621
        %v1634 = vrot.slane %v1630, 1
        %v1635 = vrot.slane %v1631, 1
        %v1638 = vadd.f32 %v1626, %v1634
        %v1639 = vadd.f32 %v1627, %v1635
        %vm1640 = vmand %vm1520, %vm938
        %vm1641 = vmand %vm1521, %vm939
        %1642 = vrot.lane.b32.xlu0 %v747, 127
        %v1643 = vpop.permute.xlu0 %1642
        %1644 = vrot.lane.b32.xlu0 %v748, 127
        %v1645 = vpop.permute.xlu0 %1644
        %vm1646 = vcmask 1039360
        %v1647 = vsel %vm1646, %v1643, %v1645
        %v1651 = vsel %vm1646, %v1645, %v1643
        %v1652 = vsel %vm1640, %v1647, 0.0
        %v1653 = vsel %vm1641, %v1651, 0.0
        %s1654 = sld [smem:[#allocation2 + $0x19]]
        %v1655 = vstv %s1654
        %v1656 = vmul.f32 %v1655, %v1652
        %v1657 = vmul.f32 %v1655, %v1653
        %v1658 = vadd.f32 %v1638, %v1656
        %v1659 = vadd.f32 %v1639, %v1657
        %s1660 = sld [smem:[#allocation2 + $0x4a]]
        %v1661 = vstv %s1660
        %v1662 = vmul.f32 %v1661, %v1652
        %v1663 = vmul.f32 %v1661, %v1653
        %v1666 = vrot.slane %v1662, 1
        %v1667 = vrot.slane %v1663, 1
        %v1670 = vadd.f32 %v1658, %v1666
        %v1671 = vadd.f32 %v1659, %v1667
        %vm1672 = vmand %vm1520, %vm978
        %vm1673 = vmand %vm1521, %vm979
        %1674 = vrot.lane.b32.xlu0 %v747, 126
        %v1675 = vpop.permute.xlu0 %1674
        %1676 = vrot.lane.b32.xlu0 %v748, 126
        %v1677 = vpop.permute.xlu0 %1676
        %vm1678 = vcmask 1031168
        %v1679 = vsel %vm1678, %v1675, %v1677
        %v1683 = vsel %vm1678, %v1677, %v1675
        %v1684 = vsel %vm1672, %v1679, 0.0
        %v1685 = vsel %vm1673, %v1683, 0.0
        %s1686 = sld [smem:[#allocation2 + $0x1a]]
        %v1687 = vstv %s1686
        %v1688 = vmul.f32 %v1687, %v1684
        %v1689 = vmul.f32 %v1687, %v1685
        %v1690 = vadd.f32 %v1670, %v1688
        %v1691 = vadd.f32 %v1671, %v1689
        %s1692 = sld [smem:[#allocation2 + $0x4b]]
        %v1693 = vstv %s1692
        %v1694 = vmul.f32 %v1693, %v1684
        %v1695 = vmul.f32 %v1693, %v1685
        %v1698 = vrot.slane %v1694, 1
        %v1699 = vrot.slane %v1695, 1
        %v1702 = vadd.f32 %v1690, %v1698
        %v1703 = vadd.f32 %v1691, %v1699
        %vm1704 = vmand %vm1520, %vm1018
        %vm1705 = vmand %vm1521, %vm1019
        %1706 = vrot.lane.b32.xlu0 %v747, 125
        %v1707 = vpop.permute.xlu0 %1706
        %1708 = vrot.lane.b32.xlu0 %v748, 125
        %v1709 = vpop.permute.xlu0 %1708
        %vm1710 = vcmask 1022976
        %v1711 = vsel %vm1710, %v1707, %v1709
        %v1715 = vsel %vm1710, %v1709, %v1707
        %v1716 = vsel %vm1704, %v1711, 0.0
        %v1717 = vsel %vm1705, %v1715, 0.0
        %s1718 = sld [smem:[#allocation2 + $0x1b]]
        %v1719 = vstv %s1718
        %v1720 = vmul.f32 %v1719, %v1716
        %v1721 = vmul.f32 %v1719, %v1717
        %v1722 = vadd.f32 %v1702, %v1720
        %v1723 = vadd.f32 %v1703, %v1721
        %s1724 = sld [smem:[#allocation2 + $0x4c]]
        %v1725 = vstv %s1724
        %v1726 = vmul.f32 %v1725, %v1716
        %v1727 = vmul.f32 %v1725, %v1717
        %v1730 = vrot.slane %v1726, 1
        %v1731 = vrot.slane %v1727, 1
        %v1734 = vadd.f32 %v1722, %v1730
        %v1735 = vadd.f32 %v1723, %v1731
        %v1736 = vadd.s32 %v758, 1
        %v1737 = vadd.s32 %v759, 1
        %vm1738 = vcmp.ge.s32.totalorder %v1736, 0
        %vm1739 = vcmp.ge.s32.totalorder %v1737, 0
        %vm1740 = vcmp.lt.s32.totalorder %v1736, 16
        %vm1741 = vcmp.lt.s32.totalorder %v1737, 16
        %vm1742 = vmand %vm1738, %vm1740
        %vm1743 = vmand %vm1739, %vm1741
        %vm1744 = vmand %vm1742, %vm778
        %vm1745 = vmand %vm1743, %vm779
        %1746 = vrot.lane.b32.xlu0 %v747, 115
        %v1747 = vpop.permute.xlu0 %1746
        %1748 = vrot.lane.b32.xlu0 %v748, 115
        %v1749 = vpop.permute.xlu0 %1748
        %vm1750 = vcmask 941056
        %v1751 = vsel %vm1750, %v1747, %v1749
        %v1755 = vsel %vm1750, %v1749, %v1747
        %v1756 = vsel %vm1744, %v1751, 0.0
        %v1757 = vsel %vm1745, %v1755, 0.0
        %s1758 = sld [smem:[#allocation2 + $0x1c]]
        %v1759 = vstv %s1758
        %v1760 = vmul.f32 %v1759, %v1756
        %v1761 = vmul.f32 %v1759, %v1757
        %v1762 = vadd.f32 %v1734, %v1760
        %v1763 = vadd.f32 %v1735, %v1761
        %s1764 = sld [smem:[#allocation2 + $0x4d]]
        %v1765 = vstv %s1764
        %v1766 = vmul.f32 %v1765, %v1756
        %v1767 = vmul.f32 %v1765, %v1757
        %v1770 = vrot.slane %v1766, 1
        %v1771 = vrot.slane %v1767, 1
        %v1774 = vadd.f32 %v1762, %v1770
        %v1775 = vadd.f32 %v1763, %v1771
        %vm1776 = vmand %vm1742, %vm820
        %vm1777 = vmand %vm1743, %vm821
        %1778 = vrot.lane.b32.xlu0 %v747, 114
        %v1779 = vpop.permute.xlu0 %1778
        %1780 = vrot.lane.b32.xlu0 %v748, 114
        %v1781 = vpop.permute.xlu0 %1780
        %vm1782 = vcmask 932864
        %v1783 = vsel %vm1782, %v1779, %v1781
        %v1787 = vsel %vm1782, %v1781, %v1779
        %v1788 = vsel %vm1776, %v1783, 0.0
        %v1789 = vsel %vm1777, %v1787, 0.0
        %s1790 = sld [smem:[#allocation2 + $0x1d]]
        %v1791 = vstv %s1790
        %v1792 = vmul.f32 %v1791, %v1788
        %v1793 = vmul.f32 %v1791, %v1789
        %v1794 = vadd.f32 %v1774, %v1792
        %v1795 = vadd.f32 %v1775, %v1793
        %s1796 = sld [smem:[#allocation2 + $0x4e]]
        %v1797 = vstv %s1796
        %v1798 = vmul.f32 %v1797, %v1788
        %v1799 = vmul.f32 %v1797, %v1789
        %v1802 = vrot.slane %v1798, 1
        %v1803 = vrot.slane %v1799, 1
        %v1806 = vadd.f32 %v1794, %v1802
        %v1807 = vadd.f32 %v1795, %v1803
        %vm1808 = vmand %vm1742, %vm860
        %vm1809 = vmand %vm1743, %vm861
        %1810 = vrot.lane.b32.xlu0 %v747, 113
        %v1811 = vpop.permute.xlu0 %1810
        %1812 = vrot.lane.b32.xlu0 %v748, 113
        %v1813 = vpop.permute.xlu0 %1812
        %vm1814 = vcmask 924672
        %v1815 = vsel %vm1814, %v1811, %v1813
        %v1819 = vsel %vm1814, %v1813, %v1811
        %v1820 = vsel %vm1808, %v1815, 0.0
        %v1821 = vsel %vm1809, %v1819, 0.0
        %s1822 = sld [smem:[#allocation2 + $0x1e]]
        %v1823 = vstv %s1822
        %v1824 = vmul.f32 %v1823, %v1820
        %v1825 = vmul.f32 %v1823, %v1821
        %v1826 = vadd.f32 %v1806, %v1824
        %v1827 = vadd.f32 %v1807, %v1825
        %s1828 = sld [smem:[#allocation2 + $0x4f]]
        %v1829 = vstv %s1828
        %v1830 = vmul.f32 %v1829, %v1820
        %v1831 = vmul.f32 %v1829, %v1821
        %v1834 = vrot.slane %v1830, 1
        %v1835 = vrot.slane %v1831, 1
        %v1838 = vadd.f32 %v1826, %v1834
        %v1839 = vadd.f32 %v1827, %v1835
        %vm1840 = vmand %vm1742, %vm898
        %vm1841 = vmand %vm1743, %vm899
        %1842 = vrot.lane.b32.xlu0 %v747, 112
        %v1843 = vpop.permute.xlu0 %1842
        %1844 = vrot.lane.b32.xlu0 %v748, 112
        %v1845 = vpop.permute.xlu0 %1844
        %vm1846 = vcmask 916480
        %v1847 = vsel %vm1846, %v1843, %v1845
        %v1851 = vsel %vm1846, %v1845, %v1843
        %v1852 = vsel %vm1840, %v1847, 0.0
        %v1853 = vsel %vm1841, %v1851, 0.0
        %s1854 = sld [smem:[#allocation2 + $0x1f]]
        %v1855 = vstv %s1854
        %v1856 = vmul.f32 %v1855, %v1852
        %v1857 = vmul.f32 %v1855, %v1853
        %v1858 = vadd.f32 %v1838, %v1856
        %v1859 = vadd.f32 %v1839, %v1857
        %s1860 = sld [smem:[#allocation2 + $0x50]]
        %v1861 = vstv %s1860
        %v1862 = vmul.f32 %v1861, %v1852
        %v1863 = vmul.f32 %v1861, %v1853
        %v1866 = vrot.slane %v1862, 1
        %v1867 = vrot.slane %v1863, 1
        %v1870 = vadd.f32 %v1858, %v1866
        %v1871 = vadd.f32 %v1859, %v1867
        %vm1872 = vmand %vm1742, %vm938
        %vm1873 = vmand %vm1743, %vm939
        %1874 = vrot.lane.b32.xlu0 %v747, 111
        %v1875 = vpop.permute.xlu0 %1874
        %1876 = vrot.lane.b32.xlu0 %v748, 111
        %v1877 = vpop.permute.xlu0 %1876
        %vm1878 = vcmask 908288
        %v1879 = vsel %vm1878, %v1875, %v1877
        %v1883 = vsel %vm1878, %v1877, %v1875
        %v1884 = vsel %vm1872, %v1879, 0.0
        %v1885 = vsel %vm1873, %v1883, 0.0
        %s1886 = sld [smem:[#allocation2 + $0x20]]
        %v1887 = vstv %s1886
        %v1888 = vmul.f32 %v1887, %v1884
        %v1889 = vmul.f32 %v1887, %v1885
        %v1890 = vadd.f32 %v1870, %v1888
        %v1891 = vadd.f32 %v1871, %v1889
        %s1892 = sld [smem:[#allocation2 + $0x51]]
        %v1893 = vstv %s1892
        %v1894 = vmul.f32 %v1893, %v1884
        %v1895 = vmul.f32 %v1893, %v1885
        %v1898 = vrot.slane %v1894, 1
        %v1899 = vrot.slane %v1895, 1
        %v1902 = vadd.f32 %v1890, %v1898
        %v1903 = vadd.f32 %v1891, %v1899
        %vm1904 = vmand %vm1742, %vm978
        %vm1905 = vmand %vm1743, %vm979
        %1906 = vrot.lane.b32.xlu0 %v747, 110
        %v1907 = vpop.permute.xlu0 %1906
        %1908 = vrot.lane.b32.xlu0 %v748, 110
        %v1909 = vpop.permute.xlu0 %1908
        %vm1910 = vcmask 900096
        %v1911 = vsel %vm1910, %v1907, %v1909
        %v1915 = vsel %vm1910, %v1909, %v1907
        %v1916 = vsel %vm1904, %v1911, 0.0
        %v1917 = vsel %vm1905, %v1915, 0.0
        %s1918 = sld [smem:[#allocation2 + $0x21]]
        %v1919 = vstv %s1918
        %v1920 = vmul.f32 %v1919, %v1916
        %v1921 = vmul.f32 %v1919, %v1917
        %v1922 = vadd.f32 %v1902, %v1920
        %v1923 = vadd.f32 %v1903, %v1921
        %s1924 = sld [smem:[#allocation2 + $0x52]]
        %v1925 = vstv %s1924
        %v1926 = vmul.f32 %v1925, %v1916
        %v1927 = vmul.f32 %v1925, %v1917
        %v1930 = vrot.slane %v1926, 1
        %v1931 = vrot.slane %v1927, 1
        %v1934 = vadd.f32 %v1922, %v1930
        %v1935 = vadd.f32 %v1923, %v1931
        %vm1936 = vmand %vm1742, %vm1018
        %vm1937 = vmand %vm1743, %vm1019
        %1938 = vrot.lane.b32.xlu0 %v747, 109
        %v1939 = vpop.permute.xlu0 %1938
        %1940 = vrot.lane.b32.xlu0 %v748, 109
        %v1941 = vpop.permute.xlu0 %1940
        %vm1942 = vcmask 891904
        %v1943 = vsel %vm1942, %v1939, %v1941
        %v1947 = vsel %vm1942, %v1941, %v1939
        %v1948 = vsel %vm1936, %v1943, 0.0
        %v1949 = vsel %vm1937, %v1947, 0.0
        %s1950 = sld [smem:[#allocation2 + $0x22]]
        %v1951 = vstv %s1950
        %v1952 = vmul.f32 %v1951, %v1948
        %v1953 = vmul.f32 %v1951, %v1949
        %v1954 = vadd.f32 %v1934, %v1952
        %v1955 = vadd.f32 %v1935, %v1953
        %s1956 = sld [smem:[#allocation2 + $0x53]]
        %v1957 = vstv %s1956
        %v1958 = vmul.f32 %v1957, %v1948
        %v1959 = vmul.f32 %v1957, %v1949
        %v1962 = vrot.slane %v1958, 1
        %v1963 = vrot.slane %v1959, 1
        %v1966 = vadd.f32 %v1954, %v1962
        %v1967 = vadd.f32 %v1955, %v1963
        %v1968 = vadd.s32 %v758, 2
        %v1969 = vadd.s32 %v759, 2
        %vm1970 = vcmp.ge.s32.totalorder %v1968, 0
        %vm1971 = vcmp.ge.s32.totalorder %v1969, 0
        %vm1972 = vcmp.lt.s32.totalorder %v1968, 16
        %vm1973 = vcmp.lt.s32.totalorder %v1969, 16
        %vm1974 = vmand %vm1970, %vm1972
        %vm1975 = vmand %vm1971, %vm1973
        %vm1976 = vmand %vm1974, %vm778
        %vm1977 = vmand %vm1975, %vm779
        %1978 = vrot.lane.b32.xlu0 %v747, 99
        %v1979 = vpop.permute.xlu0 %1978
        %1980 = vrot.lane.b32.xlu0 %v748, 99
        %v1981 = vpop.permute.xlu0 %1980
        %vm1982 = vcmask 809984
        %v1983 = vsel %vm1982, %v1979, %v1981
        %v1987 = vsel %vm1982, %v1981, %v1979
        %v1988 = vsel %vm1976, %v1983, 0.0
        %v1989 = vsel %vm1977, %v1987, 0.0
        %s1990 = sld [smem:[#allocation2 + $0x23]]
        %v1991 = vstv %s1990
        %v1992 = vmul.f32 %v1991, %v1988
        %v1993 = vmul.f32 %v1991, %v1989
        %v1994 = vadd.f32 %v1966, %v1992
        %v1995 = vadd.f32 %v1967, %v1993
        %s1996 = sld [smem:[#allocation2 + $0x54]]
        %v1997 = vstv %s1996
        %v1998 = vmul.f32 %v1997, %v1988
        %v1999 = vmul.f32 %v1997, %v1989
        %v2002 = vrot.slane %v1998, 1
        %v2003 = vrot.slane %v1999, 1
        %v2006 = vadd.f32 %v1994, %v2002
        %v2007 = vadd.f32 %v1995, %v2003
        %vm2008 = vmand %vm1974, %vm820
        %vm2009 = vmand %vm1975, %vm821
        %2010 = vrot.lane.b32.xlu0 %v747, 98
        %v2011 = vpop.permute.xlu0 %2010
        %2012 = vrot.lane.b32.xlu0 %v748, 98
        %v2013 = vpop.permute.xlu0 %2012
        %vm2014 = vcmask 801792
        %v2015 = vsel %vm2014, %v2011, %v2013
        %v2019 = vsel %vm2014, %v2013, %v2011
        %v2020 = vsel %vm2008, %v2015, 0.0
        %v2021 = vsel %vm2009, %v2019, 0.0
        %s2022 = sld [smem:[#allocation2 + $0x24]]
        %v2023 = vstv %s2022
        %v2024 = vmul.f32 %v2023, %v2020
        %v2025 = vmul.f32 %v2023, %v2021
        %v2026 = vadd.f32 %v2006, %v2024
        %v2027 = vadd.f32 %v2007, %v2025
        %s2028 = sld [smem:[#allocation2 + $0x55]]
        %v2029 = vstv %s2028
        %v2030 = vmul.f32 %v2029, %v2020
        %v2031 = vmul.f32 %v2029, %v2021
        %v2034 = vrot.slane %v2030, 1
        %v2035 = vrot.slane %v2031, 1
        %v2038 = vadd.f32 %v2026, %v2034
        %v2039 = vadd.f32 %v2027, %v2035
        %vm2040 = vmand %vm1974, %vm860
        %vm2041 = vmand %vm1975, %vm861
        %2042 = vrot.lane.b32.xlu0 %v747, 97
        %v2043 = vpop.permute.xlu0 %2042
        %2044 = vrot.lane.b32.xlu0 %v748, 97
        %v2045 = vpop.permute.xlu0 %2044
        %vm2046 = vcmask 793600
        %v2047 = vsel %vm2046, %v2043, %v2045
        %v2051 = vsel %vm2046, %v2045, %v2043
        %v2052 = vsel %vm2040, %v2047, 0.0
        %v2053 = vsel %vm2041, %v2051, 0.0
        %s2054 = sld [smem:[#allocation2 + $0x25]]
        %v2055 = vstv %s2054
        %v2056 = vmul.f32 %v2055, %v2052
        %v2057 = vmul.f32 %v2055, %v2053
        %v2058 = vadd.f32 %v2038, %v2056
        %v2059 = vadd.f32 %v2039, %v2057
        %s2060 = sld [smem:[#allocation2 + $0x56]]
        %v2061 = vstv %s2060
        %v2062 = vmul.f32 %v2061, %v2052
        %v2063 = vmul.f32 %v2061, %v2053
        %v2066 = vrot.slane %v2062, 1
        %v2067 = vrot.slane %v2063, 1
        %v2070 = vadd.f32 %v2058, %v2066
        %v2071 = vadd.f32 %v2059, %v2067
        %vm2072 = vmand %vm1974, %vm898
        %vm2073 = vmand %vm1975, %vm899
        %2074 = vrot.lane.b32.xlu0 %v747, 96
        %v2075 = vpop.permute.xlu0 %2074
        %2076 = vrot.lane.b32.xlu0 %v748, 96
        %v2077 = vpop.permute.xlu0 %2076
        %vm2078 = vcmask 785408
        %v2079 = vsel %vm2078, %v2075, %v2077
        %v2083 = vsel %vm2078, %v2077, %v2075
        %v2084 = vsel %vm2072, %v2079, 0.0
        %v2085 = vsel %vm2073, %v2083, 0.0
        %s2086 = sld [smem:[#allocation2 + $0x26]]
        %v2087 = vstv %s2086
        %v2088 = vmul.f32 %v2087, %v2084
        %v2089 = vmul.f32 %v2087, %v2085
        %v2090 = vadd.f32 %v2070, %v2088
        %v2091 = vadd.f32 %v2071, %v2089
        %s2092 = sld [smem:[#allocation2 + $0x57]]
        %v2093 = vstv %s2092
        %v2094 = vmul.f32 %v2093, %v2084
        %v2095 = vmul.f32 %v2093, %v2085
        %v2098 = vrot.slane %v2094, 1
        %v2099 = vrot.slane %v2095, 1
        %v2102 = vadd.f32 %v2090, %v2098
        %v2103 = vadd.f32 %v2091, %v2099
        %vm2104 = vmand %vm1974, %vm938
        %vm2105 = vmand %vm1975, %vm939
        %2106 = vrot.lane.b32.xlu0 %v747, 95
        %v2107 = vpop.permute.xlu0 %2106
        %2108 = vrot.lane.b32.xlu0 %v748, 95
        %v2109 = vpop.permute.xlu0 %2108
        %vm2110 = vcmask 777216
        %v2111 = vsel %vm2110, %v2107, %v2109
        %v2115 = vsel %vm2110, %v2109, %v2107
        %v2116 = vsel %vm2104, %v2111, 0.0
        %v2117 = vsel %vm2105, %v2115, 0.0
        %s2118 = sld [smem:[#allocation2 + $0x27]]
        %v2119 = vstv %s2118
        %v2120 = vmul.f32 %v2119, %v2116
        %v2121 = vmul.f32 %v2119, %v2117
        %v2122 = vadd.f32 %v2102, %v2120
        %v2123 = vadd.f32 %v2103, %v2121
        %s2124 = sld [smem:[#allocation2 + $0x58]]
        %v2125 = vstv %s2124
        %v2126 = vmul.f32 %v2125, %v2116
        %v2127 = vmul.f32 %v2125, %v2117
        %v2130 = vrot.slane %v2126, 1
        %v2131 = vrot.slane %v2127, 1
        %v2134 = vadd.f32 %v2122, %v2130
        %v2135 = vadd.f32 %v2123, %v2131
        %vm2136 = vmand %vm1974, %vm978
        %vm2137 = vmand %vm1975, %vm979
        %2138 = vrot.lane.b32.xlu0 %v747, 94
        %v2139 = vpop.permute.xlu0 %2138
        %2140 = vrot.lane.b32.xlu0 %v748, 94
        %v2141 = vpop.permute.xlu0 %2140
        %vm2142 = vcmask 769024
        %v2143 = vsel %vm2142, %v2139, %v2141
        %v2147 = vsel %vm2142, %v2141, %v2139
        %v2148 = vsel %vm2136, %v2143, 0.0
        %v2149 = vsel %vm2137, %v2147, 0.0
        %s2150 = sld [smem:[#allocation2 + $0x28]]
        %v2151 = vstv %s2150
        %v2152 = vmul.f32 %v2151, %v2148
        %v2153 = vmul.f32 %v2151, %v2149
        %v2154 = vadd.f32 %v2134, %v2152
        %v2155 = vadd.f32 %v2135, %v2153
        %s2156 = sld [smem:[#allocation2 + $0x59]]
        %v2157 = vstv %s2156
        %v2158 = vmul.f32 %v2157, %v2148
        %v2159 = vmul.f32 %v2157, %v2149
        %v2162 = vrot.slane %v2158, 1
        %v2163 = vrot.slane %v2159, 1
        %v2166 = vadd.f32 %v2154, %v2162
        %v2167 = vadd.f32 %v2155, %v2163
        %vm2168 = vmand %vm1974, %vm1018
        %vm2169 = vmand %vm1975, %vm1019
        %2170 = vrot.lane.b32.xlu0 %v747, 93
        %v2171 = vpop.permute.xlu0 %2170
        %2172 = vrot.lane.b32.xlu0 %v748, 93
        %v2173 = vpop.permute.xlu0 %2172
        %vm2174 = vcmask 760832
        %v2175 = vsel %vm2174, %v2171, %v2173
        %v2179 = vsel %vm2174, %v2173, %v2171
        %v2180 = vsel %vm2168, %v2175, 0.0
        %v2181 = vsel %vm2169, %v2179, 0.0
        %s2182 = sld [smem:[#allocation2 + $0x29]]
        %v2183 = vstv %s2182
        %v2184 = vmul.f32 %v2183, %v2180
        %v2185 = vmul.f32 %v2183, %v2181
        %v2186 = vadd.f32 %v2166, %v2184
        %v2187 = vadd.f32 %v2167, %v2185
        %s2188 = sld [smem:[#allocation2 + $0x5a]]
        %v2189 = vstv %s2188
        %v2190 = vmul.f32 %v2189, %v2180
        %v2191 = vmul.f32 %v2189, %v2181
        %v2194 = vrot.slane %v2190, 1
        %v2195 = vrot.slane %v2191, 1
        %v2198 = vadd.f32 %v2186, %v2194
        %v2199 = vadd.f32 %v2187, %v2195
        %v2200 = vadd.s32 %v758, 3
        %v2201 = vadd.s32 %v759, 3
        %vm2202 = vcmp.ge.s32.totalorder %v2200, 0
        %vm2203 = vcmp.ge.s32.totalorder %v2201, 0
        %vm2204 = vcmp.lt.s32.totalorder %v2200, 16
        %vm2205 = vcmp.lt.s32.totalorder %v2201, 16
        %vm2206 = vmand %vm2202, %vm2204
        %vm2207 = vmand %vm2203, %vm2205
        %vm2208 = vmand %vm2206, %vm778
        %vm2209 = vmand %vm2207, %vm779
        %2210 = vrot.lane.b32.xlu0 %v747, 83
        %v2211 = vpop.permute.xlu0 %2210
        %2212 = vrot.lane.b32.xlu0 %v748, 83
        %v2213 = vpop.permute.xlu0 %2212
        %vm2214 = vcmask 678912
        %v2215 = vsel %vm2214, %v2211, %v2213
        %v2219 = vsel %vm2214, %v2213, %v2211
        %v2220 = vsel %vm2208, %v2215, 0.0
        %v2221 = vsel %vm2209, %v2219, 0.0
        %s2222 = sld [smem:[#allocation2 + $0x2a]]
        %v2223 = vstv %s2222
        %v2224 = vmul.f32 %v2223, %v2220
        %v2225 = vmul.f32 %v2223, %v2221
        %v2226 = vadd.f32 %v2198, %v2224
        %v2227 = vadd.f32 %v2199, %v2225
        %s2228 = sld [smem:[#allocation2 + $0x5b]]
        %v2229 = vstv %s2228
        %v2230 = vmul.f32 %v2229, %v2220
        %v2231 = vmul.f32 %v2229, %v2221
        %v2234 = vrot.slane %v2230, 1
        %v2235 = vrot.slane %v2231, 1
        %v2238 = vadd.f32 %v2226, %v2234
        %v2239 = vadd.f32 %v2227, %v2235
        %vm2240 = vmand %vm2206, %vm820
        %vm2241 = vmand %vm2207, %vm821
        %2242 = vrot.lane.b32.xlu0 %v747, 82
        %v2243 = vpop.permute.xlu0 %2242
        %2244 = vrot.lane.b32.xlu0 %v748, 82
        %v2245 = vpop.permute.xlu0 %2244
        %vm2246 = vcmask 670720
        %v2247 = vsel %vm2246, %v2243, %v2245
        %v2251 = vsel %vm2246, %v2245, %v2243
        %v2252 = vsel %vm2240, %v2247, 0.0
        %v2253 = vsel %vm2241, %v2251, 0.0
        %s2254 = sld [smem:[#allocation2 + $0x2b]]
        %v2255 = vstv %s2254
        %v2256 = vmul.f32 %v2255, %v2252
        %v2257 = vmul.f32 %v2255, %v2253
        %v2258 = vadd.f32 %v2238, %v2256
        %v2259 = vadd.f32 %v2239, %v2257
        %s2260 = sld [smem:[#allocation2 + $0x5c]]
        %v2261 = vstv %s2260
        %v2262 = vmul.f32 %v2261, %v2252
        %v2263 = vmul.f32 %v2261, %v2253
        %v2266 = vrot.slane %v2262, 1
        %v2267 = vrot.slane %v2263, 1
        %v2270 = vadd.f32 %v2258, %v2266
        %v2271 = vadd.f32 %v2259, %v2267
        %vm2272 = vmand %vm2206, %vm860
        %vm2273 = vmand %vm2207, %vm861
        %2274 = vrot.lane.b32.xlu0 %v747, 81
        %v2275 = vpop.permute.xlu0 %2274
        %2276 = vrot.lane.b32.xlu0 %v748, 81
        %v2277 = vpop.permute.xlu0 %2276
        %vm2278 = vcmask 662528
        %v2279 = vsel %vm2278, %v2275, %v2277
        %v2283 = vsel %vm2278, %v2277, %v2275
        %v2284 = vsel %vm2272, %v2279, 0.0
        %v2285 = vsel %vm2273, %v2283, 0.0
        %s2286 = sld [smem:[#allocation2 + $0x2c]]
        %v2287 = vstv %s2286
        %v2288 = vmul.f32 %v2287, %v2284
        %v2289 = vmul.f32 %v2287, %v2285
        %v2290 = vadd.f32 %v2270, %v2288
        %v2291 = vadd.f32 %v2271, %v2289
        %s2292 = sld [smem:[#allocation2 + $0x5d]]
        %v2293 = vstv %s2292
        %v2294 = vmul.f32 %v2293, %v2284
        %v2295 = vmul.f32 %v2293, %v2285
        %v2298 = vrot.slane %v2294, 1
        %v2299 = vrot.slane %v2295, 1
        %v2302 = vadd.f32 %v2290, %v2298
        %v2303 = vadd.f32 %v2291, %v2299
        %vm2304 = vmand %vm2206, %vm898
        %vm2305 = vmand %vm2207, %vm899
        %2306 = vrot.lane.b32.xlu0 %v747, 80
        %v2307 = vpop.permute.xlu0 %2306
        %2308 = vrot.lane.b32.xlu0 %v748, 80
        %v2309 = vpop.permute.xlu0 %2308
        %vm2310 = vcmask 654336
        %v2311 = vsel %vm2310, %v2307, %v2309
        %v2315 = vsel %vm2310, %v2309, %v2307
        %v2316 = vsel %vm2304, %v2311, 0.0
        %v2317 = vsel %vm2305, %v2315, 0.0
        %s2318 = sld [smem:[#allocation2 + $0x2d]]
        %v2319 = vstv %s2318
        %v2320 = vmul.f32 %v2319, %v2316
        %v2321 = vmul.f32 %v2319, %v2317
        %v2322 = vadd.f32 %v2302, %v2320
        %v2323 = vadd.f32 %v2303, %v2321
        %s2324 = sld [smem:[#allocation2 + $0x5e]]
        %v2325 = vstv %s2324
        %v2326 = vmul.f32 %v2325, %v2316
        %v2327 = vmul.f32 %v2325, %v2317
        %v2330 = vrot.slane %v2326, 1
        %v2331 = vrot.slane %v2327, 1
        %v2334 = vadd.f32 %v2322, %v2330
        %v2335 = vadd.f32 %v2323, %v2331
        %vm2336 = vmand %vm2206, %vm938
        %vm2337 = vmand %vm2207, %vm939
        %2338 = vrot.lane.b32.xlu0 %v747, 79
        %v2339 = vpop.permute.xlu0 %2338
        %2340 = vrot.lane.b32.xlu0 %v748, 79
        %v2341 = vpop.permute.xlu0 %2340
        %vm2342 = vcmask 646144
        %v2343 = vsel %vm2342, %v2339, %v2341
        %v2347 = vsel %vm2342, %v2341, %v2339
        %v2348 = vsel %vm2336, %v2343, 0.0
        %v2349 = vsel %vm2337, %v2347, 0.0
        %s2350 = sld [smem:[#allocation2 + $0x2e]]
        %v2351 = vstv %s2350
        %v2352 = vmul.f32 %v2351, %v2348
        %v2353 = vmul.f32 %v2351, %v2349
        %v2354 = vadd.f32 %v2334, %v2352
        %v2355 = vadd.f32 %v2335, %v2353
        %s2356 = sld [smem:[#allocation2 + $0x5f]]
        %v2357 = vstv %s2356
        %v2358 = vmul.f32 %v2357, %v2348
        %v2359 = vmul.f32 %v2357, %v2349
        %v2362 = vrot.slane %v2358, 1
        %v2363 = vrot.slane %v2359, 1
        %v2366 = vadd.f32 %v2354, %v2362
        %v2367 = vadd.f32 %v2355, %v2363
        %vm2368 = vmand %vm2206, %vm978
        %vm2369 = vmand %vm2207, %vm979
        %2370 = vrot.lane.b32.xlu0 %v747, 78
        %v2371 = vpop.permute.xlu0 %2370
        %2372 = vrot.lane.b32.xlu0 %v748, 78
        %v2373 = vpop.permute.xlu0 %2372
        %vm2374 = vcmask 637952
        %v2375 = vsel %vm2374, %v2371, %v2373
        %v2379 = vsel %vm2374, %v2373, %v2371
        %v2380 = vsel %vm2368, %v2375, 0.0
        %v2381 = vsel %vm2369, %v2379, 0.0
        %s2382 = sld [smem:[#allocation2 + $0x2f]]
        %v2383 = vstv %s2382
        %v2384 = vmul.f32 %v2383, %v2380
        %v2385 = vmul.f32 %v2383, %v2381
        %v2386 = vadd.f32 %v2366, %v2384
        %v2387 = vadd.f32 %v2367, %v2385
        %s2388 = sld [smem:[#allocation2 + $0x60]]
        %v2389 = vstv %s2388
        %v2390 = vmul.f32 %v2389, %v2380
        %v2391 = vmul.f32 %v2389, %v2381
        %v2394 = vrot.slane %v2390, 1
        %v2395 = vrot.slane %v2391, 1
        %v2398 = vadd.f32 %v2386, %v2394
        %v2399 = vadd.f32 %v2387, %v2395
        %vm2400 = vmand %vm2206, %vm1018
        %vm2401 = vmand %vm2207, %vm1019
        %2402 = vrot.lane.b32.xlu0 %v747, 77
        %v2403 = vpop.permute.xlu0 %2402
        %2404 = vrot.lane.b32.xlu0 %v748, 77
        %v2405 = vpop.permute.xlu0 %2404
        %vm2406 = vcmask 629760
        %v2407 = vsel %vm2406, %v2403, %v2405
        %v2411 = vsel %vm2406, %v2405, %v2403
        %v2412 = vsel %vm2400, %v2407, 0.0
        %v2413 = vsel %vm2401, %v2411, 0.0
        %s2414 = sld [smem:[#allocation2 + $0x30]]
        %v2415 = vstv %s2414
        %v2416 = vmul.f32 %v2415, %v2412
        %v2417 = vmul.f32 %v2415, %v2413
        %v2418 = vadd.f32 %v2398, %v2416
        %v2419 = vadd.f32 %v2399, %v2417
        %s2420 = sld [smem:[#allocation2 + $0x61]]
        %v2421 = vstv %s2420
        %v2422 = vmul.f32 %v2421, %v2412
        %v2423 = vmul.f32 %v2421, %v2413
        %v2426 = vrot.slane %v2422, 1
        %v2427 = vrot.slane %v2423, 1
        %v2430 = vadd.f32 %v2418, %v2426
        %v2431 = vadd.f32 %v2419, %v2427
        %v2432 = vsub.f32 0.0, %v2430
        %v2433 = vsub.f32 0.0, %v2431
        %v2434 = vmul.f32 %v2432, 1.442695
        %v2435 = vpow.pop %v2434
        %v2436 = vmul.f32 %v2433, 1.442695
        %v2437 = vpow.pop %v2436
        %v2438 = vadd.f32 %v2435, 1.0
        %v2439 = vadd.f32 %v2437, 1.0
        %v2440 = vrcp.pop %v2438
        %v2441 = vmul.f32 1.0, %v2440
        %v2442 = vrcp.pop %v2439
        %v2443 = vmul.f32 1.0, %v2442
        %v2444 = vlaneseq
        %v2445 = vshrl.u32 %v2444, 7
        %v2446 = vsub.s32 0, %v2445
        %v2447 = vrot.slane %v2441, %v2446
        %v2448 = vlaneseq
        %v2449 = vshrl.u32 %v2448, 7
        %v2450 = vsub.s32 0, %v2449
        %v2451 = vrot.slane %v2443, %v2450
        %v2452 = vmul.f32 %v718, %v2447
        %v2453 = vmul.f32 %v719, %v2451
        %2454 = vst [vmem:[%s227] sm:$0xff] %v2452
        %2455 = vst [vmem:[%s227 + $0x8] sm:$0xff] %v2453
        %s2456 = sand.u32 %s119, 1
        %s2457 = scalar_lea.sflag [#allocation4], %s2456
        %s2458 = sand.u32 %s119, 1
        %s2459 = smul.addr %s2458, 16
        %s2460 = scalar_lea.vmem [#allocation7], %s2459
        // Predicated region
        $region45: #{tpu_custom_call.1} parent=35 // pred_check
          %p2461 = pneg %p129
        $region46: #{tpu_custom_call.1} parent=35 // pred_check_branch
          %2463 = sbr.rel (%p2461) target = $region48
        $region47: #{tpu_custom_call.1} parent=35 // pred_region
          %s2465 = ssub.s32 256, 256
          %2466 = vsyncadd %s2457, %s2465
          %s2467 = smul.addr %s22, 2
          %s2468 = smul.addr %s2467, 128
          %s2469 = scalar_lea.hbm %s4, %s2468
          %s2471 = sshll.u32 %s2460, 4
          %s2472 = int_to_ptr.vmem [resolvable:$true] %s2471
          %2474 = dma.vmem_to_hbm [thread:$0]  %s2472, 256, %s2469, %s2457
        $region48: #{tpu_custom_call.1} parent=35 // pred_fallthru
          _
      $region36: #{tpu_custom_call.1} parent=5 // pred_fallthru
        _
      %p2475 = scmp.le.s32.totalorder 2, %s17
      // Predicated region
      $region49: #{tpu_custom_call.1} parent=5 // pred_check
        %p2476 = pneg %p2475
      $region50: #{tpu_custom_call.1} parent=5 // pred_check_branch
        %2478 = sbr.rel (%p2476) target = $region52
      $region51: #{tpu_custom_call.1} parent=5 // pred_region
        %s2479 = ssub.s32 %s17, 2
        // Predicated region
        $region53: #{tpu_custom_call.1} parent=51 // pred_check
          %p2480 = pneg %p135
        $region54: #{tpu_custom_call.1} parent=51 // pred_check_branch
          %2482 = sbr.rel (%p2480) target = $region56
        $region55: #{tpu_custom_call.1} parent=51 // pred_region
          %s2483 = sand.u32 %s120, 1
          %s2484 = scalar_lea.sflag [#allocation4], %s2483
          %s2485 = sand.u32 %s120, 1
          %s2486 = smul.addr %s2485, 16
          %s2487 = scalar_lea.vmem [#allocation7], %s2486
          %2488 = dma.done %s2484, 256
        $region56: #{tpu_custom_call.1} parent=51 // pred_fallthru
          _
      $region52: #{tpu_custom_call.1} parent=5 // pred_fallthru
        _
    $region6: #{tpu_custom_call.1} parent=1 // loop_footer
      %s21 = sadd.s32 1, %s17
    $region7: #{tpu_custom_call.1} parent=1 // loop_footer_branch
      %16 = sbr.rel target = $region3
    $region8: #{tpu_custom_call.1} parent=1 // loop_exit
      _
    %2489 = vsyncpa [#allocation3], 1
    %s2490 = scalar_lea.sflag [#allocation3], 1
    %2491 = vsyncpa %s2490, 1
    %2492 = vsyncpa [#allocation4], 1
    %s2493 = scalar_lea.sflag [#allocation4], 1
    %2494 = vsyncpa %s2493, 1
    %2495 = vsyncpa [#allocation5], 1
    %s2496 = scalar_lea.sflag [#allocation5], 1
    %2497 = vsyncpa %s2496, 1

</llo_original>
